<compile_context>
chip_gen: v5e
topology: v5e:2x2
jax: 0.10.0
libtpu: 0.0.40
codegen_flags: <defaults>
</compile_context>

<pallas_src>
import jax
import jax.numpy as jnp
from jax import lax
from jax.experimental import pallas as pl
from jax.experimental.pallas import tpu as pltpu

HIDDEN = 64
KSIZE = 3
DILATIONS = (1, 2, 4)
BN_EPS = 1e-5


def _next_pow2(n: int) -> int:
    return 1 << (max(int(n), 1) - 1).bit_length()


# --------------------------- fused TCN + GRU + FC kernel --------------------
def fused_tcn_gru_kernel(x_ref, w0_ref, w1_ref, w2_ref, bns_ref, bnt_ref,
                         wi_ref, wh_ref, bi_ref, bh_ref, wfc_ref, bfc_ref,
                         out_ref, proj_ref):
    T, Bblk, cin = x_ref.shape     # time-major block: rows are r = t*Bblk + b
    N = T * Bblk
    H = HIDDEN

    # Time index per row, via iota + shift (Bblk is a power of two -> no divide).
    bshift = int(Bblk).bit_length() - 1
    t_idx = lax.broadcasted_iota(jnp.int32, (N, 1), 0) >> bshift

    def tap(h, off):
        # y[t*Bblk+b] = h[(t+off)*Bblk+b] if 0 <= t+off < T else 0   (off static)
        if off == 0:
            return h
        s = (-off * Bblk) % N                      # static whole-sublane-tile shift
        rolled = pltpu.roll(h, shift=s, axis=0) if s else h
        if off > 0:
            valid = t_idx < (T - off)
        else:
            valid = t_idx >= (-off)
        return jnp.where(valid, rolled, 0.0)

    def conv_bn_relu(h, w_ref, scale, shift, d):
        # Fuse the 3 dilated taps into one matmul: (N, 3*Cin) @ (3*Cin, 64).
        # TODO(synk): on v5e (128-deep MXU, single vst slot) benchmark 3
        # accumulating K=Cin dots instead of this lane-concat form.
        stacked = jnp.concatenate([tap(h, -d), h, tap(h, d)], axis=1)
        y = jnp.dot(stacked.astype(jnp.bfloat16), w_ref[...],
                    preferred_element_type=jnp.float32)
        return jnp.maximum(y * scale + shift, 0.0)   # folded BN(eval)+bias, ReLU

    bns = bns_ref[...]             # (3, 64) per-layer folded BN scale  (f32)
    bnt = bnt_ref[...]             # (3, 64) per-layer folded BN shift  (f32)

    h = x_ref[...].reshape(N, cin)                                   # (N, Cin) f32
    h = conv_bn_relu(h, w0_ref, bns[0:1], bnt[0:1], DILATIONS[0])
    # nn.Dropout(0.2): identity in eval/inference mode.
    h = conv_bn_relu(h, w1_ref, bns[1:2], bnt[1:2], DILATIONS[1])
    h = conv_bn_relu(h, w2_ref, bns[2:3], bnt[2:3], DILATIONS[2])

    # GRU input projections for all timesteps at once (gate-concatenated r|z|n),
    # stored time-major so each recurrence step is one aligned leading-axis load.
    proj = jnp.dot(h.astype(jnp.bfloat16), wi_ref[...],
                   preferred_element_type=jnp.float32) + bi_ref[...]  # (N, 192)
    proj_ref[...] = proj.reshape(T, Bblk, 3 * H)

    wh = wh_ref[...]               # (64, 192) bf16 gate-concatenated recurrent W
    bh = bh_ref[...]               # (1, 192)  f32

    def step(t, hprev):
        p = proj_ref[t]                                       # (Bblk, 192) aligned
        g = jnp.dot(hprev.astype(jnp.bfloat16), wh,
                    preferred_element_type=jnp.float32) + bh
        # Fused r|z sigmoid: one EUP pass over the contiguous first 128 lanes.
        rz = jax.nn.sigmoid(p[:, 0:2 * H] + g[:, 0:2 * H])
        r = rz[:, 0:H]
        z = rz[:, H:2 * H]
        n = jnp.tanh(p[:, 2 * H:3 * H] + r * g[:, 2 * H:3 * H])
        return (1.0 - z) * n + z * hprev

    # Short, fixed trip-count recurrence: fully unroll for LLO visibility.
    h_final = lax.fori_loop(0, T, step, jnp.zeros((Bblk, H), jnp.float32),
                            unroll=True)

    out_ref[...] = (jnp.dot(h_final.astype(jnp.bfloat16), wfc_ref[...],
                            preferred_element_type=jnp.float32)
                    + bfc_ref[...]).astype(out_ref.dtype)


# ------------------------------- wrapper -----------------------------------
@jax.jit
def hybrid_tcn_gru_forward(x, params):
    """x: (B, T, num_inputs) float32 (same as PyTorch batch_first input)."""
    B, T, cin = x.shape
    n_out = params["fc_w"].shape[1]

    B_blk = min(128, max(8, _next_pow2(B)))      # pow2, multiple of 8, <=128
    nb = -(-B // B_blk)
    B_pad = nb * B_blk

    # Time-major HBM layout the kernel DMAs (T, B_blk, cin) blocks from.
    xp = jnp.pad(x, ((0, B_pad - B), (0, 0), (0, 0)))
    x_tm = jnp.transpose(xp, (1, 0, 2))                       # (T, B_pad, cin)

    bf16 = jnp.bfloat16
    w0 = params["conv0_w"].reshape(KSIZE * cin, HIDDEN).astype(bf16)
    w1 = params["conv1_w"].reshape(KSIZE * HIDDEN, HIDDEN).astype(bf16)
    w2 = params["conv2_w"].reshape(KSIZE * HIDDEN, HIDDEN).astype(bf16)
    bns = jnp.concatenate([params[f"bn{l}_scale"] for l in range(3)], axis=0)
    bnt = jnp.concatenate([params[f"bn{l}_shift"] for l in range(3)], axis=0)
    wi = jnp.concatenate([params["w_ir"], params["w_iz"], params["w_in"]],
                         axis=1).astype(bf16)
    wh = jnp.concatenate([params["w_hr"], params["w_hz"], params["w_hn"]],
                         axis=1).astype(bf16)
    bi = jnp.concatenate([params["b_ir"], params["b_iz"], params["b_in"]], axis=1)
    bh = jnp.concatenate([params["b_hr"], params["b_hz"], params["b_hn"]], axis=1)
    wfc = params["fc_w"].astype(bf16)
    bfc = params["fc_b"]

    args = [x_tm, w0, w1, w2, bns, bnt, wi, wh, bi, bh, wfc, bfc]

    def resident(a):   # full-array block + constant index_map -> stays VMEM-resident
        return pl.BlockSpec(a.shape, lambda i, _nd=a.ndim: (0,) * _nd)

    in_specs = [pl.BlockSpec((T, B_blk, cin), lambda i: (0, i, 0))]
    in_specs += [resident(a) for a in args[1:]]

    out = pl.pallas_call(
        fused_tcn_gru_kernel,
        out_shape=jax.ShapeDtypeStruct((B_pad, n_out), jnp.float32),
        grid=(nb,),
        in_specs=in_specs,
        out_specs=pl.BlockSpec((B_blk, n_out), lambda i: (i, 0)),
        scratch_shapes=[pltpu.VMEM((T, B_blk, 3 * HIDDEN), jnp.float32)],
        compiler_params=pltpu.CompilerParams(
            dimension_semantics=("parallel",),
            vmem_limit_bytes=32 * 1024 * 1024),
    )(*args)
    return out[:B]


# ----------------------- deterministic parameter init ----------------------
def init_params(key, num_inputs, num_outputs):
    params = {}
    cins = [num_inputs, HIDDEN, HIDDEN]
    keys = jax.random.split(key, 32)
    ki = 0
    for li, cin in enumerate(cins):
        w = 0.1 * jax.random.normal(keys[ki], (KSIZE, cin, HIDDEN), jnp.float32); ki += 1
        b = 0.1 * jax.random.normal(keys[ki], (HIDDEN,), jnp.float32); ki += 1
        gamma = 1.0 + 0.1 * jax.random.normal(keys[ki], (HIDDEN,), jnp.float32); ki += 1
        beta = 0.1 * jax.random.normal(keys[ki], (HIDDEN,), jnp.float32); ki += 1
        mean = 0.1 * jax.random.normal(keys[ki], (HIDDEN,), jnp.float32); ki += 1
        var = 0.5 + jnp.abs(jax.random.normal(keys[ki], (HIDDEN,), jnp.float32)); ki += 1
        inv = gamma / jnp.sqrt(var + BN_EPS)
        params[f"conv{li}_w"] = w                                   # (K, Cin, Cout)
        params[f"bn{li}_scale"] = inv.reshape(1, HIDDEN)            # folded BN (eval)
        params[f"bn{li}_shift"] = ((b - mean) * inv + beta).reshape(1, HIDDEN)
    for name in ("w_ir", "w_iz", "w_in", "w_hr", "w_hz", "w_hn"):
        params[name] = 0.1 * jax.random.normal(keys[ki], (HIDDEN, HIDDEN), jnp.float32); ki += 1
    for name in ("b_ir", "b_iz", "b_in", "b_hr", "b_hz", "b_hn"):
        params[name] = 0.1 * jax.random.normal(keys[ki], (1, HIDDEN), jnp.float32); ki += 1
    params["fc_w"] = 0.1 * jax.random.normal(keys[ki], (HIDDEN, num_outputs), jnp.float32); ki += 1
    params["fc_b"] = 0.1 * jax.random.normal(keys[ki], (1, num_outputs), jnp.float32); ki += 1
    return params


# ------------------------- pure-JAX reference (check) ----------------------
def _mm(a, b):
    # Same precision policy as the kernel: bf16 matmul operands, f32 accumulate.
    return jnp.dot(a.astype(jnp.bfloat16), b.astype(jnp.bfloat16),
                   preferred_element_type=jnp.float32)


def reference_forward(x, params):
    B, T, _ = x.shape
    h = x
    for li, d in enumerate(DILATIONS):
        w = params[f"conv{li}_w"]
        s = params[f"bn{li}_scale"]
        t = params[f"bn{li}_shift"]
        acc = jnp.zeros((B, T, HIDDEN), jnp.float32)
        for k in range(KSIZE):
            off = (k - 1) * d
            if off > 0:
                xs = jnp.concatenate(
                    [h[:, off:], jnp.zeros((B, off, h.shape[2]), jnp.float32)], axis=1)
            elif off < 0:
                xs = jnp.concatenate(
                    [jnp.zeros((B, -off, h.shape[2]), jnp.float32), h[:, : T + off]], axis=1)
            else:
                xs = h
            acc = acc + _mm(xs.reshape(B * T, -1), w[k]).reshape(B, T, HIDDEN)
        h = jnp.maximum(acc * s + t, 0.0)
    hh = jnp.zeros((B, HIDDEN), jnp.float32)
    for tt in range(T):
        x_t = h[:, tt, :]
        r = jax.nn.sigmoid(_mm(x_t, params["w_ir"]) + params["b_ir"]
                           + _mm(hh, params["w_hr"]) + params["b_hr"])
        z = jax.nn.sigmoid(_mm(x_t, params["w_iz"]) + params["b_iz"]
                           + _mm(hh, params["w_hz"]) + params["b_hz"])
        n = jnp.tanh(_mm(x_t, params["w_in"]) + params["b_in"]
                     + r * (_mm(hh, params["w_hn"]) + params["b_hn"]))
        hh = (1.0 - z) * n + z * hh
    return _mm(hh, params["fc_w"]) + params["fc_b"]


if __name__ == "__main__":
    B, T, num_inputs, num_outputs = 2, 16, 4, 3
    key = jax.random.PRNGKey(0)
    pkey, xkey = jax.random.split(key)
    params = init_params(pkey, num_inputs, num_outputs)
    x = jax.random.normal(xkey, (B, T, num_inputs), jnp.float32)

    out = hybrid_tcn_gru_forward(x, params)
    out = jax.block_until_ready(out)

    ref = reference_forward(x, params)
    assert out.shape == (B, num_outputs)
    assert jnp.allclose(out, ref, atol=1e-2, rtol=1e-2), (out, ref)
    print("KERNEL_OK")
</pallas_src>

<mosaic_0001>
module attributes {stable_mosaic.version = 11 : i64} {
  func.func @fused_tcn_gru_kernel(%arg0: i32, %arg1: memref<16x8x4xf32, #tpu.memory_space<vmem>>, %arg2: memref<12x64xbf16, #tpu.memory_space<vmem>>, %arg3: memref<192x64xbf16, #tpu.memory_space<vmem>>, %arg4: memref<192x64xbf16, #tpu.memory_space<vmem>>, %arg5: memref<3x64xf32, #tpu.memory_space<vmem>>, %arg6: memref<3x64xf32, #tpu.memory_space<vmem>>, %arg7: memref<64x192xbf16, #tpu.memory_space<vmem>>, %arg8: memref<64x192xbf16, #tpu.memory_space<vmem>>, %arg9: memref<1x192xf32, #tpu.memory_space<vmem>>, %arg10: memref<1x192xf32, #tpu.memory_space<vmem>>, %arg11: memref<64x3xbf16, #tpu.memory_space<vmem>>, %arg12: memref<1x3xf32, #tpu.memory_space<vmem>>, %arg13: memref<8x3xf32, #tpu.memory_space<vmem>>, %arg14: memref<16x8x192xf32, #tpu.memory_space<vmem>>) attributes {dimension_semantics = [#tpu.dimension_semantics<parallel>], iteration_bounds = array<i64: 1>, scalar_prefetch = 0 : i64, scratch_operands = 1 : i64, tpu.core_type = #tpu.core_type<tc>, window_params = [{transform_indices = @transform_0, window_bounds = array<i64: 16, 8, 4>}, {pipeline_mode = #tpu.pipeline_mode<synchronous>, transform_indices = @transform_1, window_bounds = array<i64: 12, 64>}, {pipeline_mode = #tpu.pipeline_mode<synchronous>, transform_indices = @transform_2, window_bounds = array<i64: 192, 64>}, {pipeline_mode = #tpu.pipeline_mode<synchronous>, transform_indices = @transform_3, window_bounds = array<i64: 192, 64>}, {pipeline_mode = #tpu.pipeline_mode<synchronous>, transform_indices = @transform_4, window_bounds = array<i64: 3, 64>}, {pipeline_mode = #tpu.pipeline_mode<synchronous>, transform_indices = @transform_5, window_bounds = array<i64: 3, 64>}, {pipeline_mode = #tpu.pipeline_mode<synchronous>, transform_indices = @transform_6, window_bounds = array<i64: 64, 192>}, {pipeline_mode = #tpu.pipeline_mode<synchronous>, transform_indices = @transform_7, window_bounds = array<i64: 64, 192>}, {pipeline_mode = #tpu.pipeline_mode<synchronous>, transform_indices = @transform_8, window_bounds = array<i64: 1, 192>}, {pipeline_mode = #tpu.pipeline_mode<synchronous>, transform_indices = @transform_9, window_bounds = array<i64: 1, 192>}, {pipeline_mode = #tpu.pipeline_mode<synchronous>, transform_indices = @transform_10, window_bounds = array<i64: 64, 3>}, {pipeline_mode = #tpu.pipeline_mode<synchronous>, transform_indices = @transform_11, window_bounds = array<i64: 1, 3>}, {transform_indices = @transform_12, window_bounds = array<i64: 8, 3>}]} {
    %0 = tpu.iota {dimensions = array<i32: 0>} : vector<128x1xi32>
    %c3_i32 = arith.constant 3 : i32
    %1 = vector.broadcast %c3_i32 : i32 to vector<128x1xi32>
    %2 = arith.shrsi %0, %1 : vector<128x1xi32>
    %c0 = arith.constant 0 : index
    %c0_0 = arith.constant 0 : index
    %3 = vector.load %arg5[%c0, %c0_0] : memref<3x64xf32, #tpu.memory_space<vmem>>, vector<3x64xf32>
    %c0_1 = arith.constant 0 : index
    %c0_2 = arith.constant 0 : index
    %4 = vector.load %arg6[%c0_1, %c0_2] : memref<3x64xf32, #tpu.memory_space<vmem>>, vector<3x64xf32>
    %c0_3 = arith.constant 0 : index
    %c0_4 = arith.constant 0 : index
    %c0_5 = arith.constant 0 : index
    %5 = vector.load %arg1[%c0_3, %c0_4, %c0_5] : memref<16x8x4xf32, #tpu.memory_space<vmem>>, vector<16x8x4xf32>
    %6 = vector.shape_cast %5 : vector<16x8x4xf32> to vector<128x4xf32>
    %7 = vector.extract_strided_slice %3 {offsets = [0, 0], sizes = [1, 64], strides = [1, 1]} : vector<3x64xf32> to vector<1x64xf32>
    %8 = vector.extract_strided_slice %4 {offsets = [0, 0], sizes = [1, 64], strides = [1, 1]} : vector<3x64xf32> to vector<1x64xf32>
    %c8_i32 = arith.constant 8 : i32
    %9 = tpu.dynamic_rotate %6 by %c8_i32 dim 0 : vector<128x4xf32>, i32 -> vector<128x4xf32>
    %c1_i32 = arith.constant 1 : i32
    %10 = vector.broadcast %c1_i32 : i32 to vector<128x1xi32>
    %11 = arith.cmpi sge, %2, %10 : vector<128x1xi32>
    %cst = arith.constant 0.000000e+00 : f32
    %12 = vector.shape_cast %11 : vector<128x1xi1> to vector<128x1xi1>
    %13 = vector.broadcast %12 : vector<128x1xi1> to vector<128x4xi1>
    %14 = vector.broadcast %cst : f32 to vector<128x4xf32>
    %15 = arith.select %13, %9, %14 : vector<128x4xi1>, vector<128x4xf32>
    %c120_i32 = arith.constant 120 : i32
    %16 = tpu.dynamic_rotate %6 by %c120_i32 dim 0 : vector<128x4xf32>, i32 -> vector<128x4xf32>
    %c15_i32 = arith.constant 15 : i32
    %17 = vector.broadcast %c15_i32 : i32 to vector<128x1xi32>
    %18 = arith.cmpi slt, %2, %17 : vector<128x1xi32>
    %cst_6 = arith.constant 0.000000e+00 : f32
    %19 = vector.shape_cast %18 : vector<128x1xi1> to vector<128x1xi1>
    %20 = vector.broadcast %19 : vector<128x1xi1> to vector<128x4xi1>
    %21 = vector.broadcast %cst_6 : f32 to vector<128x4xf32>
    %22 = arith.select %20, %16, %21 : vector<128x4xi1>, vector<128x4xf32>
    %23 = tpu.concatenate %15, %6, %22 in 1 : vector<128x4xf32>, vector<128x4xf32>, vector<128x4xf32> -> vector<128x12xf32>
    %24 = arith.truncf %23 : vector<128x12xf32> to vector<128x12xbf16>
    %c0_7 = arith.constant 0 : index
    %c0_8 = arith.constant 0 : index
    %25 = vector.load %arg2[%c0_7, %c0_8] : memref<12x64xbf16, #tpu.memory_space<vmem>>, vector<12x64xbf16>
    %cst_9 = arith.constant dense<0.000000e+00> : vector<128x64xf32>
    %26 = tpu.matmul %24, %25, %cst_9 {dimension_numbers = #tpu.dot_dimension_numbers<[1], [0], [0], [1], [0, 0, 1, 1], [], []>} : vector<128x12xbf16>, vector<12x64xbf16>, vector<128x64xf32> -> vector<128x64xf32>
    %27 = vector.broadcast %7 : vector<1x64xf32> to vector<128x64xf32>
    %28 = arith.mulf %26, %27 : vector<128x64xf32>
    %29 = vector.broadcast %8 : vector<1x64xf32> to vector<128x64xf32>
    %30 = arith.addf %28, %29 : vector<128x64xf32>
    %cst_10 = arith.constant 0.000000e+00 : f32
    %31 = vector.broadcast %cst_10 : f32 to vector<128x64xf32>
    %32 = arith.maximumf %30, %31 : vector<128x64xf32>
    %33 = vector.extract_strided_slice %3 {offsets = [1, 0], sizes = [1, 64], strides = [1, 1]} : vector<3x64xf32> to vector<1x64xf32>
    %34 = vector.extract_strided_slice %4 {offsets = [1, 0], sizes = [1, 64], strides = [1, 1]} : vector<3x64xf32> to vector<1x64xf32>
    %c16_i32 = arith.constant 16 : i32
    %35 = tpu.dynamic_rotate %32 by %c16_i32 dim 0 : vector<128x64xf32>, i32 -> vector<128x64xf32>
    %c2_i32 = arith.constant 2 : i32
    %36 = vector.broadcast %c2_i32 : i32 to vector<128x1xi32>
    %37 = arith.cmpi sge, %2, %36 : vector<128x1xi32>
    %cst_11 = arith.constant 0.000000e+00 : f32
    %38 = vector.shape_cast %37 : vector<128x1xi1> to vector<128x1xi1>
    %39 = vector.broadcast %38 : vector<128x1xi1> to vector<128x64xi1>
    %40 = vector.broadcast %cst_11 : f32 to vector<128x64xf32>
    %41 = arith.select %39, %35, %40 : vector<128x64xi1>, vector<128x64xf32>
    %c112_i32 = arith.constant 112 : i32
    %42 = tpu.dynamic_rotate %32 by %c112_i32 dim 0 : vector<128x64xf32>, i32 -> vector<128x64xf32>
    %c14_i32 = arith.constant 14 : i32
    %43 = vector.broadcast %c14_i32 : i32 to vector<128x1xi32>
    %44 = arith.cmpi slt, %2, %43 : vector<128x1xi32>
    %cst_12 = arith.constant 0.000000e+00 : f32
    %45 = vector.shape_cast %44 : vector<128x1xi1> to vector<128x1xi1>
    %46 = vector.broadcast %45 : vector<128x1xi1> to vector<128x64xi1>
    %47 = vector.broadcast %cst_12 : f32 to vector<128x64xf32>
    %48 = arith.select %46, %42, %47 : vector<128x64xi1>, vector<128x64xf32>
    %49 = tpu.concatenate %41, %32, %48 in 1 : vector<128x64xf32>, vector<128x64xf32>, vector<128x64xf32> -> vector<128x192xf32>
    %50 = arith.truncf %49 : vector<128x192xf32> to vector<128x192xbf16>
    %c0_13 = arith.constant 0 : index
    %c0_14 = arith.constant 0 : index
    %51 = vector.load %arg3[%c0_13, %c0_14] : memref<192x64xbf16, #tpu.memory_space<vmem>>, vector<192x64xbf16>
    %cst_15 = arith.constant dense<0.000000e+00> : vector<128x64xf32>
    %52 = tpu.matmul %50, %51, %cst_15 {dimension_numbers = #tpu.dot_dimension_numbers<[1], [0], [0], [1], [0, 0, 1, 1], [], []>} : vector<128x192xbf16>, vector<192x64xbf16>, vector<128x64xf32> -> vector<128x64xf32>
    %53 = vector.broadcast %33 : vector<1x64xf32> to vector<128x64xf32>
    %54 = arith.mulf %52, %53 : vector<128x64xf32>
    %55 = vector.broadcast %34 : vector<1x64xf32> to vector<128x64xf32>
    %56 = arith.addf %54, %55 : vector<128x64xf32>
    %cst_16 = arith.constant 0.000000e+00 : f32
    %57 = vector.broadcast %cst_16 : f32 to vector<128x64xf32>
    %58 = arith.maximumf %56, %57 : vector<128x64xf32>
    %59 = vector.extract_strided_slice %3 {offsets = [2, 0], sizes = [1, 64], strides = [1, 1]} : vector<3x64xf32> to vector<1x64xf32>
    %60 = vector.extract_strided_slice %4 {offsets = [2, 0], sizes = [1, 64], strides = [1, 1]} : vector<3x64xf32> to vector<1x64xf32>
    %c32_i32 = arith.constant 32 : i32
    %61 = tpu.dynamic_rotate %58 by %c32_i32 dim 0 : vector<128x64xf32>, i32 -> vector<128x64xf32>
    %c4_i32 = arith.constant 4 : i32
    %62 = vector.broadcast %c4_i32 : i32 to vector<128x1xi32>
    %63 = arith.cmpi sge, %2, %62 : vector<128x1xi32>
    %cst_17 = arith.constant 0.000000e+00 : f32
    %64 = vector.shape_cast %63 : vector<128x1xi1> to vector<128x1xi1>
    %65 = vector.broadcast %64 : vector<128x1xi1> to vector<128x64xi1>
    %66 = vector.broadcast %cst_17 : f32 to vector<128x64xf32>
    %67 = arith.select %65, %61, %66 : vector<128x64xi1>, vector<128x64xf32>
    %c96_i32 = arith.constant 96 : i32
    %68 = tpu.dynamic_rotate %58 by %c96_i32 dim 0 : vector<128x64xf32>, i32 -> vector<128x64xf32>
    %c12_i32 = arith.constant 12 : i32
    %69 = vector.broadcast %c12_i32 : i32 to vector<128x1xi32>
    %70 = arith.cmpi slt, %2, %69 : vector<128x1xi32>
    %cst_18 = arith.constant 0.000000e+00 : f32
    %71 = vector.shape_cast %70 : vector<128x1xi1> to vector<128x1xi1>
    %72 = vector.broadcast %71 : vector<128x1xi1> to vector<128x64xi1>
    %73 = vector.broadcast %cst_18 : f32 to vector<128x64xf32>
    %74 = arith.select %72, %68, %73 : vector<128x64xi1>, vector<128x64xf32>
    %75 = tpu.concatenate %67, %58, %74 in 1 : vector<128x64xf32>, vector<128x64xf32>, vector<128x64xf32> -> vector<128x192xf32>
    %76 = arith.truncf %75 : vector<128x192xf32> to vector<128x192xbf16>
    %c0_19 = arith.constant 0 : index
    %c0_20 = arith.constant 0 : index
    %77 = vector.load %arg4[%c0_19, %c0_20] : memref<192x64xbf16, #tpu.memory_space<vmem>>, vector<192x64xbf16>
    %cst_21 = arith.constant dense<0.000000e+00> : vector<128x64xf32>
    %78 = tpu.matmul %76, %77, %cst_21 {dimension_numbers = #tpu.dot_dimension_numbers<[1], [0], [0], [1], [0, 0, 1, 1], [], []>} : vector<128x192xbf16>, vector<192x64xbf16>, vector<128x64xf32> -> vector<128x64xf32>
    %79 = vector.broadcast %59 : vector<1x64xf32> to vector<128x64xf32>
    %80 = arith.mulf %78, %79 : vector<128x64xf32>
    %81 = vector.broadcast %60 : vector<1x64xf32> to vector<128x64xf32>
    %82 = arith.addf %80, %81 : vector<128x64xf32>
    %cst_22 = arith.constant 0.000000e+00 : f32
    %83 = vector.broadcast %cst_22 : f32 to vector<128x64xf32>
    %84 = arith.maximumf %82, %83 : vector<128x64xf32>
    %85 = arith.truncf %84 : vector<128x64xf32> to vector<128x64xbf16>
    %c0_23 = arith.constant 0 : index
    %c0_24 = arith.constant 0 : index
    %86 = vector.load %arg7[%c0_23, %c0_24] : memref<64x192xbf16, #tpu.memory_space<vmem>>, vector<64x192xbf16>
    %cst_25 = arith.constant dense<0.000000e+00> : vector<128x192xf32>
    %87 = tpu.matmul %85, %86, %cst_25 {dimension_numbers = #tpu.dot_dimension_numbers<[1], [0], [0], [1], [0, 0, 1, 1], [], []>} : vector<128x64xbf16>, vector<64x192xbf16>, vector<128x192xf32> -> vector<128x192xf32>
    %c0_26 = arith.constant 0 : index
    %c0_27 = arith.constant 0 : index
    %88 = vector.load %arg9[%c0_26, %c0_27] : memref<1x192xf32, #tpu.memory_space<vmem>>, vector<1x192xf32>
    %89 = vector.broadcast %88 : vector<1x192xf32> to vector<128x192xf32>
    %90 = arith.addf %87, %89 : vector<128x192xf32>
    %91 = vector.shape_cast %90 : vector<128x192xf32> to vector<16x8x192xf32>
    %c0_28 = arith.constant 0 : index
    %c0_29 = arith.constant 0 : index
    %c0_30 = arith.constant 0 : index
    %92 = vector.load %arg14[%c0_28, %c0_29, %c0_30] : memref<16x8x192xf32, #tpu.memory_space<vmem>>, vector<16x8x192xf32>
    tpu.vector_store %arg14[%c0_28, %c0_29, %c0_30], %91 {strides = array<i32>} : memref<16x8x192xf32, #tpu.memory_space<vmem>>, vector<16x8x192xf32>,
    %c0_31 = arith.constant 0 : index
    %c0_32 = arith.constant 0 : index
    %93 = vector.load %arg8[%c0_31, %c0_32] : memref<64x192xbf16, #tpu.memory_space<vmem>>, vector<64x192xbf16>
    %c0_33 = arith.constant 0 : index
    %c0_34 = arith.constant 0 : index
    %94 = vector.load %arg10[%c0_33, %c0_34] : memref<1x192xf32, #tpu.memory_space<vmem>>, vector<1x192xf32>
    %cst_35 = arith.constant 0.000000e+00 : f32
    %95 = vector.broadcast %cst_35 : f32 to vector<8x64xf32>
    %c0_i32 = arith.constant 0 : i32
    %96 = arith.index_cast %c0_i32 : i32 to index
    %c0_36 = arith.constant 0 : index
    %c0_37 = arith.constant 0 : index
    %97 = vector.load %arg14[%96, %c0_36, %c0_37] : memref<16x8x192xf32, #tpu.memory_space<vmem>>, vector<1x8x192xf32>
    %98 = vector.shape_cast %97 : vector<1x8x192xf32> to vector<8x192xf32>
    %99 = arith.truncf %95 : vector<8x64xf32> to vector<8x64xbf16>
    %cst_38 = arith.constant dense<0.000000e+00> : vector<8x192xf32>
    %100 = tpu.matmul %99, %93, %cst_38 {dimension_numbers = #tpu.dot_dimension_numbers<[1], [0], [0], [1], [0, 0, 1, 1], [], []>} : vector<8x64xbf16>, vector<64x192xbf16>, vector<8x192xf32> -> vector<8x192xf32>
    %101 = vector.broadcast %94 : vector<1x192xf32> to vector<8x192xf32>
    %102 = arith.addf %100, %101 : vector<8x192xf32>
    %103 = vector.extract_strided_slice %98 {offsets = [0, 0], sizes = [8, 128], strides = [1, 1]} : vector<8x192xf32> to vector<8x128xf32>
    %104 = vector.extract_strided_slice %102 {offsets = [0, 0], sizes = [8, 128], strides = [1, 1]} : vector<8x192xf32> to vector<8x128xf32>
    %105 = arith.addf %103, %104 : vector<8x128xf32>
    %106 = arith.negf %105 : vector<8x128xf32>
    %107 = math.exp %106 : vector<8x128xf32>
    %cst_39 = arith.constant 1.000000e+00 : f32
    %108 = vector.broadcast %cst_39 : f32 to vector<8x128xf32>
    %109 = arith.addf %108, %107 : vector<8x128xf32>
    %110 = arith.divf %108, %109 : vector<8x128xf32>
    %111 = vector.extract_strided_slice %110 {offsets = [0, 0], sizes = [8, 64], strides = [1, 1]} : vector<8x128xf32> to vector<8x64xf32>
    %112 = vector.extract_strided_slice %110 {offsets = [0, 64], sizes = [8, 64], strides = [1, 1]} : vector<8x128xf32> to vector<8x64xf32>
    %113 = vector.extract_strided_slice %98 {offsets = [0, 128], sizes = [8, 64], strides = [1, 1]} : vector<8x192xf32> to vector<8x64xf32>
    %114 = vector.extract_strided_slice %102 {offsets = [0, 128], sizes = [8, 64], strides = [1, 1]} : vector<8x192xf32> to vector<8x64xf32>
    %115 = arith.mulf %111, %114 : vector<8x64xf32>
    %116 = arith.addf %113, %115 : vector<8x64xf32>
    %117 = math.tanh %116 : vector<8x64xf32>
    %cst_40 = arith.constant 1.000000e+00 : f32
    %118 = vector.broadcast %cst_40 : f32 to vector<8x64xf32>
    %119 = arith.subf %118, %112 : vector<8x64xf32>
    %120 = arith.mulf %119, %117 : vector<8x64xf32>
    %121 = arith.mulf %112, %95 : vector<8x64xf32>
    %122 = arith.addf %120, %121 : vector<8x64xf32>
    %c1_i32_41 = arith.constant 1 : i32
    %123 = arith.index_cast %c1_i32_41 : i32 to index
    %c0_42 = arith.constant 0 : index
    %c0_43 = arith.constant 0 : index
    %124 = vector.load %arg14[%123, %c0_42, %c0_43] : memref<16x8x192xf32, #tpu.memory_space<vmem>>, vector<1x8x192xf32>
    %125 = vector.shape_cast %124 : vector<1x8x192xf32> to vector<8x192xf32>
    %126 = arith.truncf %122 : vector<8x64xf32> to vector<8x64xbf16>
    %cst_44 = arith.constant dense<0.000000e+00> : vector<8x192xf32>
    %127 = tpu.matmul %126, %93, %cst_44 {dimension_numbers = #tpu.dot_dimension_numbers<[1], [0], [0], [1], [0, 0, 1, 1], [], []>} : vector<8x64xbf16>, vector<64x192xbf16>, vector<8x192xf32> -> vector<8x192xf32>
    %128 = vector.broadcast %94 : vector<1x192xf32> to vector<8x192xf32>
    %129 = arith.addf %127, %128 : vector<8x192xf32>
    %130 = vector.extract_strided_slice %125 {offsets = [0, 0], sizes = [8, 128], strides = [1, 1]} : vector<8x192xf32> to vector<8x128xf32>
    %131 = vector.extract_strided_slice %129 {offsets = [0, 0], sizes = [8, 128], strides = [1, 1]} : vector<8x192xf32> to vector<8x128xf32>
    %132 = arith.addf %130, %131 : vector<8x128xf32>
    %133 = arith.negf %132 : vector<8x128xf32>
    %134 = math.exp %133 : vector<8x128xf32>
    %cst_45 = arith.constant 1.000000e+00 : f32
    %135 = vector.broadcast %cst_45 : f32 to vector<8x128xf32>
    %136 = arith.addf %135, %134 : vector<8x128xf32>
    %137 = arith.divf %135, %136 : vector<8x128xf32>
    %138 = vector.extract_strided_slice %137 {offsets = [0, 0], sizes = [8, 64], strides = [1, 1]} : vector<8x128xf32> to vector<8x64xf32>
    %139 = vector.extract_strided_slice %137 {offsets = [0, 64], sizes = [8, 64], strides = [1, 1]} : vector<8x128xf32> to vector<8x64xf32>
    %140 = vector.extract_strided_slice %125 {offsets = [0, 128], sizes = [8, 64], strides = [1, 1]} : vector<8x192xf32> to vector<8x64xf32>
    %141 = vector.extract_strided_slice %129 {offsets = [0, 128], sizes = [8, 64], strides = [1, 1]} : vector<8x192xf32> to vector<8x64xf32>
    %142 = arith.mulf %138, %141 : vector<8x64xf32>
    %143 = arith.addf %140, %142 : vector<8x64xf32>
    %144 = math.tanh %143 : vector<8x64xf32>
    %cst_46 = arith.constant 1.000000e+00 : f32
    %145 = vector.broadcast %cst_46 : f32 to vector<8x64xf32>
    %146 = arith.subf %145, %139 : vector<8x64xf32>
    %147 = arith.mulf %146, %144 : vector<8x64xf32>
    %148 = arith.mulf %139, %122 : vector<8x64xf32>
    %149 = arith.addf %147, %148 : vector<8x64xf32>
    %c2_i32_47 = arith.constant 2 : i32
    %150 = arith.index_cast %c2_i32_47 : i32 to index
    %c0_48 = arith.constant 0 : index
    %c0_49 = arith.constant 0 : index
    %151 = vector.load %arg14[%150, %c0_48, %c0_49] : memref<16x8x192xf32, #tpu.memory_space<vmem>>, vector<1x8x192xf32>
    %152 = vector.shape_cast %151 : vector<1x8x192xf32> to vector<8x192xf32>
    %153 = arith.truncf %149 : vector<8x64xf32> to vector<8x64xbf16>
    %cst_50 = arith.constant dense<0.000000e+00> : vector<8x192xf32>
    %154 = tpu.matmul %153, %93, %cst_50 {dimension_numbers = #tpu.dot_dimension_numbers<[1], [0], [0], [1], [0, 0, 1, 1], [], []>} : vector<8x64xbf16>, vector<64x192xbf16>, vector<8x192xf32> -> vector<8x192xf32>
    %155 = vector.broadcast %94 : vector<1x192xf32> to vector<8x192xf32>
    %156 = arith.addf %154, %155 : vector<8x192xf32>
    %157 = vector.extract_strided_slice %152 {offsets = [0, 0], sizes = [8, 128], strides = [1, 1]} : vector<8x192xf32> to vector<8x128xf32>
    %158 = vector.extract_strided_slice %156 {offsets = [0, 0], sizes = [8, 128], strides = [1, 1]} : vector<8x192xf32> to vector<8x128xf32>
    %159 = arith.addf %157, %158 : vector<8x128xf32>
    %160 = arith.negf %159 : vector<8x128xf32>
    %161 = math.exp %160 : vector<8x128xf32>
    %cst_51 = arith.constant 1.000000e+00 : f32
    %162 = vector.broadcast %cst_51 : f32 to vector<8x128xf32>
    %163 = arith.addf %162, %161 : vector<8x128xf32>
    %164 = arith.divf %162, %163 : vector<8x128xf32>
    %165 = vector.extract_strided_slice %164 {offsets = [0, 0], sizes = [8, 64], strides = [1, 1]} : vector<8x128xf32> to vector<8x64xf32>
    %166 = vector.extract_strided_slice %164 {offsets = [0, 64], sizes = [8, 64], strides = [1, 1]} : vector<8x128xf32> to vector<8x64xf32>
    %167 = vector.extract_strided_slice %152 {offsets = [0, 128], sizes = [8, 64], strides = [1, 1]} : vector<8x192xf32> to vector<8x64xf32>
    %168 = vector.extract_strided_slice %156 {offsets = [0, 128], sizes = [8, 64], strides = [1, 1]} : vector<8x192xf32> to vector<8x64xf32>
    %169 = arith.mulf %165, %168 : vector<8x64xf32>
    %170 = arith.addf %167, %169 : vector<8x64xf32>
    %171 = math.tanh %170 : vector<8x64xf32>
    %cst_52 = arith.constant 1.000000e+00 : f32
    %172 = vector.broadcast %cst_52 : f32 to vector<8x64xf32>
    %173 = arith.subf %172, %166 : vector<8x64xf32>
    %174 = arith.mulf %173, %171 : vector<8x64xf32>
    %175 = arith.mulf %166, %149 : vector<8x64xf32>
    %176 = arith.addf %174, %175 : vector<8x64xf32>
    %c3_i32_53 = arith.constant 3 : i32
    %177 = arith.index_cast %c3_i32_53 : i32 to index
    %c0_54 = arith.constant 0 : index
    %c0_55 = arith.constant 0 : index
    %178 = vector.load %arg14[%177, %c0_54, %c0_55] : memref<16x8x192xf32, #tpu.memory_space<vmem>>, vector<1x8x192xf32>
    %179 = vector.shape_cast %178 : vector<1x8x192xf32> to vector<8x192xf32>
    %180 = arith.truncf %176 : vector<8x64xf32> to vector<8x64xbf16>
    %cst_56 = arith.constant dense<0.000000e+00> : vector<8x192xf32>
    %181 = tpu.matmul %180, %93, %cst_56 {dimension_numbers = #tpu.dot_dimension_numbers<[1], [0], [0], [1], [0, 0, 1, 1], [], []>} : vector<8x64xbf16>, vector<64x192xbf16>, vector<8x192xf32> -> vector<8x192xf32>
    %182 = vector.broadcast %94 : vector<1x192xf32> to vector<8x192xf32>
    %183 = arith.addf %181, %182 : vector<8x192xf32>
    %184 = vector.extract_strided_slice %179 {offsets = [0, 0], sizes = [8, 128], strides = [1, 1]} : vector<8x192xf32> to vector<8x128xf32>
    %185 = vector.extract_strided_slice %183 {offsets = [0, 0], sizes = [8, 128], strides = [1, 1]} : vector<8x192xf32> to vector<8x128xf32>
    %186 = arith.addf %184, %185 : vector<8x128xf32>
    %187 = arith.negf %186 : vector<8x128xf32>
    %188 = math.exp %187 : vector<8x128xf32>
    %cst_57 = arith.constant 1.000000e+00 : f32
    %189 = vector.broadcast %cst_57 : f32 to vector<8x128xf32>
    %190 = arith.addf %189, %188 : vector<8x128xf32>
    %191 = arith.divf %189, %190 : vector<8x128xf32>
    %192 = vector.extract_strided_slice %191 {offsets = [0, 0], sizes = [8, 64], strides = [1, 1]} : vector<8x128xf32> to vector<8x64xf32>
    %193 = vector.extract_strided_slice %191 {offsets = [0, 64], sizes = [8, 64], strides = [1, 1]} : vector<8x128xf32> to vector<8x64xf32>
    %194 = vector.extract_strided_slice %179 {offsets = [0, 128], sizes = [8, 64], strides = [1, 1]} : vector<8x192xf32> to vector<8x64xf32>
    %195 = vector.extract_strided_slice %183 {offsets = [0, 128], sizes = [8, 64], strides = [1, 1]} : vector<8x192xf32> to vector<8x64xf32>
    %196 = arith.mulf %192, %195 : vector<8x64xf32>
    %197 = arith.addf %194, %196 : vector<8x64xf32>
    %198 = math.tanh %197 : vector<8x64xf32>
    %cst_58 = arith.constant 1.000000e+00 : f32
    %199 = vector.broadcast %cst_58 : f32 to vector<8x64xf32>
    %200 = arith.subf %199, %193 : vector<8x64xf32>
    %201 = arith.mulf %200, %198 : vector<8x64xf32>
    %202 = arith.mulf %193, %176 : vector<8x64xf32>
    %203 = arith.addf %201, %202 : vector<8x64xf32>
    %c4_i32_59 = arith.constant 4 : i32
    %204 = arith.index_cast %c4_i32_59 : i32 to index
    %c0_60 = arith.constant 0 : index
    %c0_61 = arith.constant 0 : index
    %205 = vector.load %arg14[%204, %c0_60, %c0_61] : memref<16x8x192xf32, #tpu.memory_space<vmem>>, vector<1x8x192xf32>
    %206 = vector.shape_cast %205 : vector<1x8x192xf32> to vector<8x192xf32>
    %207 = arith.truncf %203 : vector<8x64xf32> to vector<8x64xbf16>
    %cst_62 = arith.constant dense<0.000000e+00> : vector<8x192xf32>
    %208 = tpu.matmul %207, %93, %cst_62 {dimension_numbers = #tpu.dot_dimension_numbers<[1], [0], [0], [1], [0, 0, 1, 1], [], []>} : vector<8x64xbf16>, vector<64x192xbf16>, vector<8x192xf32> -> vector<8x192xf32>
    %209 = vector.broadcast %94 : vector<1x192xf32> to vector<8x192xf32>
    %210 = arith.addf %208, %209 : vector<8x192xf32>
    %211 = vector.extract_strided_slice %206 {offsets = [0, 0], sizes = [8, 128], strides = [1, 1]} : vector<8x192xf32> to vector<8x128xf32>
    %212 = vector.extract_strided_slice %210 {offsets = [0, 0], sizes = [8, 128], strides = [1, 1]} : vector<8x192xf32> to vector<8x128xf32>
    %213 = arith.addf %211, %212 : vector<8x128xf32>
    %214 = arith.negf %213 : vector<8x128xf32>
    %215 = math.exp %214 : vector<8x128xf32>
    %cst_63 = arith.constant 1.000000e+00 : f32
    %216 = vector.broadcast %cst_63 : f32 to vector<8x128xf32>
    %217 = arith.addf %216, %215 : vector<8x128xf32>
    %218 = arith.divf %216, %217 : vector<8x128xf32>
    %219 = vector.extract_strided_slice %218 {offsets = [0, 0], sizes = [8, 64], strides = [1, 1]} : vector<8x128xf32> to vector<8x64xf32>
    %220 = vector.extract_strided_slice %218 {offsets = [0, 64], sizes = [8, 64], strides = [1, 1]} : vector<8x128xf32> to vector<8x64xf32>
    %221 = vector.extract_strided_slice %206 {offsets = [0, 128], sizes = [8, 64], strides = [1, 1]} : vector<8x192xf32> to vector<8x64xf32>
    %222 = vector.extract_strided_slice %210 {offsets = [0, 128], sizes = [8, 64], strides = [1, 1]} : vector<8x192xf32> to vector<8x64xf32>
    %223 = arith.mulf %219, %222 : vector<8x64xf32>
    %224 = arith.addf %221, %223 : vector<8x64xf32>
    %225 = math.tanh %224 : vector<8x64xf32>
    %cst_64 = arith.constant 1.000000e+00 : f32
    %226 = vector.broadcast %cst_64 : f32 to vector<8x64xf32>
    %227 = arith.subf %226, %220 : vector<8x64xf32>
    %228 = arith.mulf %227, %225 : vector<8x64xf32>
    %229 = arith.mulf %220, %203 : vector<8x64xf32>
    %230 = arith.addf %228, %229 : vector<8x64xf32>
    %c5_i32 = arith.constant 5 : i32
    %231 = arith.index_cast %c5_i32 : i32 to index
    %c0_65 = arith.constant 0 : index
    %c0_66 = arith.constant 0 : index
    %232 = vector.load %arg14[%231, %c0_65, %c0_66] : memref<16x8x192xf32, #tpu.memory_space<vmem>>, vector<1x8x192xf32>
    %233 = vector.shape_cast %232 : vector<1x8x192xf32> to vector<8x192xf32>
    %234 = arith.truncf %230 : vector<8x64xf32> to vector<8x64xbf16>
    %cst_67 = arith.constant dense<0.000000e+00> : vector<8x192xf32>
    %235 = tpu.matmul %234, %93, %cst_67 {dimension_numbers = #tpu.dot_dimension_numbers<[1], [0], [0], [1], [0, 0, 1, 1], [], []>} : vector<8x64xbf16>, vector<64x192xbf16>, vector<8x192xf32> -> vector<8x192xf32>
    %236 = vector.broadcast %94 : vector<1x192xf32> to vector<8x192xf32>
    %237 = arith.addf %235, %236 : vector<8x192xf32>
    %238 = vector.extract_strided_slice %233 {offsets = [0, 0], sizes = [8, 128], strides = [1, 1]} : vector<8x192xf32> to vector<8x128xf32>
    %239 = vector.extract_strided_slice %237 {offsets = [0, 0], sizes = [8, 128], strides = [1, 1]} : vector<8x192xf32> to vector<8x128xf32>
    %240 = arith.addf %238, %239 : vector<8x128xf32>
    %241 = arith.negf %240 : vector<8x128xf32>
    %242 = math.exp %241 : vector<8x128xf32>
    %cst_68 = arith.constant 1.000000e+00 : f32
    %243 = vector.broadcast %cst_68 : f32 to vector<8x128xf32>
    %244 = arith.addf %243, %242 : vector<8x128xf32>
    %245 = arith.divf %243, %244 : vector<8x128xf32>
    %246 = vector.extract_strided_slice %245 {offsets = [0, 0], sizes = [8, 64], strides = [1, 1]} : vector<8x128xf32> to vector<8x64xf32>
    %247 = vector.extract_strided_slice %245 {offsets = [0, 64], sizes = [8, 64], strides = [1, 1]} : vector<8x128xf32> to vector<8x64xf32>
    %248 = vector.extract_strided_slice %233 {offsets = [0, 128], sizes = [8, 64], strides = [1, 1]} : vector<8x192xf32> to vector<8x64xf32>
    %249 = vector.extract_strided_slice %237 {offsets = [0, 128], sizes = [8, 64], strides = [1, 1]} : vector<8x192xf32> to vector<8x64xf32>
    %250 = arith.mulf %246, %249 : vector<8x64xf32>
    %251 = arith.addf %248, %250 : vector<8x64xf32>
    %252 = math.tanh %251 : vector<8x64xf32>
    %cst_69 = arith.constant 1.000000e+00 : f32
    %253 = vector.broadcast %cst_69 : f32 to vector<8x64xf32>
    %254 = arith.subf %253, %247 : vector<8x64xf32>
    %255 = arith.mulf %254, %252 : vector<8x64xf32>
    %256 = arith.mulf %247, %230 : vector<8x64xf32>
    %257 = arith.addf %255, %256 : vector<8x64xf32>
    %c6_i32 = arith.constant 6 : i32
    %258 = arith.index_cast %c6_i32 : i32 to index
    %c0_70 = arith.constant 0 : index
    %c0_71 = arith.constant 0 : index
    %259 = vector.load %arg14[%258, %c0_70, %c0_71] : memref<16x8x192xf32, #tpu.memory_space<vmem>>, vector<1x8x192xf32>
    %260 = vector.shape_cast %259 : vector<1x8x192xf32> to vector<8x192xf32>
    %261 = arith.truncf %257 : vector<8x64xf32> to vector<8x64xbf16>
    %cst_72 = arith.constant dense<0.000000e+00> : vector<8x192xf32>
    %262 = tpu.matmul %261, %93, %cst_72 {dimension_numbers = #tpu.dot_dimension_numbers<[1], [0], [0], [1], [0, 0, 1, 1], [], []>} : vector<8x64xbf16>, vector<64x192xbf16>, vector<8x192xf32> -> vector<8x192xf32>
    %263 = vector.broadcast %94 : vector<1x192xf32> to vector<8x192xf32>
    %264 = arith.addf %262, %263 : vector<8x192xf32>
    %265 = vector.extract_strided_slice %260 {offsets = [0, 0], sizes = [8, 128], strides = [1, 1]} : vector<8x192xf32> to vector<8x128xf32>
    %266 = vector.extract_strided_slice %264 {offsets = [0, 0], sizes = [8, 128], strides = [1, 1]} : vector<8x192xf32> to vector<8x128xf32>
    %267 = arith.addf %265, %266 : vector<8x128xf32>
    %268 = arith.negf %267 : vector<8x128xf32>
    %269 = math.exp %268 : vector<8x128xf32>
    %cst_73 = arith.constant 1.000000e+00 : f32
    %270 = vector.broadcast %cst_73 : f32 to vector<8x128xf32>
    %271 = arith.addf %270, %269 : vector<8x128xf32>
    %272 = arith.divf %270, %271 : vector<8x128xf32>
    %273 = vector.extract_strided_slice %272 {offsets = [0, 0], sizes = [8, 64], strides = [1, 1]} : vector<8x128xf32> to vector<8x64xf32>
    %274 = vector.extract_strided_slice %272 {offsets = [0, 64], sizes = [8, 64], strides = [1, 1]} : vector<8x128xf32> to vector<8x64xf32>
    %275 = vector.extract_strided_slice %260 {offsets = [0, 128], sizes = [8, 64], strides = [1, 1]} : vector<8x192xf32> to vector<8x64xf32>
    %276 = vector.extract_strided_slice %264 {offsets = [0, 128], sizes = [8, 64], strides = [1, 1]} : vector<8x192xf32> to vector<8x64xf32>
    %277 = arith.mulf %273, %276 : vector<8x64xf32>
    %278 = arith.addf %275, %277 : vector<8x64xf32>
    %279 = math.tanh %278 : vector<8x64xf32>
    %cst_74 = arith.constant 1.000000e+00 : f32
    %280 = vector.broadcast %cst_74 : f32 to vector<8x64xf32>
    %281 = arith.subf %280, %274 : vector<8x64xf32>
    %282 = arith.mulf %281, %279 : vector<8x64xf32>
    %283 = arith.mulf %274, %257 : vector<8x64xf32>
    %284 = arith.addf %282, %283 : vector<8x64xf32>
    %c7_i32 = arith.constant 7 : i32
    %285 = arith.index_cast %c7_i32 : i32 to index
    %c0_75 = arith.constant 0 : index
    %c0_76 = arith.constant 0 : index
    %286 = vector.load %arg14[%285, %c0_75, %c0_76] : memref<16x8x192xf32, #tpu.memory_space<vmem>>, vector<1x8x192xf32>
    %287 = vector.shape_cast %286 : vector<1x8x192xf32> to vector<8x192xf32>
    %288 = arith.truncf %284 : vector<8x64xf32> to vector<8x64xbf16>
    %cst_77 = arith.constant dense<0.000000e+00> : vector<8x192xf32>
    %289 = tpu.matmul %288, %93, %cst_77 {dimension_numbers = #tpu.dot_dimension_numbers<[1], [0], [0], [1], [0, 0, 1, 1], [], []>} : vector<8x64xbf16>, vector<64x192xbf16>, vector<8x192xf32> -> vector<8x192xf32>
    %290 = vector.broadcast %94 : vector<1x192xf32> to vector<8x192xf32>
    %291 = arith.addf %289, %290 : vector<8x192xf32>
    %292 = vector.extract_strided_slice %287 {offsets = [0, 0], sizes = [8, 128], strides = [1, 1]} : vector<8x192xf32> to vector<8x128xf32>
    %293 = vector.extract_strided_slice %291 {offsets = [0, 0], sizes = [8, 128], strides = [1, 1]} : vector<8x192xf32> to vector<8x128xf32>
    %294 = arith.addf %292, %293 : vector<8x128xf32>
    %295 = arith.negf %294 : vector<8x128xf32>
    %296 = math.exp %295 : vector<8x128xf32>
    %cst_78 = arith.constant 1.000000e+00 : f32
    %297 = vector.broadcast %cst_78 : f32 to vector<8x128xf32>
    %298 = arith.addf %297, %296 : vector<8x128xf32>
    %299 = arith.divf %297, %298 : vector<8x128xf32>
    %300 = vector.extract_strided_slice %299 {offsets = [0, 0], sizes = [8, 64], strides = [1, 1]} : vector<8x128xf32> to vector<8x64xf32>
    %301 = vector.extract_strided_slice %299 {offsets = [0, 64], sizes = [8, 64], strides = [1, 1]} : vector<8x128xf32> to vector<8x64xf32>
    %302 = vector.extract_strided_slice %287 {offsets = [0, 128], sizes = [8, 64], strides = [1, 1]} : vector<8x192xf32> to vector<8x64xf32>
    %303 = vector.extract_strided_slice %291 {offsets = [0, 128], sizes = [8, 64], strides = [1, 1]} : vector<8x192xf32> to vector<8x64xf32>
    %304 = arith.mulf %300, %303 : vector<8x64xf32>
    %305 = arith.addf %302, %304 : vector<8x64xf32>
    %306 = math.tanh %305 : vector<8x64xf32>
    %cst_79 = arith.constant 1.000000e+00 : f32
    %307 = vector.broadcast %cst_79 : f32 to vector<8x64xf32>
    %308 = arith.subf %307, %301 : vector<8x64xf32>
    %309 = arith.mulf %308, %306 : vector<8x64xf32>
    %310 = arith.mulf %301, %284 : vector<8x64xf32>
    %311 = arith.addf %309, %310 : vector<8x64xf32>
    %c8_i32_80 = arith.constant 8 : i32
    %312 = arith.index_cast %c8_i32_80 : i32 to index
    %c0_81 = arith.constant 0 : index
    %c0_82 = arith.constant 0 : index
    %313 = vector.load %arg14[%312, %c0_81, %c0_82] : memref<16x8x192xf32, #tpu.memory_space<vmem>>, vector<1x8x192xf32>
    %314 = vector.shape_cast %313 : vector<1x8x192xf32> to vector<8x192xf32>
    %315 = arith.truncf %311 : vector<8x64xf32> to vector<8x64xbf16>
    %cst_83 = arith.constant dense<0.000000e+00> : vector<8x192xf32>
    %316 = tpu.matmul %315, %93, %cst_83 {dimension_numbers = #tpu.dot_dimension_numbers<[1], [0], [0], [1], [0, 0, 1, 1], [], []>} : vector<8x64xbf16>, vector<64x192xbf16>, vector<8x192xf32> -> vector<8x192xf32>
    %317 = vector.broadcast %94 : vector<1x192xf32> to vector<8x192xf32>
    %318 = arith.addf %316, %317 : vector<8x192xf32>
    %319 = vector.extract_strided_slice %314 {offsets = [0, 0], sizes = [8, 128], strides = [1, 1]} : vector<8x192xf32> to vector<8x128xf32>
    %320 = vector.extract_strided_slice %318 {offsets = [0, 0], sizes = [8, 128], strides = [1, 1]} : vector<8x192xf32> to vector<8x128xf32>
    %321 = arith.addf %319, %320 : vector<8x128xf32>
    %322 = arith.negf %321 : vector<8x128xf32>
    %323 = math.exp %322 : vector<8x128xf32>
    %cst_84 = arith.constant 1.000000e+00 : f32
    %324 = vector.broadcast %cst_84 : f32 to vector<8x128xf32>
    %325 = arith.addf %324, %323 : vector<8x128xf32>
    %326 = arith.divf %324, %325 : vector<8x128xf32>
    %327 = vector.extract_strided_slice %326 {offsets = [0, 0], sizes = [8, 64], strides = [1, 1]} : vector<8x128xf32> to vector<8x64xf32>
    %328 = vector.extract_strided_slice %326 {offsets = [0, 64], sizes = [8, 64], strides = [1, 1]} : vector<8x128xf32> to vector<8x64xf32>
    %329 = vector.extract_strided_slice %314 {offsets = [0, 128], sizes = [8, 64], strides = [1, 1]} : vector<8x192xf32> to vector<8x64xf32>
    %330 = vector.extract_strided_slice %318 {offsets = [0, 128], sizes = [8, 64], strides = [1, 1]} : vector<8x192xf32> to vector<8x64xf32>
    %331 = arith.mulf %327, %330 : vector<8x64xf32>
    %332 = arith.addf %329, %331 : vector<8x64xf32>
    %333 = math.tanh %332 : vector<8x64xf32>
    %cst_85 = arith.constant 1.000000e+00 : f32
    %334 = vector.broadcast %cst_85 : f32 to vector<8x64xf32>
    %335 = arith.subf %334, %328 : vector<8x64xf32>
    %336 = arith.mulf %335, %333 : vector<8x64xf32>
    %337 = arith.mulf %328, %311 : vector<8x64xf32>
    %338 = arith.addf %336, %337 : vector<8x64xf32>
    %c9_i32 = arith.constant 9 : i32
    %339 = arith.index_cast %c9_i32 : i32 to index
    %c0_86 = arith.constant 0 : index
    %c0_87 = arith.constant 0 : index
    %340 = vector.load %arg14[%339, %c0_86, %c0_87] : memref<16x8x192xf32, #tpu.memory_space<vmem>>, vector<1x8x192xf32>
    %341 = vector.shape_cast %340 : vector<1x8x192xf32> to vector<8x192xf32>
    %342 = arith.truncf %338 : vector<8x64xf32> to vector<8x64xbf16>
    %cst_88 = arith.constant dense<0.000000e+00> : vector<8x192xf32>
    %343 = tpu.matmul %342, %93, %cst_88 {dimension_numbers = #tpu.dot_dimension_numbers<[1], [0], [0], [1], [0, 0, 1, 1], [], []>} : vector<8x64xbf16>, vector<64x192xbf16>, vector<8x192xf32> -> vector<8x192xf32>
    %344 = vector.broadcast %94 : vector<1x192xf32> to vector<8x192xf32>
    %345 = arith.addf %343, %344 : vector<8x192xf32>
    %346 = vector.extract_strided_slice %341 {offsets = [0, 0], sizes = [8, 128], strides = [1, 1]} : vector<8x192xf32> to vector<8x128xf32>
    %347 = vector.extract_strided_slice %345 {offsets = [0, 0], sizes = [8, 128], strides = [1, 1]} : vector<8x192xf32> to vector<8x128xf32>
    %348 = arith.addf %346, %347 : vector<8x128xf32>
    %349 = arith.negf %348 : vector<8x128xf32>
    %350 = math.exp %349 : vector<8x128xf32>
    %cst_89 = arith.constant 1.000000e+00 : f32
    %351 = vector.broadcast %cst_89 : f32 to vector<8x128xf32>
    %352 = arith.addf %351, %350 : vector<8x128xf32>
    %353 = arith.divf %351, %352 : vector<8x128xf32>
    %354 = vector.extract_strided_slice %353 {offsets = [0, 0], sizes = [8, 64], strides = [1, 1]} : vector<8x128xf32> to vector<8x64xf32>
    %355 = vector.extract_strided_slice %353 {offsets = [0, 64], sizes = [8, 64], strides = [1, 1]} : vector<8x128xf32> to vector<8x64xf32>
    %356 = vector.extract_strided_slice %341 {offsets = [0, 128], sizes = [8, 64], strides = [1, 1]} : vector<8x192xf32> to vector<8x64xf32>
    %357 = vector.extract_strided_slice %345 {offsets = [0, 128], sizes = [8, 64], strides = [1, 1]} : vector<8x192xf32> to vector<8x64xf32>
    %358 = arith.mulf %354, %357 : vector<8x64xf32>
    %359 = arith.addf %356, %358 : vector<8x64xf32>
    %360 = math.tanh %359 : vector<8x64xf32>
    %cst_90 = arith.constant 1.000000e+00 : f32
    %361 = vector.broadcast %cst_90 : f32 to vector<8x64xf32>
    %362 = arith.subf %361, %355 : vector<8x64xf32>
    %363 = arith.mulf %362, %360 : vector<8x64xf32>
    %364 = arith.mulf %355, %338 : vector<8x64xf32>
    %365 = arith.addf %363, %364 : vector<8x64xf32>
    %c10_i32 = arith.constant 10 : i32
    %366 = arith.index_cast %c10_i32 : i32 to index
    %c0_91 = arith.constant 0 : index
    %c0_92 = arith.constant 0 : index
    %367 = vector.load %arg14[%366, %c0_91, %c0_92] : memref<16x8x192xf32, #tpu.memory_space<vmem>>, vector<1x8x192xf32>
    %368 = vector.shape_cast %367 : vector<1x8x192xf32> to vector<8x192xf32>
    %369 = arith.truncf %365 : vector<8x64xf32> to vector<8x64xbf16>
    %cst_93 = arith.constant dense<0.000000e+00> : vector<8x192xf32>
    %370 = tpu.matmul %369, %93, %cst_93 {dimension_numbers = #tpu.dot_dimension_numbers<[1], [0], [0], [1], [0, 0, 1, 1], [], []>} : vector<8x64xbf16>, vector<64x192xbf16>, vector<8x192xf32> -> vector<8x192xf32>
    %371 = vector.broadcast %94 : vector<1x192xf32> to vector<8x192xf32>
    %372 = arith.addf %370, %371 : vector<8x192xf32>
    %373 = vector.extract_strided_slice %368 {offsets = [0, 0], sizes = [8, 128], strides = [1, 1]} : vector<8x192xf32> to vector<8x128xf32>
    %374 = vector.extract_strided_slice %372 {offsets = [0, 0], sizes = [8, 128], strides = [1, 1]} : vector<8x192xf32> to vector<8x128xf32>
    %375 = arith.addf %373, %374 : vector<8x128xf32>
    %376 = arith.negf %375 : vector<8x128xf32>
    %377 = math.exp %376 : vector<8x128xf32>
    %cst_94 = arith.constant 1.000000e+00 : f32
    %378 = vector.broadcast %cst_94 : f32 to vector<8x128xf32>
    %379 = arith.addf %378, %377 : vector<8x128xf32>
    %380 = arith.divf %378, %379 : vector<8x128xf32>
    %381 = vector.extract_strided_slice %380 {offsets = [0, 0], sizes = [8, 64], strides = [1, 1]} : vector<8x128xf32> to vector<8x64xf32>
    %382 = vector.extract_strided_slice %380 {offsets = [0, 64], sizes = [8, 64], strides = [1, 1]} : vector<8x128xf32> to vector<8x64xf32>
    %383 = vector.extract_strided_slice %368 {offsets = [0, 128], sizes = [8, 64], strides = [1, 1]} : vector<8x192xf32> to vector<8x64xf32>
    %384 = vector.extract_strided_slice %372 {offsets = [0, 128], sizes = [8, 64], strides = [1, 1]} : vector<8x192xf32> to vector<8x64xf32>
    %385 = arith.mulf %381, %384 : vector<8x64xf32>
    %386 = arith.addf %383, %385 : vector<8x64xf32>
    %387 = math.tanh %386 : vector<8x64xf32>
    %cst_95 = arith.constant 1.000000e+00 : f32
    %388 = vector.broadcast %cst_95 : f32 to vector<8x64xf32>
    %389 = arith.subf %388, %382 : vector<8x64xf32>
    %390 = arith.mulf %389, %387 : vector<8x64xf32>
    %391 = arith.mulf %382, %365 : vector<8x64xf32>
    %392 = arith.addf %390, %391 : vector<8x64xf32>
    %c11_i32 = arith.constant 11 : i32
    %393 = arith.index_cast %c11_i32 : i32 to index
    %c0_96 = arith.constant 0 : index
    %c0_97 = arith.constant 0 : index
    %394 = vector.load %arg14[%393, %c0_96, %c0_97] : memref<16x8x192xf32, #tpu.memory_space<vmem>>, vector<1x8x192xf32>
    %395 = vector.shape_cast %394 : vector<1x8x192xf32> to vector<8x192xf32>
    %396 = arith.truncf %392 : vector<8x64xf32> to vector<8x64xbf16>
    %cst_98 = arith.constant dense<0.000000e+00> : vector<8x192xf32>
    %397 = tpu.matmul %396, %93, %cst_98 {dimension_numbers = #tpu.dot_dimension_numbers<[1], [0], [0], [1], [0, 0, 1, 1], [], []>} : vector<8x64xbf16>, vector<64x192xbf16>, vector<8x192xf32> -> vector<8x192xf32>
    %398 = vector.broadcast %94 : vector<1x192xf32> to vector<8x192xf32>
    %399 = arith.addf %397, %398 : vector<8x192xf32>
    %400 = vector.extract_strided_slice %395 {offsets = [0, 0], sizes = [8, 128], strides = [1, 1]} : vector<8x192xf32> to vector<8x128xf32>
    %401 = vector.extract_strided_slice %399 {offsets = [0, 0], sizes = [8, 128], strides = [1, 1]} : vector<8x192xf32> to vector<8x128xf32>
    %402 = arith.addf %400, %401 : vector<8x128xf32>
    %403 = arith.negf %402 : vector<8x128xf32>
    %404 = math.exp %403 : vector<8x128xf32>
    %cst_99 = arith.constant 1.000000e+00 : f32
    %405 = vector.broadcast %cst_99 : f32 to vector<8x128xf32>
    %406 = arith.addf %405, %404 : vector<8x128xf32>
    %407 = arith.divf %405, %406 : vector<8x128xf32>
    %408 = vector.extract_strided_slice %407 {offsets = [0, 0], sizes = [8, 64], strides = [1, 1]} : vector<8x128xf32> to vector<8x64xf32>
    %409 = vector.extract_strided_slice %407 {offsets = [0, 64], sizes = [8, 64], strides = [1, 1]} : vector<8x128xf32> to vector<8x64xf32>
    %410 = vector.extract_strided_slice %395 {offsets = [0, 128], sizes = [8, 64], strides = [1, 1]} : vector<8x192xf32> to vector<8x64xf32>
    %411 = vector.extract_strided_slice %399 {offsets = [0, 128], sizes = [8, 64], strides = [1, 1]} : vector<8x192xf32> to vector<8x64xf32>
    %412 = arith.mulf %408, %411 : vector<8x64xf32>
    %413 = arith.addf %410, %412 : vector<8x64xf32>
    %414 = math.tanh %413 : vector<8x64xf32>
    %cst_100 = arith.constant 1.000000e+00 : f32
    %415 = vector.broadcast %cst_100 : f32 to vector<8x64xf32>
    %416 = arith.subf %415, %409 : vector<8x64xf32>
    %417 = arith.mulf %416, %414 : vector<8x64xf32>
    %418 = arith.mulf %409, %392 : vector<8x64xf32>
    %419 = arith.addf %417, %418 : vector<8x64xf32>
    %c12_i32_101 = arith.constant 12 : i32
    %420 = arith.index_cast %c12_i32_101 : i32 to index
    %c0_102 = arith.constant 0 : index
    %c0_103 = arith.constant 0 : index
    %421 = vector.load %arg14[%420, %c0_102, %c0_103] : memref<16x8x192xf32, #tpu.memory_space<vmem>>, vector<1x8x192xf32>
    %422 = vector.shape_cast %421 : vector<1x8x192xf32> to vector<8x192xf32>
    %423 = arith.truncf %419 : vector<8x64xf32> to vector<8x64xbf16>
    %cst_104 = arith.constant dense<0.000000e+00> : vector<8x192xf32>
    %424 = tpu.matmul %423, %93, %cst_104 {dimension_numbers = #tpu.dot_dimension_numbers<[1], [0], [0], [1], [0, 0, 1, 1], [], []>} : vector<8x64xbf16>, vector<64x192xbf16>, vector<8x192xf32> -> vector<8x192xf32>
    %425 = vector.broadcast %94 : vector<1x192xf32> to vector<8x192xf32>
    %426 = arith.addf %424, %425 : vector<8x192xf32>
    %427 = vector.extract_strided_slice %422 {offsets = [0, 0], sizes = [8, 128], strides = [1, 1]} : vector<8x192xf32> to vector<8x128xf32>
    %428 = vector.extract_strided_slice %426 {offsets = [0, 0], sizes = [8, 128], strides = [1, 1]} : vector<8x192xf32> to vector<8x128xf32>
    %429 = arith.addf %427, %428 : vector<8x128xf32>
    %430 = arith.negf %429 : vector<8x128xf32>
    %431 = math.exp %430 : vector<8x128xf32>
    %cst_105 = arith.constant 1.000000e+00 : f32
    %432 = vector.broadcast %cst_105 : f32 to vector<8x128xf32>
    %433 = arith.addf %432, %431 : vector<8x128xf32>
    %434 = arith.divf %432, %433 : vector<8x128xf32>
    %435 = vector.extract_strided_slice %434 {offsets = [0, 0], sizes = [8, 64], strides = [1, 1]} : vector<8x128xf32> to vector<8x64xf32>
    %436 = vector.extract_strided_slice %434 {offsets = [0, 64], sizes = [8, 64], strides = [1, 1]} : vector<8x128xf32> to vector<8x64xf32>
    %437 = vector.extract_strided_slice %422 {offsets = [0, 128], sizes = [8, 64], strides = [1, 1]} : vector<8x192xf32> to vector<8x64xf32>
    %438 = vector.extract_strided_slice %426 {offsets = [0, 128], sizes = [8, 64], strides = [1, 1]} : vector<8x192xf32> to vector<8x64xf32>
    %439 = arith.mulf %435, %438 : vector<8x64xf32>
    %440 = arith.addf %437, %439 : vector<8x64xf32>
    %441 = math.tanh %440 : vector<8x64xf32>
    %cst_106 = arith.constant 1.000000e+00 : f32
    %442 = vector.broadcast %cst_106 : f32 to vector<8x64xf32>
    %443 = arith.subf %442, %436 : vector<8x64xf32>
    %444 = arith.mulf %443, %441 : vector<8x64xf32>
    %445 = arith.mulf %436, %419 : vector<8x64xf32>
    %446 = arith.addf %444, %445 : vector<8x64xf32>
    %c13_i32 = arith.constant 13 : i32
    %447 = arith.index_cast %c13_i32 : i32 to index
    %c0_107 = arith.constant 0 : index
    %c0_108 = arith.constant 0 : index
    %448 = vector.load %arg14[%447, %c0_107, %c0_108] : memref<16x8x192xf32, #tpu.memory_space<vmem>>, vector<1x8x192xf32>
    %449 = vector.shape_cast %448 : vector<1x8x192xf32> to vector<8x192xf32>
    %450 = arith.truncf %446 : vector<8x64xf32> to vector<8x64xbf16>
    %cst_109 = arith.constant dense<0.000000e+00> : vector<8x192xf32>
    %451 = tpu.matmul %450, %93, %cst_109 {dimension_numbers = #tpu.dot_dimension_numbers<[1], [0], [0], [1], [0, 0, 1, 1], [], []>} : vector<8x64xbf16>, vector<64x192xbf16>, vector<8x192xf32> -> vector<8x192xf32>
    %452 = vector.broadcast %94 : vector<1x192xf32> to vector<8x192xf32>
    %453 = arith.addf %451, %452 : vector<8x192xf32>
    %454 = vector.extract_strided_slice %449 {offsets = [0, 0], sizes = [8, 128], strides = [1, 1]} : vector<8x192xf32> to vector<8x128xf32>
    %455 = vector.extract_strided_slice %453 {offsets = [0, 0], sizes = [8, 128], strides = [1, 1]} : vector<8x192xf32> to vector<8x128xf32>
    %456 = arith.addf %454, %455 : vector<8x128xf32>
    %457 = arith.negf %456 : vector<8x128xf32>
    %458 = math.exp %457 : vector<8x128xf32>
    %cst_110 = arith.constant 1.000000e+00 : f32
    %459 = vector.broadcast %cst_110 : f32 to vector<8x128xf32>
    %460 = arith.addf %459, %458 : vector<8x128xf32>
    %461 = arith.divf %459, %460 : vector<8x128xf32>
    %462 = vector.extract_strided_slice %461 {offsets = [0, 0], sizes = [8, 64], strides = [1, 1]} : vector<8x128xf32> to vector<8x64xf32>
    %463 = vector.extract_strided_slice %461 {offsets = [0, 64], sizes = [8, 64], strides = [1, 1]} : vector<8x128xf32> to vector<8x64xf32>
    %464 = vector.extract_strided_slice %449 {offsets = [0, 128], sizes = [8, 64], strides = [1, 1]} : vector<8x192xf32> to vector<8x64xf32>
    %465 = vector.extract_strided_slice %453 {offsets = [0, 128], sizes = [8, 64], strides = [1, 1]} : vector<8x192xf32> to vector<8x64xf32>
    %466 = arith.mulf %462, %465 : vector<8x64xf32>
    %467 = arith.addf %464, %466 : vector<8x64xf32>
    %468 = math.tanh %467 : vector<8x64xf32>
    %cst_111 = arith.constant 1.000000e+00 : f32
    %469 = vector.broadcast %cst_111 : f32 to vector<8x64xf32>
    %470 = arith.subf %469, %463 : vector<8x64xf32>
    %471 = arith.mulf %470, %468 : vector<8x64xf32>
    %472 = arith.mulf %463, %446 : vector<8x64xf32>
    %473 = arith.addf %471, %472 : vector<8x64xf32>
    %c14_i32_112 = arith.constant 14 : i32
    %474 = arith.index_cast %c14_i32_112 : i32 to index
    %c0_113 = arith.constant 0 : index
    %c0_114 = arith.constant 0 : index
    %475 = vector.load %arg14[%474, %c0_113, %c0_114] : memref<16x8x192xf32, #tpu.memory_space<vmem>>, vector<1x8x192xf32>
    %476 = vector.shape_cast %475 : vector<1x8x192xf32> to vector<8x192xf32>
    %477 = arith.truncf %473 : vector<8x64xf32> to vector<8x64xbf16>
    %cst_115 = arith.constant dense<0.000000e+00> : vector<8x192xf32>
    %478 = tpu.matmul %477, %93, %cst_115 {dimension_numbers = #tpu.dot_dimension_numbers<[1], [0], [0], [1], [0, 0, 1, 1], [], []>} : vector<8x64xbf16>, vector<64x192xbf16>, vector<8x192xf32> -> vector<8x192xf32>
    %479 = vector.broadcast %94 : vector<1x192xf32> to vector<8x192xf32>
    %480 = arith.addf %478, %479 : vector<8x192xf32>
    %481 = vector.extract_strided_slice %476 {offsets = [0, 0], sizes = [8, 128], strides = [1, 1]} : vector<8x192xf32> to vector<8x128xf32>
    %482 = vector.extract_strided_slice %480 {offsets = [0, 0], sizes = [8, 128], strides = [1, 1]} : vector<8x192xf32> to vector<8x128xf32>
    %483 = arith.addf %481, %482 : vector<8x128xf32>
    %484 = arith.negf %483 : vector<8x128xf32>
    %485 = math.exp %484 : vector<8x128xf32>
    %cst_116 = arith.constant 1.000000e+00 : f32
    %486 = vector.broadcast %cst_116 : f32 to vector<8x128xf32>
    %487 = arith.addf %486, %485 : vector<8x128xf32>
    %488 = arith.divf %486, %487 : vector<8x128xf32>
    %489 = vector.extract_strided_slice %488 {offsets = [0, 0], sizes = [8, 64], strides = [1, 1]} : vector<8x128xf32> to vector<8x64xf32>
    %490 = vector.extract_strided_slice %488 {offsets = [0, 64], sizes = [8, 64], strides = [1, 1]} : vector<8x128xf32> to vector<8x64xf32>
    %491 = vector.extract_strided_slice %476 {offsets = [0, 128], sizes = [8, 64], strides = [1, 1]} : vector<8x192xf32> to vector<8x64xf32>
    %492 = vector.extract_strided_slice %480 {offsets = [0, 128], sizes = [8, 64], strides = [1, 1]} : vector<8x192xf32> to vector<8x64xf32>
    %493 = arith.mulf %489, %492 : vector<8x64xf32>
    %494 = arith.addf %491, %493 : vector<8x64xf32>
    %495 = math.tanh %494 : vector<8x64xf32>
    %cst_117 = arith.constant 1.000000e+00 : f32
    %496 = vector.broadcast %cst_117 : f32 to vector<8x64xf32>
    %497 = arith.subf %496, %490 : vector<8x64xf32>
    %498 = arith.mulf %497, %495 : vector<8x64xf32>
    %499 = arith.mulf %490, %473 : vector<8x64xf32>
    %500 = arith.addf %498, %499 : vector<8x64xf32>
    %c15_i32_118 = arith.constant 15 : i32
    %501 = arith.index_cast %c15_i32_118 : i32 to index
    %c0_119 = arith.constant 0 : index
    %c0_120 = arith.constant 0 : index
    %502 = vector.load %arg14[%501, %c0_119, %c0_120] : memref<16x8x192xf32, #tpu.memory_space<vmem>>, vector<1x8x192xf32>
    %503 = vector.shape_cast %502 : vector<1x8x192xf32> to vector<8x192xf32>
    %504 = arith.truncf %500 : vector<8x64xf32> to vector<8x64xbf16>
    %cst_121 = arith.constant dense<0.000000e+00> : vector<8x192xf32>
    %505 = tpu.matmul %504, %93, %cst_121 {dimension_numbers = #tpu.dot_dimension_numbers<[1], [0], [0], [1], [0, 0, 1, 1], [], []>} : vector<8x64xbf16>, vector<64x192xbf16>, vector<8x192xf32> -> vector<8x192xf32>
    %506 = vector.broadcast %94 : vector<1x192xf32> to vector<8x192xf32>
    %507 = arith.addf %505, %506 : vector<8x192xf32>
    %508 = vector.extract_strided_slice %503 {offsets = [0, 0], sizes = [8, 128], strides = [1, 1]} : vector<8x192xf32> to vector<8x128xf32>
    %509 = vector.extract_strided_slice %507 {offsets = [0, 0], sizes = [8, 128], strides = [1, 1]} : vector<8x192xf32> to vector<8x128xf32>
    %510 = arith.addf %508, %509 : vector<8x128xf32>
    %511 = arith.negf %510 : vector<8x128xf32>
    %512 = math.exp %511 : vector<8x128xf32>
    %cst_122 = arith.constant 1.000000e+00 : f32
    %513 = vector.broadcast %cst_122 : f32 to vector<8x128xf32>
    %514 = arith.addf %513, %512 : vector<8x128xf32>
    %515 = arith.divf %513, %514 : vector<8x128xf32>
    %516 = vector.extract_strided_slice %515 {offsets = [0, 0], sizes = [8, 64], strides = [1, 1]} : vector<8x128xf32> to vector<8x64xf32>
    %517 = vector.extract_strided_slice %515 {offsets = [0, 64], sizes = [8, 64], strides = [1, 1]} : vector<8x128xf32> to vector<8x64xf32>
    %518 = vector.extract_strided_slice %503 {offsets = [0, 128], sizes = [8, 64], strides = [1, 1]} : vector<8x192xf32> to vector<8x64xf32>
    %519 = vector.extract_strided_slice %507 {offsets = [0, 128], sizes = [8, 64], strides = [1, 1]} : vector<8x192xf32> to vector<8x64xf32>
    %520 = arith.mulf %516, %519 : vector<8x64xf32>
    %521 = arith.addf %518, %520 : vector<8x64xf32>
    %522 = math.tanh %521 : vector<8x64xf32>
    %cst_123 = arith.constant 1.000000e+00 : f32
    %523 = vector.broadcast %cst_123 : f32 to vector<8x64xf32>
    %524 = arith.subf %523, %517 : vector<8x64xf32>
    %525 = arith.mulf %524, %522 : vector<8x64xf32>
    %526 = arith.mulf %517, %500 : vector<8x64xf32>
    %527 = arith.addf %525, %526 : vector<8x64xf32>
    %c16_i32_124 = arith.constant 16 : i32
    %528 = arith.truncf %527 : vector<8x64xf32> to vector<8x64xbf16>
    %c0_125 = arith.constant 0 : index
    %c0_126 = arith.constant 0 : index
    %529 = vector.load %arg11[%c0_125, %c0_126] : memref<64x3xbf16, #tpu.memory_space<vmem>>, vector<64x3xbf16>
    %cst_127 = arith.constant dense<0.000000e+00> : vector<8x3xf32>
    %530 = tpu.matmul %528, %529, %cst_127 {dimension_numbers = #tpu.dot_dimension_numbers<[1], [0], [0], [1], [0, 0, 1, 1], [], []>} : vector<8x64xbf16>, vector<64x3xbf16>, vector<8x3xf32> -> vector<8x3xf32>
    %c0_128 = arith.constant 0 : index
    %c0_129 = arith.constant 0 : index
    %531 = vector.load %arg12[%c0_128, %c0_129] : memref<1x3xf32, #tpu.memory_space<vmem>>, vector<1x3xf32>
    %532 = vector.broadcast %531 : vector<1x3xf32> to vector<8x3xf32>
    %533 = arith.addf %530, %532 : vector<8x3xf32>
    %c0_130 = arith.constant 0 : index
    %c0_131 = arith.constant 0 : index
    %534 = vector.load %arg13[%c0_130, %c0_131] : memref<8x3xf32, #tpu.memory_space<vmem>>, vector<8x3xf32>
    tpu.vector_store %arg13[%c0_130, %c0_131], %533 {strides = array<i32>} : memref<8x3xf32, #tpu.memory_space<vmem>>, vector<8x3xf32>,
    return
  }
  func.func @transform_0(%arg0: i32) -> (i32, i32, i32) {
    %c0_i32 = arith.constant 0 : i32
    %c0_i32_0 = arith.constant 0 : i32
    %c0_i32_1 = arith.constant 0 : i32
    return %c0_i32, %arg0, %c0_i32_0 : i32, i32, i32
  }
  func.func @transform_1(%arg0: i32) -> (i32, i32) {
    %c0_i32 = arith.constant 0 : i32
    %c0_i32_0 = arith.constant 0 : i32
    %c0_i32_1 = arith.constant 0 : i32
    return %c0_i32, %c0_i32_0 : i32, i32
  }
  func.func @transform_2(%arg0: i32) -> (i32, i32) {
    %c0_i32 = arith.constant 0 : i32
    %c0_i32_0 = arith.constant 0 : i32
    %c0_i32_1 = arith.constant 0 : i32
    return %c0_i32, %c0_i32_0 : i32, i32
  }
  func.func @transform_3(%arg0: i32) -> (i32, i32) {
    %c0_i32 = arith.constant 0 : i32
    %c0_i32_0 = arith.constant 0 : i32
    %c0_i32_1 = arith.constant 0 : i32
    return %c0_i32, %c0_i32_0 : i32, i32
  }
  func.func @transform_4(%arg0: i32) -> (i32, i32) {
    %c0_i32 = arith.constant 0 : i32
    %c0_i32_0 = arith.constant 0 : i32
    %c0_i32_1 = arith.constant 0 : i32
    return %c0_i32, %c0_i32_0 : i32, i32
  }
  func.func @transform_5(%arg0: i32) -> (i32, i32) {
    %c0_i32 = arith.constant 0 : i32
    %c0_i32_0 = arith.constant 0 : i32
    %c0_i32_1 = arith.constant 0 : i32
    return %c0_i32, %c0_i32_0 : i32, i32
  }
  func.func @transform_6(%arg0: i32) -> (i32, i32) {
    %c0_i32 = arith.constant 0 : i32
    %c0_i32_0 = arith.constant 0 : i32
    %c0_i32_1 = arith.constant 0 : i32
    return %c0_i32, %c0_i32_0 : i32, i32
  }
  func.func @transform_7(%arg0: i32) -> (i32, i32) {
    %c0_i32 = arith.constant 0 : i32
    %c0_i32_0 = arith.constant 0 : i32
    %c0_i32_1 = arith.constant 0 : i32
    return %c0_i32, %c0_i32_0 : i32, i32
  }
  func.func @transform_8(%arg0: i32) -> (i32, i32) {
    %c0_i32 = arith.constant 0 : i32
    %c0_i32_0 = arith.constant 0 : i32
    %c0_i32_1 = arith.constant 0 : i32
    return %c0_i32, %c0_i32_0 : i32, i32
  }
  func.func @transform_9(%arg0: i32) -> (i32, i32) {
    %c0_i32 = arith.constant 0 : i32
    %c0_i32_0 = arith.constant 0 : i32
    %c0_i32_1 = arith.constant 0 : i32
    return %c0_i32, %c0_i32_0 : i32, i32
  }
  func.func @transform_10(%arg0: i32) -> (i32, i32) {
    %c0_i32 = arith.constant 0 : i32
    %c0_i32_0 = arith.constant 0 : i32
    %c0_i32_1 = arith.constant 0 : i32
    return %c0_i32, %c0_i32_0 : i32, i32
  }
  func.func @transform_11(%arg0: i32) -> (i32, i32) {
    %c0_i32 = arith.constant 0 : i32
    %c0_i32_0 = arith.constant 0 : i32
    %c0_i32_1 = arith.constant 0 : i32
    return %c0_i32, %c0_i32_0 : i32, i32
  }
  func.func @transform_12(%arg0: i32) -> (i32, i32) {
    %c0_i32 = arith.constant 0 : i32
    %c0_i32_0 = arith.constant 0 : i32
    return %arg0, %c0_i32 : i32, i32
  }
}

</mosaic_0001>

<llo_original>
// kernel: hybrid_tcn_gru_forward.1
$region0: #{hybrid_tcn_gru_forward.1}
  #allocation0 [shape = 'u32[]', space=smem, size = 0x4, offset = 0x4, fixed_abs, tag = 'smem constant byte address 0x4 - core index']
  #allocation1 [shape = 'u32[72,128]{1,0:T(1,128)}', space=vmem, size = 0x9000, scoped, tag = 'internal scratch']
  #allocation2 [shape = 'f32[16,8,192]{2,1,0:T(8,128)}', space=vmem, size = 0x20000, scoped, tag = 'scratch operand']
  %s0 = inlined_call_operand.vmem [shape: f32[16,8,4], index: 0, kind: input, shape index: {}]
  %s1 = inlined_call_operand.vmem [shape: bf16[12,64], index: 1, kind: input, shape index: {}]
  %s2 = inlined_call_operand.vmem [shape: bf16[192,64], index: 2, kind: input, shape index: {}]
  %s3 = inlined_call_operand.vmem [shape: bf16[192,64], index: 3, kind: input, shape index: {}]
  %s4 = inlined_call_operand.vmem [shape: f32[3,64], index: 4, kind: input, shape index: {}]
  %s5 = inlined_call_operand.vmem [shape: f32[3,64], index: 5, kind: input, shape index: {}]
  %s6 = inlined_call_operand.vmem [shape: bf16[64,192], index: 6, kind: input, shape index: {}]
  %s7 = inlined_call_operand.vmem [shape: bf16[64,192], index: 7, kind: input, shape index: {}]
  %s8 = inlined_call_operand.vmem [shape: f32[1,192], index: 8, kind: input, shape index: {}]
  %s9 = inlined_call_operand.vmem [shape: f32[1,192], index: 9, kind: input, shape index: {}]
  %s10 = inlined_call_operand.vmem [shape: bf16[64,3], index: 10, kind: input, shape index: {}]
  %s11 = inlined_call_operand.vmem [shape: f32[1,3], index: 11, kind: input, shape index: {}]
  %s12 = inlined_call_operand.vmem [shape: f32[8,3], index: 12, kind: output, shape index: {}]
  %s13 = sld [smem:[#allocation0]]
  $region58: #{hybrid_tcn_gru_forward.1} parent=0
    _
  %s15 = ssub.s32 1, %s13
  %s16 = scalar_select 0, %s15, %s13
  // Predicated region
  $region2: #{hybrid_tcn_gru_forward.1} parent=0 // pred_check
    _
  $region3: #{hybrid_tcn_gru_forward.1} parent=0 // pred_check_branch
    %18 = sbr.rel (0) target = $region5
  $region4: #{hybrid_tcn_gru_forward.1} parent=0 // pred_region
    _
  $region5: #{hybrid_tcn_gru_forward.1} parent=0 // pred_fallthru
    _
  // Predicated region
  $region6: #{hybrid_tcn_gru_forward.1} parent=0 // pred_check
    _
  $region7: #{hybrid_tcn_gru_forward.1} parent=0 // pred_check_branch
    %20 = sbr.rel (0) target = $region9
  $region8: #{hybrid_tcn_gru_forward.1} parent=0 // pred_region
    _
  $region9: #{hybrid_tcn_gru_forward.1} parent=0 // pred_fallthru
    _
  // Predicated region
  $region10: #{hybrid_tcn_gru_forward.1} parent=0 // pred_check
    _
  $region11: #{hybrid_tcn_gru_forward.1} parent=0 // pred_check_branch
    %22 = sbr.rel (0) target = $region13
  $region12: #{hybrid_tcn_gru_forward.1} parent=0 // pred_region
    _
  $region13: #{hybrid_tcn_gru_forward.1} parent=0 // pred_fallthru
    _
  // Predicated region
  $region14: #{hybrid_tcn_gru_forward.1} parent=0 // pred_check
    _
  $region15: #{hybrid_tcn_gru_forward.1} parent=0 // pred_check_branch
    %24 = sbr.rel (0) target = $region17
  $region16: #{hybrid_tcn_gru_forward.1} parent=0 // pred_region
    _
  $region17: #{hybrid_tcn_gru_forward.1} parent=0 // pred_fallthru
    _
  // Predicated region
  $region18: #{hybrid_tcn_gru_forward.1} parent=0 // pred_check
    _
  $region19: #{hybrid_tcn_gru_forward.1} parent=0 // pred_check_branch
    %26 = sbr.rel (0) target = $region21
  $region20: #{hybrid_tcn_gru_forward.1} parent=0 // pred_region
    _
  $region21: #{hybrid_tcn_gru_forward.1} parent=0 // pred_fallthru
    _
  // Predicated region
  $region22: #{hybrid_tcn_gru_forward.1} parent=0 // pred_check
    _
  $region23: #{hybrid_tcn_gru_forward.1} parent=0 // pred_check_branch
    %28 = sbr.rel (0) target = $region25
  $region24: #{hybrid_tcn_gru_forward.1} parent=0 // pred_region
    _
  $region25: #{hybrid_tcn_gru_forward.1} parent=0 // pred_fallthru
    _
  // Predicated region
  $region26: #{hybrid_tcn_gru_forward.1} parent=0 // pred_check
    _
  $region27: #{hybrid_tcn_gru_forward.1} parent=0 // pred_check_branch
    %30 = sbr.rel (0) target = $region29
  $region28: #{hybrid_tcn_gru_forward.1} parent=0 // pred_region
    _
  $region29: #{hybrid_tcn_gru_forward.1} parent=0 // pred_fallthru
    _
  // Predicated region
  $region30: #{hybrid_tcn_gru_forward.1} parent=0 // pred_check
    _
  $region31: #{hybrid_tcn_gru_forward.1} parent=0 // pred_check_branch
    %32 = sbr.rel (0) target = $region33
  $region32: #{hybrid_tcn_gru_forward.1} parent=0 // pred_region
    _
  $region33: #{hybrid_tcn_gru_forward.1} parent=0 // pred_fallthru
    _
  // Predicated region
  $region34: #{hybrid_tcn_gru_forward.1} parent=0 // pred_check
    _
  $region35: #{hybrid_tcn_gru_forward.1} parent=0 // pred_check_branch
    %34 = sbr.rel (0) target = $region37
  $region36: #{hybrid_tcn_gru_forward.1} parent=0 // pred_region
    _
  $region37: #{hybrid_tcn_gru_forward.1} parent=0 // pred_fallthru
    _
  // Predicated region
  $region38: #{hybrid_tcn_gru_forward.1} parent=0 // pred_check
    _
  $region39: #{hybrid_tcn_gru_forward.1} parent=0 // pred_check_branch
    %36 = sbr.rel (0) target = $region41
  $region40: #{hybrid_tcn_gru_forward.1} parent=0 // pred_region
    _
  $region41: #{hybrid_tcn_gru_forward.1} parent=0 // pred_fallthru
    _
  // Predicated region
  $region42: #{hybrid_tcn_gru_forward.1} parent=0 // pred_check
    _
  $region43: #{hybrid_tcn_gru_forward.1} parent=0 // pred_check_branch
    %38 = sbr.rel (0) target = $region45
  $region44: #{hybrid_tcn_gru_forward.1} parent=0 // pred_region
    _
  $region45: #{hybrid_tcn_gru_forward.1} parent=0 // pred_fallthru
    _
  // Predicated region
  $region46: #{hybrid_tcn_gru_forward.1} parent=0 // pred_check
    _
  $region47: #{hybrid_tcn_gru_forward.1} parent=0 // pred_check_branch
    %40 = sbr.rel (0) target = $region49
  $region48: #{hybrid_tcn_gru_forward.1} parent=0 // pred_region
    _
  $region49: #{hybrid_tcn_gru_forward.1} parent=0 // pred_fallthru
    _
  %v42 = vlaneseq
  %v43 = vshrl.u32 %v42, 7
  %v44 = vadd.s32 %v43, 8
  %v45 = vadd.s32 %v43, 16
  %v46 = vadd.s32 %v43, 24
  %v47 = vadd.s32 %v43, 32
  %v48 = vadd.s32 %v43, 40
  %v49 = vadd.s32 %v43, 48
  %v50 = vadd.s32 %v43, 56
  %v51 = vadd.s32 %v43, 64
  %v52 = vadd.s32 %v43, 72
  %v53 = vadd.s32 %v43, 80
  %v54 = vadd.s32 %v43, 88
  %v55 = vadd.s32 %v43, 96
  %v56 = vadd.s32 %v43, 104
  %v57 = vadd.s32 %v43, 112
  %v58 = vadd.s32 %v43, 120
  %v59 = vshra.s32 %v43, 3
  %v60 = vshra.s32 %v44, 3
  %v61 = vshra.s32 %v45, 3
  %v62 = vshra.s32 %v46, 3
  %v63 = vshra.s32 %v47, 3
  %v64 = vshra.s32 %v48, 3
  %v65 = vshra.s32 %v49, 3
  %v66 = vshra.s32 %v50, 3
  %v67 = vshra.s32 %v51, 3
  %v68 = vshra.s32 %v52, 3
  %v69 = vshra.s32 %v53, 3
  %v70 = vshra.s32 %v54, 3
  %v71 = vshra.s32 %v55, 3
  %v72 = vshra.s32 %v56, 3
  %v73 = vshra.s32 %v57, 3
  %v74 = vshra.s32 %v58, 3
  %v75 = vld [vmem:[%s4] sm:$0x7]
  %v76 = vld [vmem:[%s5] sm:$0x7]
  %v77 = vld [vmem:[%s0] sm:$0xff]
  %v78 = vld [vmem:[%s0 + $0x8] sm:$0xff]
  %v79 = vld [vmem:[%s0 + $0x10] sm:$0xff]
  %v80 = vld [vmem:[%s0 + $0x18] sm:$0xff]
  %v81 = vld [vmem:[%s0 + $0x20] sm:$0xff]
  %v82 = vld [vmem:[%s0 + $0x28] sm:$0xff]
  %v83 = vld [vmem:[%s0 + $0x30] sm:$0xff]
  %v84 = vld [vmem:[%s0 + $0x38] sm:$0xff]
  %v85 = vld [vmem:[%s0 + $0x40] sm:$0xff]
  %v86 = vld [vmem:[%s0 + $0x48] sm:$0xff]
  %v87 = vld [vmem:[%s0 + $0x50] sm:$0xff]
  %v88 = vld [vmem:[%s0 + $0x58] sm:$0xff]
  %v89 = vld [vmem:[%s0 + $0x60] sm:$0xff]
  %v90 = vld [vmem:[%s0 + $0x68] sm:$0xff]
  %v91 = vld [vmem:[%s0 + $0x70] sm:$0xff]
  %v92 = vld [vmem:[%s0 + $0x78] sm:$0xff]
  %vm93 = vcmp.ge.s32.totalorder %v59, 1
  %vm94 = vcmp.ge.s32.totalorder %v60, 1
  %vm95 = vcmp.ge.s32.totalorder %v61, 1
  %vm96 = vcmp.ge.s32.totalorder %v62, 1
  %vm97 = vcmp.ge.s32.totalorder %v63, 1
  %vm98 = vcmp.ge.s32.totalorder %v64, 1
  %vm99 = vcmp.ge.s32.totalorder %v65, 1
  %vm100 = vcmp.ge.s32.totalorder %v66, 1
  %vm101 = vcmp.ge.s32.totalorder %v67, 1
  %vm102 = vcmp.ge.s32.totalorder %v68, 1
  %vm103 = vcmp.ge.s32.totalorder %v69, 1
  %vm104 = vcmp.ge.s32.totalorder %v70, 1
  %vm105 = vcmp.ge.s32.totalorder %v71, 1
  %vm106 = vcmp.ge.s32.totalorder %v72, 1
  %vm107 = vcmp.ge.s32.totalorder %v73, 1
  %vm108 = vcmp.ge.s32.totalorder %v74, 1
  %v109 = vsel %vm93, 1, 0
  %v110 = vsel %vm94, 1, 0
  %v111 = vsel %vm95, 1, 0
  %v112 = vsel %vm96, 1, 0
  %v113 = vsel %vm97, 1, 0
  %v114 = vsel %vm98, 1, 0
  %v115 = vsel %vm99, 1, 0
  %v116 = vsel %vm100, 1, 0
  %v117 = vsel %vm101, 1, 0
  %v118 = vsel %vm102, 1, 0
  %v119 = vsel %vm103, 1, 0
  %v120 = vsel %vm104, 1, 0
  %v121 = vsel %vm105, 1, 0
  %v122 = vsel %vm106, 1, 0
  %v123 = vsel %vm107, 1, 0
  %v124 = vsel %vm108, 1, 0
  %vm125 = vcmp.eq.s32.totalorder %v109, 1
  %vm126 = vcmp.eq.s32.totalorder %v110, 1
  %vm127 = vcmp.eq.s32.totalorder %v111, 1
  %vm128 = vcmp.eq.s32.totalorder %v112, 1
  %vm129 = vcmp.eq.s32.totalorder %v113, 1
  %vm130 = vcmp.eq.s32.totalorder %v114, 1
  %vm131 = vcmp.eq.s32.totalorder %v115, 1
  %vm132 = vcmp.eq.s32.totalorder %v116, 1
  %vm133 = vcmp.eq.s32.totalorder %v117, 1
  %vm134 = vcmp.eq.s32.totalorder %v118, 1
  %vm135 = vcmp.eq.s32.totalorder %v119, 1
  %vm136 = vcmp.eq.s32.totalorder %v120, 1
  %vm137 = vcmp.eq.s32.totalorder %v121, 1
  %vm138 = vcmp.eq.s32.totalorder %v122, 1
  %vm139 = vcmp.eq.s32.totalorder %v123, 1
  %vm140 = vcmp.eq.s32.totalorder %v124, 1
  %v141 = vsel %vm125, %v92, 0.0
  %v142 = vsel %vm126, %v77, 0.0
  %v143 = vsel %vm127, %v78, 0.0
  %v144 = vsel %vm128, %v79, 0.0
  %v145 = vsel %vm129, %v80, 0.0
  %v146 = vsel %vm130, %v81, 0.0
  %v147 = vsel %vm131, %v82, 0.0
  %v148 = vsel %vm132, %v83, 0.0
  %v149 = vsel %vm133, %v84, 0.0
  %v150 = vsel %vm134, %v85, 0.0
  %v151 = vsel %vm135, %v86, 0.0
  %v152 = vsel %vm136, %v87, 0.0
  %v153 = vsel %vm137, %v88, 0.0
  %v154 = vsel %vm138, %v89, 0.0
  %v155 = vsel %vm139, %v90, 0.0
  %v156 = vsel %vm140, %v91, 0.0
  %vm157 = vcmp.lt.s32.totalorder %v59, 15
  %vm158 = vcmp.lt.s32.totalorder %v60, 15
  %vm159 = vcmp.lt.s32.totalorder %v61, 15
  %vm160 = vcmp.lt.s32.totalorder %v62, 15
  %vm161 = vcmp.lt.s32.totalorder %v63, 15
  %vm162 = vcmp.lt.s32.totalorder %v64, 15
  %vm163 = vcmp.lt.s32.totalorder %v65, 15
  %vm164 = vcmp.lt.s32.totalorder %v66, 15
  %vm165 = vcmp.lt.s32.totalorder %v67, 15
  %vm166 = vcmp.lt.s32.totalorder %v68, 15
  %vm167 = vcmp.lt.s32.totalorder %v69, 15
  %vm168 = vcmp.lt.s32.totalorder %v70, 15
  %vm169 = vcmp.lt.s32.totalorder %v71, 15
  %vm170 = vcmp.lt.s32.totalorder %v72, 15
  %vm171 = vcmp.lt.s32.totalorder %v73, 15
  %vm172 = vcmp.lt.s32.totalorder %v74, 15
  %v173 = vsel %vm157, 1, 0
  %v174 = vsel %vm158, 1, 0
  %v175 = vsel %vm159, 1, 0
  %v176 = vsel %vm160, 1, 0
  %v177 = vsel %vm161, 1, 0
  %v178 = vsel %vm162, 1, 0
  %v179 = vsel %vm163, 1, 0
  %v180 = vsel %vm164, 1, 0
  %v181 = vsel %vm165, 1, 0
  %v182 = vsel %vm166, 1, 0
  %v183 = vsel %vm167, 1, 0
  %v184 = vsel %vm168, 1, 0
  %v185 = vsel %vm169, 1, 0
  %v186 = vsel %vm170, 1, 0
  %v187 = vsel %vm171, 1, 0
  %v188 = vsel %vm172, 1, 0
  %vm189 = vcmp.eq.s32.totalorder %v173, 1
  %vm190 = vcmp.eq.s32.totalorder %v174, 1
  %vm191 = vcmp.eq.s32.totalorder %v175, 1
  %vm192 = vcmp.eq.s32.totalorder %v176, 1
  %vm193 = vcmp.eq.s32.totalorder %v177, 1
  %vm194 = vcmp.eq.s32.totalorder %v178, 1
  %vm195 = vcmp.eq.s32.totalorder %v179, 1
  %vm196 = vcmp.eq.s32.totalorder %v180, 1
  %vm197 = vcmp.eq.s32.totalorder %v181, 1
  %vm198 = vcmp.eq.s32.totalorder %v182, 1
  %vm199 = vcmp.eq.s32.totalorder %v183, 1
  %vm200 = vcmp.eq.s32.totalorder %v184, 1
  %vm201 = vcmp.eq.s32.totalorder %v185, 1
  %vm202 = vcmp.eq.s32.totalorder %v186, 1
  %vm203 = vcmp.eq.s32.totalorder %v187, 1
  %vm204 = vcmp.eq.s32.totalorder %v188, 1
  %v205 = vsel %vm189, %v78, 0.0
  %v206 = vsel %vm190, %v79, 0.0
  %v207 = vsel %vm191, %v80, 0.0
  %v208 = vsel %vm192, %v81, 0.0
  %v209 = vsel %vm193, %v82, 0.0
  %v210 = vsel %vm194, %v83, 0.0
  %v211 = vsel %vm195, %v84, 0.0
  %v212 = vsel %vm196, %v85, 0.0
  %v213 = vsel %vm197, %v86, 0.0
  %v214 = vsel %vm198, %v87, 0.0
  %v215 = vsel %vm199, %v88, 0.0
  %v216 = vsel %vm200, %v89, 0.0
  %v217 = vsel %vm201, %v90, 0.0
  %v218 = vsel %vm202, %v91, 0.0
  %v219 = vsel %vm203, %v92, 0.0
  %v220 = vsel %vm204, %v77, 0.0
  %237 = vrot.lane.b32.xlu0 %v77, 4
  %v238 = vpop.permute.xlu0 %237
  %239 = vrot.lane.b32.xlu0 %v78, 4
  %v240 = vpop.permute.xlu0 %239
  %241 = vrot.lane.b32.xlu0 %v79, 4
  %v242 = vpop.permute.xlu0 %241
  %243 = vrot.lane.b32.xlu0 %v80, 4
  %v244 = vpop.permute.xlu0 %243
  %245 = vrot.lane.b32.xlu0 %v81, 4
  %v246 = vpop.permute.xlu0 %245
  %247 = vrot.lane.b32.xlu0 %v82, 4
  %v248 = vpop.permute.xlu0 %247
  %249 = vrot.lane.b32.xlu0 %v83, 4
  %v250 = vpop.permute.xlu0 %249
  %251 = vrot.lane.b32.xlu0 %v84, 4
  %v252 = vpop.permute.xlu0 %251
  %253 = vrot.lane.b32.xlu0 %v85, 4
  %v254 = vpop.permute.xlu0 %253
  %255 = vrot.lane.b32.xlu0 %v86, 4
  %v256 = vpop.permute.xlu0 %255
  %257 = vrot.lane.b32.xlu0 %v87, 4
  %v258 = vpop.permute.xlu0 %257
  %259 = vrot.lane.b32.xlu0 %v88, 4
  %v260 = vpop.permute.xlu0 %259
  %261 = vrot.lane.b32.xlu0 %v89, 4
  %v262 = vpop.permute.xlu0 %261
  %263 = vrot.lane.b32.xlu0 %v90, 4
  %v264 = vpop.permute.xlu0 %263
  %265 = vrot.lane.b32.xlu0 %v91, 4
  %v266 = vpop.permute.xlu0 %265
  %267 = vrot.lane.b32.xlu0 %v92, 4
  %v268 = vpop.permute.xlu0 %267
  %301 = vrot.lane.b32.xlu0 %v205, 8
  %v302 = vpop.permute.xlu0 %301
  %303 = vrot.lane.b32.xlu0 %v206, 8
  %v304 = vpop.permute.xlu0 %303
  %305 = vrot.lane.b32.xlu0 %v207, 8
  %v306 = vpop.permute.xlu0 %305
  %307 = vrot.lane.b32.xlu0 %v208, 8
  %v308 = vpop.permute.xlu0 %307
  %309 = vrot.lane.b32.xlu0 %v209, 8
  %v310 = vpop.permute.xlu0 %309
  %311 = vrot.lane.b32.xlu0 %v210, 8
  %v312 = vpop.permute.xlu0 %311
  %313 = vrot.lane.b32.xlu0 %v211, 8
  %v314 = vpop.permute.xlu0 %313
  %315 = vrot.lane.b32.xlu0 %v212, 8
  %v316 = vpop.permute.xlu0 %315
  %317 = vrot.lane.b32.xlu0 %v213, 8
  %v318 = vpop.permute.xlu0 %317
  %319 = vrot.lane.b32.xlu0 %v214, 8
  %v320 = vpop.permute.xlu0 %319
  %321 = vrot.lane.b32.xlu0 %v215, 8
  %v322 = vpop.permute.xlu0 %321
  %323 = vrot.lane.b32.xlu0 %v216, 8
  %v324 = vpop.permute.xlu0 %323
  %325 = vrot.lane.b32.xlu0 %v217, 8
  %v326 = vpop.permute.xlu0 %325
  %327 = vrot.lane.b32.xlu0 %v218, 8
  %v328 = vpop.permute.xlu0 %327
  %329 = vrot.lane.b32.xlu0 %v219, 8
  %v330 = vpop.permute.xlu0 %329
  %331 = vrot.lane.b32.xlu0 %v220, 8
  %v332 = vpop.permute.xlu0 %331
  %vm349 = vcmask 31744
  %v350 = vsel %vm349, %v141, %v238
  %v351 = vsel %vm349, %v142, %v240
  %v352 = vsel %vm349, %v143, %v242
  %v353 = vsel %vm349, %v144, %v244
  %v354 = vsel %vm349, %v145, %v246
  %v355 = vsel %vm349, %v146, %v248
  %v356 = vsel %vm349, %v147, %v250
  %v357 = vsel %vm349, %v148, %v252
  %v358 = vsel %vm349, %v149, %v254
  %v359 = vsel %vm349, %v150, %v256
  %v360 = vsel %vm349, %v151, %v258
  %v361 = vsel %vm349, %v152, %v260
  %v362 = vsel %vm349, %v153, %v262
  %v363 = vsel %vm349, %v154, %v264
  %v364 = vsel %vm349, %v155, %v266
  %v365 = vsel %vm349, %v156, %v268
  %vm366 = vcmask 64512
  %v367 = vsel %vm366, %v350, %v302
  %v368 = vsel %vm366, %v351, %v304
  %v369 = vsel %vm366, %v352, %v306
  %v370 = vsel %vm366, %v353, %v308
  %v371 = vsel %vm366, %v354, %v310
  %v372 = vsel %vm366, %v355, %v312
  %v373 = vsel %vm366, %v356, %v314
  %v374 = vsel %vm366, %v357, %v316
  %v375 = vsel %vm366, %v358, %v318
  %v376 = vsel %vm366, %v359, %v320
  %v377 = vsel %vm366, %v360, %v322
  %v378 = vsel %vm366, %v361, %v324
  %v379 = vsel %vm366, %v362, %v326
  %v380 = vsel %vm366, %v363, %v328
  %v381 = vsel %vm366, %v364, %v330
  %v382 = vsel %vm366, %v365, %v332
  %v383 = vpack.c.bf16 %v368, %v367
  %v384 = vpack.c.bf16 %v370, %v369
  %v385 = vpack.c.bf16 %v372, %v371
  %v386 = vpack.c.bf16 %v374, %v373
  %v387 = vpack.c.bf16 %v376, %v375
  %v388 = vpack.c.bf16 %v378, %v377
  %v389 = vpack.c.bf16 %v380, %v379
  %v390 = vpack.c.bf16 %v382, %v381
  %v391 = vld [vmem:[%s1] sm:$0xf]
  %v392 = vld [vmem:[%s1 + $0x4] sm:$0x3]
  %v395 = vunpack.c.l.b16 %v391
  %v396 = vunpack.c.l.b16 %v392
  %v397 = vpack.c.b16 %v396, %v395
  %vm398 = vcmask 97280
  %v400 = vsel %vm398, %v383, 0
  %v403 = vsel %vm398, %v384, 0
  %v406 = vsel %vm398, %v385, 0
  %v409 = vsel %vm398, %v386, 0
  %v412 = vsel %vm398, %v387, 0
  %v415 = vsel %vm398, %v388, 0
  %v418 = vsel %vm398, %v389, 0
  %v421 = vsel %vm398, %v390, 0
  %vm423 = vcmask 1045504
  %v425 = vsel %vm423, %v397, 0
  %427 = vmatpush.bf16.msra.mxu0 0
  %428 = vmatpush.bf16.msra.mxu0 0
  %429 = vmatpush.bf16.msra.mxu0 0
  %430 = vmatpush.bf16.msra.mxu0 0
  %431 = vmatpush.bf16.msra.mxu0 0
  %432 = vmatpush.bf16.msra.mxu0 0
  %433 = vmatpush.bf16.msra.mxu0 0
  %434 = vmatpush.bf16.msra.mxu0 %v425
  %435 = vmatmul.bf16.gmra.mxu0 %v400
  %v436 = vpop.f32.mrf.mxu0
  %v437 = vadd.f32 0.0, %v436
  %v438 = vpop.f32.mrf.mxu0
  %v439 = vadd.f32 0.0, %v438
  %440 = vmatmul.bf16.gmra.mxu0 %v403
  %v441 = vpop.f32.mrf.mxu0
  %v442 = vadd.f32 0.0, %v441
  %v443 = vpop.f32.mrf.mxu0
  %v444 = vadd.f32 0.0, %v443
  %445 = vmatmul.bf16.gmra.mxu0 %v406
  %v446 = vpop.f32.mrf.mxu0
  %v447 = vadd.f32 0.0, %v446
  %v448 = vpop.f32.mrf.mxu0
  %v449 = vadd.f32 0.0, %v448
  %450 = vmatmul.bf16.gmra.mxu0 %v409
  %v451 = vpop.f32.mrf.mxu0
  %v452 = vadd.f32 0.0, %v451
  %v453 = vpop.f32.mrf.mxu0
  %v454 = vadd.f32 0.0, %v453
  %455 = vmatmul.bf16.gmra.mxu0 %v412
  %v456 = vpop.f32.mrf.mxu0
  %v457 = vadd.f32 0.0, %v456
  %v458 = vpop.f32.mrf.mxu0
  %v459 = vadd.f32 0.0, %v458
  %460 = vmatmul.bf16.gmra.mxu0 %v415
  %v461 = vpop.f32.mrf.mxu0
  %v462 = vadd.f32 0.0, %v461
  %v463 = vpop.f32.mrf.mxu0
  %v464 = vadd.f32 0.0, %v463
  %465 = vmatmul.bf16.gmra.mxu0 %v418
  %v466 = vpop.f32.mrf.mxu0
  %v467 = vadd.f32 0.0, %v466
  %v468 = vpop.f32.mrf.mxu0
  %v469 = vadd.f32 0.0, %v468
  %470 = vmatmul.bf16.gmra.mxu0 %v421
  %v471 = vpop.f32.mrf.mxu0
  %v472 = vadd.f32 0.0, %v471
  %v473 = vpop.f32.mrf.mxu0
  %v474 = vadd.f32 0.0, %v473
  %475 = vdwg.mxu0
  %v476 = vperm.slane %v75, 0
  %v477 = vmul.f32 %v437, %v476
  %v478 = vmul.f32 %v439, %v476
  %v479 = vmul.f32 %v442, %v476
  %v480 = vmul.f32 %v444, %v476
  %v481 = vmul.f32 %v447, %v476
  %v482 = vmul.f32 %v449, %v476
  %v483 = vmul.f32 %v452, %v476
  %v484 = vmul.f32 %v454, %v476
  %v485 = vmul.f32 %v457, %v476
  %v486 = vmul.f32 %v459, %v476
  %v487 = vmul.f32 %v462, %v476
  %v488 = vmul.f32 %v464, %v476
  %v489 = vmul.f32 %v467, %v476
  %v490 = vmul.f32 %v469, %v476
  %v491 = vmul.f32 %v472, %v476
  %v492 = vmul.f32 %v474, %v476
  %v493 = vperm.slane %v76, 0
  %v494 = vadd.f32 %v477, %v493
  %v495 = vadd.f32 %v478, %v493
  %v496 = vadd.f32 %v479, %v493
  %v497 = vadd.f32 %v480, %v493
  %v498 = vadd.f32 %v481, %v493
  %v499 = vadd.f32 %v482, %v493
  %v500 = vadd.f32 %v483, %v493
  %v501 = vadd.f32 %v484, %v493
  %v502 = vadd.f32 %v485, %v493
  %v503 = vadd.f32 %v486, %v493
  %v504 = vadd.f32 %v487, %v493
  %v505 = vadd.f32 %v488, %v493
  %v506 = vadd.f32 %v489, %v493
  %v507 = vadd.f32 %v490, %v493
  %v508 = vadd.f32 %v491, %v493
  %v509 = vadd.f32 %v492, %v493
  %v510 = vmax.f32 %v494, 0.0
  %v511 = vmax.f32 %v495, 0.0
  %v512 = vmax.f32 %v496, 0.0
  %v513 = vmax.f32 %v497, 0.0
  %v514 = vmax.f32 %v498, 0.0
  %v515 = vmax.f32 %v499, 0.0
  %v516 = vmax.f32 %v500, 0.0
  %v517 = vmax.f32 %v501, 0.0
  %v518 = vmax.f32 %v502, 0.0
  %v519 = vmax.f32 %v503, 0.0
  %v520 = vmax.f32 %v504, 0.0
  %v521 = vmax.f32 %v505, 0.0
  %v522 = vmax.f32 %v506, 0.0
  %v523 = vmax.f32 %v507, 0.0
  %v524 = vmax.f32 %v508, 0.0
  %v525 = vmax.f32 %v509, 0.0
  %vm526 = vcmp.ge.s32.totalorder %v59, 2
  %vm527 = vcmp.ge.s32.totalorder %v60, 2
  %vm528 = vcmp.ge.s32.totalorder %v61, 2
  %vm529 = vcmp.ge.s32.totalorder %v62, 2
  %vm530 = vcmp.ge.s32.totalorder %v63, 2
  %vm531 = vcmp.ge.s32.totalorder %v64, 2
  %vm532 = vcmp.ge.s32.totalorder %v65, 2
  %vm533 = vcmp.ge.s32.totalorder %v66, 2
  %vm534 = vcmp.ge.s32.totalorder %v67, 2
  %vm535 = vcmp.ge.s32.totalorder %v68, 2
  %vm536 = vcmp.ge.s32.totalorder %v69, 2
  %vm537 = vcmp.ge.s32.totalorder %v70, 2
  %vm538 = vcmp.ge.s32.totalorder %v71, 2
  %vm539 = vcmp.ge.s32.totalorder %v72, 2
  %vm540 = vcmp.ge.s32.totalorder %v73, 2
  %vm541 = vcmp.ge.s32.totalorder %v74, 2
  %v542 = vsel %vm526, 1, 0
  %v543 = vsel %vm527, 1, 0
  %v544 = vsel %vm528, 1, 0
  %v545 = vsel %vm529, 1, 0
  %v546 = vsel %vm530, 1, 0
  %v547 = vsel %vm531, 1, 0
  %v548 = vsel %vm532, 1, 0
  %v549 = vsel %vm533, 1, 0
  %v550 = vsel %vm534, 1, 0
  %v551 = vsel %vm535, 1, 0
  %v552 = vsel %vm536, 1, 0
  %v553 = vsel %vm537, 1, 0
  %v554 = vsel %vm538, 1, 0
  %v555 = vsel %vm539, 1, 0
  %v556 = vsel %vm540, 1, 0
  %v557 = vsel %vm541, 1, 0
  %vm558 = vcmp.eq.s32.totalorder %v542, 1
  %vm559 = vcmp.eq.s32.totalorder %v543, 1
  %vm560 = vcmp.eq.s32.totalorder %v544, 1
  %vm561 = vcmp.eq.s32.totalorder %v545, 1
  %vm562 = vcmp.eq.s32.totalorder %v546, 1
  %vm563 = vcmp.eq.s32.totalorder %v547, 1
  %vm564 = vcmp.eq.s32.totalorder %v548, 1
  %vm565 = vcmp.eq.s32.totalorder %v549, 1
  %vm566 = vcmp.eq.s32.totalorder %v550, 1
  %vm567 = vcmp.eq.s32.totalorder %v551, 1
  %vm568 = vcmp.eq.s32.totalorder %v552, 1
  %vm569 = vcmp.eq.s32.totalorder %v553, 1
  %vm570 = vcmp.eq.s32.totalorder %v554, 1
  %vm571 = vcmp.eq.s32.totalorder %v555, 1
  %vm572 = vcmp.eq.s32.totalorder %v556, 1
  %vm573 = vcmp.eq.s32.totalorder %v557, 1
  %v574 = vsel %vm558, %v524, 0.0
  %v575 = vsel %vm559, %v525, 0.0
  %v576 = vsel %vm560, %v510, 0.0
  %v577 = vsel %vm561, %v511, 0.0
  %v578 = vsel %vm562, %v512, 0.0
  %v579 = vsel %vm563, %v513, 0.0
  %v580 = vsel %vm564, %v514, 0.0
  %v581 = vsel %vm565, %v515, 0.0
  %v582 = vsel %vm566, %v516, 0.0
  %v583 = vsel %vm567, %v517, 0.0
  %v584 = vsel %vm568, %v518, 0.0
  %v585 = vsel %vm569, %v519, 0.0
  %v586 = vsel %vm570, %v520, 0.0
  %v587 = vsel %vm571, %v521, 0.0
  %v588 = vsel %vm572, %v522, 0.0
  %v589 = vsel %vm573, %v523, 0.0
  %vm590 = vcmp.lt.s32.totalorder %v59, 14
  %vm591 = vcmp.lt.s32.totalorder %v60, 14
  %vm592 = vcmp.lt.s32.totalorder %v61, 14
  %vm593 = vcmp.lt.s32.totalorder %v62, 14
  %vm594 = vcmp.lt.s32.totalorder %v63, 14
  %vm595 = vcmp.lt.s32.totalorder %v64, 14
  %vm596 = vcmp.lt.s32.totalorder %v65, 14
  %vm597 = vcmp.lt.s32.totalorder %v66, 14
  %vm598 = vcmp.lt.s32.totalorder %v67, 14
  %vm599 = vcmp.lt.s32.totalorder %v68, 14
  %vm600 = vcmp.lt.s32.totalorder %v69, 14
  %vm601 = vcmp.lt.s32.totalorder %v70, 14
  %vm602 = vcmp.lt.s32.totalorder %v71, 14
  %vm603 = vcmp.lt.s32.totalorder %v72, 14
  %vm604 = vcmp.lt.s32.totalorder %v73, 14
  %vm605 = vcmp.lt.s32.totalorder %v74, 14
  %v606 = vsel %vm590, 1, 0
  %v607 = vsel %vm591, 1, 0
  %v608 = vsel %vm592, 1, 0
  %v609 = vsel %vm593, 1, 0
  %v610 = vsel %vm594, 1, 0
  %v611 = vsel %vm595, 1, 0
  %v612 = vsel %vm596, 1, 0
  %v613 = vsel %vm597, 1, 0
  %v614 = vsel %vm598, 1, 0
  %v615 = vsel %vm599, 1, 0
  %v616 = vsel %vm600, 1, 0
  %v617 = vsel %vm601, 1, 0
  %v618 = vsel %vm602, 1, 0
  %v619 = vsel %vm603, 1, 0
  %v620 = vsel %vm604, 1, 0
  %v621 = vsel %vm605, 1, 0
  %vm622 = vcmp.eq.s32.totalorder %v606, 1
  %vm623 = vcmp.eq.s32.totalorder %v607, 1
  %vm624 = vcmp.eq.s32.totalorder %v608, 1
  %vm625 = vcmp.eq.s32.totalorder %v609, 1
  %vm626 = vcmp.eq.s32.totalorder %v610, 1
  %vm627 = vcmp.eq.s32.totalorder %v611, 1
  %vm628 = vcmp.eq.s32.totalorder %v612, 1
  %vm629 = vcmp.eq.s32.totalorder %v613, 1
  %vm630 = vcmp.eq.s32.totalorder %v614, 1
  %vm631 = vcmp.eq.s32.totalorder %v615, 1
  %vm632 = vcmp.eq.s32.totalorder %v616, 1
  %vm633 = vcmp.eq.s32.totalorder %v617, 1
  %vm634 = vcmp.eq.s32.totalorder %v618, 1
  %vm635 = vcmp.eq.s32.totalorder %v619, 1
  %vm636 = vcmp.eq.s32.totalorder %v620, 1
  %vm637 = vcmp.eq.s32.totalorder %v621, 1
  %v638 = vsel %vm622, %v512, 0.0
  %v639 = vsel %vm623, %v513, 0.0
  %v640 = vsel %vm624, %v514, 0.0
  %v641 = vsel %vm625, %v515, 0.0
  %v642 = vsel %vm626, %v516, 0.0
  %v643 = vsel %vm627, %v517, 0.0
  %v644 = vsel %vm628, %v518, 0.0
  %v645 = vsel %vm629, %v519, 0.0
  %v646 = vsel %vm630, %v520, 0.0
  %v647 = vsel %vm631, %v521, 0.0
  %v648 = vsel %vm632, %v522, 0.0
  %v649 = vsel %vm633, %v523, 0.0
  %v650 = vsel %vm634, %v524, 0.0
  %v651 = vsel %vm635, %v525, 0.0
  %v652 = vsel %vm636, %v510, 0.0
  %v653 = vsel %vm637, %v511, 0.0
  %670 = vrot.lane.b32.xlu0 %v510, 64
  %v671 = vpop.permute.xlu0 %670
  %672 = vrot.lane.b32.xlu0 %v511, 64
  %v673 = vpop.permute.xlu0 %672
  %674 = vrot.lane.b32.xlu0 %v512, 64
  %v675 = vpop.permute.xlu0 %674
  %676 = vrot.lane.b32.xlu0 %v513, 64
  %v677 = vpop.permute.xlu0 %676
  %678 = vrot.lane.b32.xlu0 %v514, 64
  %v679 = vpop.permute.xlu0 %678
  %680 = vrot.lane.b32.xlu0 %v515, 64
  %v681 = vpop.permute.xlu0 %680
  %682 = vrot.lane.b32.xlu0 %v516, 64
  %v683 = vpop.permute.xlu0 %682
  %684 = vrot.lane.b32.xlu0 %v517, 64
  %v685 = vpop.permute.xlu0 %684
  %686 = vrot.lane.b32.xlu0 %v518, 64
  %v687 = vpop.permute.xlu0 %686
  %688 = vrot.lane.b32.xlu0 %v519, 64
  %v689 = vpop.permute.xlu0 %688
  %690 = vrot.lane.b32.xlu0 %v520, 64
  %v691 = vpop.permute.xlu0 %690
  %692 = vrot.lane.b32.xlu0 %v521, 64
  %v693 = vpop.permute.xlu0 %692
  %694 = vrot.lane.b32.xlu0 %v522, 64
  %v695 = vpop.permute.xlu0 %694
  %696 = vrot.lane.b32.xlu0 %v523, 64
  %v697 = vpop.permute.xlu0 %696
  %698 = vrot.lane.b32.xlu0 %v524, 64
  %v699 = vpop.permute.xlu0 %698
  %700 = vrot.lane.b32.xlu0 %v525, 64
  %v701 = vpop.permute.xlu0 %700
  %vm718 = vcmask 523264
  %v719 = vsel %vm718, %v574, %v671
  %v720 = vsel %vm718, %v575, %v673
  %v721 = vsel %vm718, %v576, %v675
  %v722 = vsel %vm718, %v577, %v677
  %v723 = vsel %vm718, %v578, %v679
  %v724 = vsel %vm718, %v579, %v681
  %v725 = vsel %vm718, %v580, %v683
  %v726 = vsel %vm718, %v581, %v685
  %v727 = vsel %vm718, %v582, %v687
  %v728 = vsel %vm718, %v583, %v689
  %v729 = vsel %vm718, %v584, %v691
  %v730 = vsel %vm718, %v585, %v693
  %v731 = vsel %vm718, %v586, %v695
  %v732 = vsel %vm718, %v587, %v697
  %v733 = vsel %vm718, %v588, %v699
  %v734 = vsel %vm718, %v589, %v701
  %v735 = vpack.c.bf16 %v720, %v719
  %v736 = vpack.c.bf16 %v639, %v638
  %v737 = vpack.c.bf16 %v722, %v721
  %v738 = vpack.c.bf16 %v641, %v640
  %v739 = vpack.c.bf16 %v724, %v723
  %v740 = vpack.c.bf16 %v643, %v642
  %v741 = vpack.c.bf16 %v726, %v725
  %v742 = vpack.c.bf16 %v645, %v644
  %v743 = vpack.c.bf16 %v728, %v727
  %v744 = vpack.c.bf16 %v647, %v646
  %v745 = vpack.c.bf16 %v730, %v729
  %v746 = vpack.c.bf16 %v649, %v648
  %v747 = vpack.c.bf16 %v732, %v731
  %v748 = vpack.c.bf16 %v651, %v650
  %v749 = vpack.c.bf16 %v734, %v733
  %v750 = vpack.c.bf16 %v653, %v652
  %v751 = vld [vmem:[%s2] sm:$0xf]
  %v752 = vld [vmem:[%s2 + $0x4] sm:$0xf]
  %v753 = vld [vmem:[%s2 + $0x8] sm:$0xf]
  %v754 = vld [vmem:[%s2 + $0xc] sm:$0xf]
  %v755 = vld [vmem:[%s2 + $0x10] sm:$0xf]
  %v756 = vld [vmem:[%s2 + $0x14] sm:$0xf]
  %v757 = vld [vmem:[%s2 + $0x18] sm:$0xf]
  %v758 = vld [vmem:[%s2 + $0x1c] sm:$0xf]
  %v759 = vld [vmem:[%s2 + $0x20] sm:$0xf]
  %v760 = vld [vmem:[%s2 + $0x24] sm:$0xf]
  %v761 = vld [vmem:[%s2 + $0x28] sm:$0xf]
  %v762 = vld [vmem:[%s2 + $0x2c] sm:$0xf]
  %v763 = vld [vmem:[%s2 + $0x30] sm:$0xf]
  %v764 = vld [vmem:[%s2 + $0x34] sm:$0xf]
  %v765 = vld [vmem:[%s2 + $0x38] sm:$0xf]
  %v766 = vld [vmem:[%s2 + $0x3c] sm:$0xf]
  %v767 = vld [vmem:[%s2 + $0x40] sm:$0xf]
  %v768 = vld [vmem:[%s2 + $0x44] sm:$0xf]
  %v769 = vld [vmem:[%s2 + $0x48] sm:$0xf]
  %v770 = vld [vmem:[%s2 + $0x4c] sm:$0xf]
  %v771 = vld [vmem:[%s2 + $0x50] sm:$0xf]
  %v772 = vld [vmem:[%s2 + $0x54] sm:$0xf]
  %v773 = vld [vmem:[%s2 + $0x58] sm:$0xf]
  %v774 = vld [vmem:[%s2 + $0x5c] sm:$0xf]
  %v799 = vunpack.c.l.b16 %v751
  %v800 = vunpack.c.l.b16 %v752
  %v801 = vunpack.c.l.b16 %v753
  %v802 = vunpack.c.l.b16 %v754
  %v803 = vunpack.c.l.b16 %v755
  %v804 = vunpack.c.l.b16 %v756
  %v805 = vunpack.c.l.b16 %v757
  %v806 = vunpack.c.l.b16 %v758
  %v807 = vunpack.c.l.b16 %v759
  %v808 = vunpack.c.l.b16 %v760
  %v809 = vunpack.c.l.b16 %v761
  %v810 = vunpack.c.l.b16 %v762
  %v811 = vunpack.c.l.b16 %v763
  %v812 = vunpack.c.l.b16 %v764
  %v813 = vunpack.c.l.b16 %v765
  %v814 = vunpack.c.l.b16 %v766
  %v815 = vunpack.c.l.b16 %v767
  %v816 = vunpack.c.l.b16 %v768
  %v817 = vunpack.c.l.b16 %v769
  %v818 = vunpack.c.l.b16 %v770
  %v819 = vunpack.c.l.b16 %v771
  %v820 = vunpack.c.l.b16 %v772
  %v821 = vunpack.c.l.b16 %v773
  %v822 = vunpack.c.l.b16 %v774
  %v823 = vpack.c.b16 %v800, %v799
  %v824 = vpack.c.b16 %v802, %v801
  %v825 = vpack.c.b16 %v804, %v803
  %v826 = vpack.c.b16 %v806, %v805
  %v827 = vpack.c.b16 %v808, %v807
  %v828 = vpack.c.b16 %v810, %v809
  %v829 = vpack.c.b16 %v812, %v811
  %v830 = vpack.c.b16 %v814, %v813
  %v831 = vpack.c.b16 %v816, %v815
  %v832 = vpack.c.b16 %v818, %v817
  %v833 = vpack.c.b16 %v820, %v819
  %v834 = vpack.c.b16 %v822, %v821
  %v848 = vsel %vm718, %v736, 0
  %v851 = vsel %vm718, %v738, 0
  %v854 = vsel %vm718, %v740, 0
  %v857 = vsel %vm718, %v742, 0
  %v860 = vsel %vm718, %v744, 0
  %v863 = vsel %vm718, %v746, 0
  %v866 = vsel %vm718, %v748, 0
  %v869 = vsel %vm718, %v750, 0
  %871 = vmatpush.bf16.msra.mxu0 %v830
  %872 = vmatpush.bf16.msra.mxu0 %v829
  %873 = vmatpush.bf16.msra.mxu0 %v828
  %874 = vmatpush.bf16.msra.mxu0 %v827
  %875 = vmatpush.bf16.msra.mxu0 %v826
  %876 = vmatpush.bf16.msra.mxu0 %v825
  %877 = vmatpush.bf16.msra.mxu0 %v824
  %878 = vmatpush.bf16.msra.mxu0 %v823
  %879 = vmatmul.bf16.gmra.mxu0 %v735
  %v880 = vpop.f32.mrf.mxu0
  %v881 = vadd.f32 0.0, %v880
  %v882 = vpop.f32.mrf.mxu0
  %v883 = vadd.f32 0.0, %v882
  %884 = vmatmul.bf16.gmra.mxu0 %v737
  %v885 = vpop.f32.mrf.mxu0
  %v886 = vadd.f32 0.0, %v885
  %v887 = vpop.f32.mrf.mxu0
  %v888 = vadd.f32 0.0, %v887
  %889 = vmatmul.bf16.gmra.mxu0 %v739
  %v890 = vpop.f32.mrf.mxu0
  %v891 = vadd.f32 0.0, %v890
  %v892 = vpop.f32.mrf.mxu0
  %v893 = vadd.f32 0.0, %v892
  %894 = vmatmul.bf16.gmra.mxu0 %v741
  %v895 = vpop.f32.mrf.mxu0
  %v896 = vadd.f32 0.0, %v895
  %v897 = vpop.f32.mrf.mxu0
  %v898 = vadd.f32 0.0, %v897
  %899 = vmatmul.bf16.gmra.mxu0 %v743
  %v900 = vpop.f32.mrf.mxu0
  %v901 = vadd.f32 0.0, %v900
  %v902 = vpop.f32.mrf.mxu0
  %v903 = vadd.f32 0.0, %v902
  %904 = vmatmul.bf16.gmra.mxu0 %v745
  %v905 = vpop.f32.mrf.mxu0
  %v906 = vadd.f32 0.0, %v905
  %v907 = vpop.f32.mrf.mxu0
  %v908 = vadd.f32 0.0, %v907
  %909 = vmatmul.bf16.gmra.mxu0 %v747
  %v910 = vpop.f32.mrf.mxu0
  %v911 = vadd.f32 0.0, %v910
  %v912 = vpop.f32.mrf.mxu0
  %v913 = vadd.f32 0.0, %v912
  %914 = vmatmul.bf16.gmra.mxu0 %v749
  %v915 = vpop.f32.mrf.mxu0
  %v916 = vadd.f32 0.0, %v915
  %v917 = vpop.f32.mrf.mxu0
  %v918 = vadd.f32 0.0, %v917
  %919 = vdwg.mxu0
  %920 = vmatpush.bf16.msra.mxu0 0
  %921 = vmatpush.bf16.msra.mxu0 0
  %922 = vmatpush.bf16.msra.mxu0 0
  %923 = vmatpush.bf16.msra.mxu0 0
  %924 = vmatpush.bf16.msra.mxu0 %v834
  %925 = vmatpush.bf16.msra.mxu0 %v833
  %926 = vmatpush.bf16.msra.mxu0 %v832
  %927 = vmatpush.bf16.msra.mxu0 %v831
  %928 = vmatmul.bf16.gmra.mxu0 %v848
  %v929 = vpop.f32.mrf.mxu0
  %v930 = vadd.f32 %v881, %v929
  %v931 = vpop.f32.mrf.mxu0
  %v932 = vadd.f32 %v883, %v931
  %933 = vmatmul.bf16.gmra.mxu0 %v851
  %v934 = vpop.f32.mrf.mxu0
  %v935 = vadd.f32 %v886, %v934
  %v936 = vpop.f32.mrf.mxu0
  %v937 = vadd.f32 %v888, %v936
  %938 = vmatmul.bf16.gmra.mxu0 %v854
  %v939 = vpop.f32.mrf.mxu0
  %v940 = vadd.f32 %v891, %v939
  %v941 = vpop.f32.mrf.mxu0
  %v942 = vadd.f32 %v893, %v941
  %943 = vmatmul.bf16.gmra.mxu0 %v857
  %v944 = vpop.f32.mrf.mxu0
  %v945 = vadd.f32 %v896, %v944
  %v946 = vpop.f32.mrf.mxu0
  %v947 = vadd.f32 %v898, %v946
  %948 = vmatmul.bf16.gmra.mxu0 %v860
  %v949 = vpop.f32.mrf.mxu0
  %v950 = vadd.f32 %v901, %v949
  %v951 = vpop.f32.mrf.mxu0
  %v952 = vadd.f32 %v903, %v951
  %953 = vmatmul.bf16.gmra.mxu0 %v863
  %v954 = vpop.f32.mrf.mxu0
  %v955 = vadd.f32 %v906, %v954
  %v956 = vpop.f32.mrf.mxu0
  %v957 = vadd.f32 %v908, %v956
  %958 = vmatmul.bf16.gmra.mxu0 %v866
  %v959 = vpop.f32.mrf.mxu0
  %v960 = vadd.f32 %v911, %v959
  %v961 = vpop.f32.mrf.mxu0
  %v962 = vadd.f32 %v913, %v961
  %963 = vmatmul.bf16.gmra.mxu0 %v869
  %v964 = vpop.f32.mrf.mxu0
  %v965 = vadd.f32 %v916, %v964
  %v966 = vpop.f32.mrf.mxu0
  %v967 = vadd.f32 %v918, %v966
  %968 = vdwg.mxu0
  %v969 = vperm.slane %v75, 1
  %v970 = vmul.f32 %v930, %v969
  %v971 = vmul.f32 %v932, %v969
  %v972 = vmul.f32 %v935, %v969
  %v973 = vmul.f32 %v937, %v969
  %v974 = vmul.f32 %v940, %v969
  %v975 = vmul.f32 %v942, %v969
  %v976 = vmul.f32 %v945, %v969
  %v977 = vmul.f32 %v947, %v969
  %v978 = vmul.f32 %v950, %v969
  %v979 = vmul.f32 %v952, %v969
  %v980 = vmul.f32 %v955, %v969
  %v981 = vmul.f32 %v957, %v969
  %v982 = vmul.f32 %v960, %v969
  %v983 = vmul.f32 %v962, %v969
  %v984 = vmul.f32 %v965, %v969
  %v985 = vmul.f32 %v967, %v969
  %v986 = vperm.slane %v76, 1
  %v987 = vadd.f32 %v970, %v986
  %v988 = vadd.f32 %v971, %v986
  %v989 = vadd.f32 %v972, %v986
  %v990 = vadd.f32 %v973, %v986
  %v991 = vadd.f32 %v974, %v986
  %v992 = vadd.f32 %v975, %v986
  %v993 = vadd.f32 %v976, %v986
  %v994 = vadd.f32 %v977, %v986
  %v995 = vadd.f32 %v978, %v986
  %v996 = vadd.f32 %v979, %v986
  %v997 = vadd.f32 %v980, %v986
  %v998 = vadd.f32 %v981, %v986
  %v999 = vadd.f32 %v982, %v986
  %v1000 = vadd.f32 %v983, %v986
  %v1001 = vadd.f32 %v984, %v986
  %v1002 = vadd.f32 %v985, %v986
  %v1003 = vmax.f32 %v987, 0.0
  %v1004 = vmax.f32 %v988, 0.0
  %v1005 = vmax.f32 %v989, 0.0
  %v1006 = vmax.f32 %v990, 0.0
  %v1007 = vmax.f32 %v991, 0.0
  %v1008 = vmax.f32 %v992, 0.0
  %v1009 = vmax.f32 %v993, 0.0
  %v1010 = vmax.f32 %v994, 0.0
  %v1011 = vmax.f32 %v995, 0.0
  %v1012 = vmax.f32 %v996, 0.0
  %v1013 = vmax.f32 %v997, 0.0
  %v1014 = vmax.f32 %v998, 0.0
  %v1015 = vmax.f32 %v999, 0.0
  %v1016 = vmax.f32 %v1000, 0.0
  %v1017 = vmax.f32 %v1001, 0.0
  %v1018 = vmax.f32 %v1002, 0.0
  %vm1019 = vcmp.ge.s32.totalorder %v59, 4
  %vm1020 = vcmp.ge.s32.totalorder %v60, 4
  %vm1021 = vcmp.ge.s32.totalorder %v61, 4
  %vm1022 = vcmp.ge.s32.totalorder %v62, 4
  %vm1023 = vcmp.ge.s32.totalorder %v63, 4
  %vm1024 = vcmp.ge.s32.totalorder %v64, 4
  %vm1025 = vcmp.ge.s32.totalorder %v65, 4
  %vm1026 = vcmp.ge.s32.totalorder %v66, 4
  %vm1027 = vcmp.ge.s32.totalorder %v67, 4
  %vm1028 = vcmp.ge.s32.totalorder %v68, 4
  %vm1029 = vcmp.ge.s32.totalorder %v69, 4
  %vm1030 = vcmp.ge.s32.totalorder %v70, 4
  %vm1031 = vcmp.ge.s32.totalorder %v71, 4
  %vm1032 = vcmp.ge.s32.totalorder %v72, 4
  %vm1033 = vcmp.ge.s32.totalorder %v73, 4
  %vm1034 = vcmp.ge.s32.totalorder %v74, 4
  %v1035 = vsel %vm1019, 1, 0
  %v1036 = vsel %vm1020, 1, 0
  %v1037 = vsel %vm1021, 1, 0
  %v1038 = vsel %vm1022, 1, 0
  %v1039 = vsel %vm1023, 1, 0
  %v1040 = vsel %vm1024, 1, 0
  %v1041 = vsel %vm1025, 1, 0
  %v1042 = vsel %vm1026, 1, 0
  %v1043 = vsel %vm1027, 1, 0
  %v1044 = vsel %vm1028, 1, 0
  %v1045 = vsel %vm1029, 1, 0
  %v1046 = vsel %vm1030, 1, 0
  %v1047 = vsel %vm1031, 1, 0
  %v1048 = vsel %vm1032, 1, 0
  %v1049 = vsel %vm1033, 1, 0
  %v1050 = vsel %vm1034, 1, 0
  %vm1051 = vcmp.eq.s32.totalorder %v1035, 1
  %vm1052 = vcmp.eq.s32.totalorder %v1036, 1
  %vm1053 = vcmp.eq.s32.totalorder %v1037, 1
  %vm1054 = vcmp.eq.s32.totalorder %v1038, 1
  %vm1055 = vcmp.eq.s32.totalorder %v1039, 1
  %vm1056 = vcmp.eq.s32.totalorder %v1040, 1
  %vm1057 = vcmp.eq.s32.totalorder %v1041, 1
  %vm1058 = vcmp.eq.s32.totalorder %v1042, 1
  %vm1059 = vcmp.eq.s32.totalorder %v1043, 1
  %vm1060 = vcmp.eq.s32.totalorder %v1044, 1
  %vm1061 = vcmp.eq.s32.totalorder %v1045, 1
  %vm1062 = vcmp.eq.s32.totalorder %v1046, 1
  %vm1063 = vcmp.eq.s32.totalorder %v1047, 1
  %vm1064 = vcmp.eq.s32.totalorder %v1048, 1
  %vm1065 = vcmp.eq.s32.totalorder %v1049, 1
  %vm1066 = vcmp.eq.s32.totalorder %v1050, 1
  %v1067 = vsel %vm1051, %v1015, 0.0
  %v1068 = vsel %vm1052, %v1016, 0.0
  %v1069 = vsel %vm1053, %v1017, 0.0
  %v1070 = vsel %vm1054, %v1018, 0.0
  %v1071 = vsel %vm1055, %v1003, 0.0
  %v1072 = vsel %vm1056, %v1004, 0.0
  %v1073 = vsel %vm1057, %v1005, 0.0
  %v1074 = vsel %vm1058, %v1006, 0.0
  %v1075 = vsel %vm1059, %v1007, 0.0
  %v1076 = vsel %vm1060, %v1008, 0.0
  %v1077 = vsel %vm1061, %v1009, 0.0
  %v1078 = vsel %vm1062, %v1010, 0.0
  %v1079 = vsel %vm1063, %v1011, 0.0
  %v1080 = vsel %vm1064, %v1012, 0.0
  %v1081 = vsel %vm1065, %v1013, 0.0
  %v1082 = vsel %vm1066, %v1014, 0.0
  %vm1083 = vcmp.lt.s32.totalorder %v59, 12
  %vm1084 = vcmp.lt.s32.totalorder %v60, 12
  %vm1085 = vcmp.lt.s32.totalorder %v61, 12
  %vm1086 = vcmp.lt.s32.totalorder %v62, 12
  %vm1087 = vcmp.lt.s32.totalorder %v63, 12
  %vm1088 = vcmp.lt.s32.totalorder %v64, 12
  %vm1089 = vcmp.lt.s32.totalorder %v65, 12
  %vm1090 = vcmp.lt.s32.totalorder %v66, 12
  %vm1091 = vcmp.lt.s32.totalorder %v67, 12
  %vm1092 = vcmp.lt.s32.totalorder %v68, 12
  %vm1093 = vcmp.lt.s32.totalorder %v69, 12
  %vm1094 = vcmp.lt.s32.totalorder %v70, 12
  %vm1095 = vcmp.lt.s32.totalorder %v71, 12
  %vm1096 = vcmp.lt.s32.totalorder %v72, 12
  %vm1097 = vcmp.lt.s32.totalorder %v73, 12
  %vm1098 = vcmp.lt.s32.totalorder %v74, 12
  %v1099 = vsel %vm1083, 1, 0
  %v1100 = vsel %vm1084, 1, 0
  %v1101 = vsel %vm1085, 1, 0
  %v1102 = vsel %vm1086, 1, 0
  %v1103 = vsel %vm1087, 1, 0
  %v1104 = vsel %vm1088, 1, 0
  %v1105 = vsel %vm1089, 1, 0
  %v1106 = vsel %vm1090, 1, 0
  %v1107 = vsel %vm1091, 1, 0
  %v1108 = vsel %vm1092, 1, 0
  %v1109 = vsel %vm1093, 1, 0
  %v1110 = vsel %vm1094, 1, 0
  %v1111 = vsel %vm1095, 1, 0
  %v1112 = vsel %vm1096, 1, 0
  %v1113 = vsel %vm1097, 1, 0
  %v1114 = vsel %vm1098, 1, 0
  %vm1115 = vcmp.eq.s32.totalorder %v1099, 1
  %vm1116 = vcmp.eq.s32.totalorder %v1100, 1
  %vm1117 = vcmp.eq.s32.totalorder %v1101, 1
  %vm1118 = vcmp.eq.s32.totalorder %v1102, 1
  %vm1119 = vcmp.eq.s32.totalorder %v1103, 1
  %vm1120 = vcmp.eq.s32.totalorder %v1104, 1
  %vm1121 = vcmp.eq.s32.totalorder %v1105, 1
  %vm1122 = vcmp.eq.s32.totalorder %v1106, 1
  %vm1123 = vcmp.eq.s32.totalorder %v1107, 1
  %vm1124 = vcmp.eq.s32.totalorder %v1108, 1
  %vm1125 = vcmp.eq.s32.totalorder %v1109, 1
  %vm1126 = vcmp.eq.s32.totalorder %v1110, 1
  %vm1127 = vcmp.eq.s32.totalorder %v1111, 1
  %vm1128 = vcmp.eq.s32.totalorder %v1112, 1
  %vm1129 = vcmp.eq.s32.totalorder %v1113, 1
  %vm1130 = vcmp.eq.s32.totalorder %v1114, 1
  %v1131 = vsel %vm1115, %v1007, 0.0
  %v1132 = vsel %vm1116, %v1008, 0.0
  %v1133 = vsel %vm1117, %v1009, 0.0
  %v1134 = vsel %vm1118, %v1010, 0.0
  %v1135 = vsel %vm1119, %v1011, 0.0
  %v1136 = vsel %vm1120, %v1012, 0.0
  %v1137 = vsel %vm1121, %v1013, 0.0
  %v1138 = vsel %vm1122, %v1014, 0.0
  %v1139 = vsel %vm1123, %v1015, 0.0
  %v1140 = vsel %vm1124, %v1016, 0.0
  %v1141 = vsel %vm1125, %v1017, 0.0
  %v1142 = vsel %vm1126, %v1018, 0.0
  %v1143 = vsel %vm1127, %v1003, 0.0
  %v1144 = vsel %vm1128, %v1004, 0.0
  %v1145 = vsel %vm1129, %v1005, 0.0
  %v1146 = vsel %vm1130, %v1006, 0.0
  %1163 = vrot.lane.b32.xlu0 %v1003, 64
  %v1164 = vpop.permute.xlu0 %1163
  %1165 = vrot.lane.b32.xlu0 %v1004, 64
  %v1166 = vpop.permute.xlu0 %1165
  %1167 = vrot.lane.b32.xlu0 %v1005, 64
  %v1168 = vpop.permute.xlu0 %1167
  %1169 = vrot.lane.b32.xlu0 %v1006, 64
  %v1170 = vpop.permute.xlu0 %1169
  %1171 = vrot.lane.b32.xlu0 %v1007, 64
  %v1172 = vpop.permute.xlu0 %1171
  %1173 = vrot.lane.b32.xlu0 %v1008, 64
  %v1174 = vpop.permute.xlu0 %1173
  %1175 = vrot.lane.b32.xlu0 %v1009, 64
  %v1176 = vpop.permute.xlu0 %1175
  %1177 = vrot.lane.b32.xlu0 %v1010, 64
  %v1178 = vpop.permute.xlu0 %1177
  %1179 = vrot.lane.b32.xlu0 %v1011, 64
  %v1180 = vpop.permute.xlu0 %1179
  %1181 = vrot.lane.b32.xlu0 %v1012, 64
  %v1182 = vpop.permute.xlu0 %1181
  %1183 = vrot.lane.b32.xlu0 %v1013, 64
  %v1184 = vpop.permute.xlu0 %1183
  %1185 = vrot.lane.b32.xlu0 %v1014, 64
  %v1186 = vpop.permute.xlu0 %1185
  %1187 = vrot.lane.b32.xlu0 %v1015, 64
  %v1188 = vpop.permute.xlu0 %1187
  %1189 = vrot.lane.b32.xlu0 %v1016, 64
  %v1190 = vpop.permute.xlu0 %1189
  %1191 = vrot.lane.b32.xlu0 %v1017, 64
  %v1192 = vpop.permute.xlu0 %1191
  %1193 = vrot.lane.b32.xlu0 %v1018, 64
  %v1194 = vpop.permute.xlu0 %1193
  %v1211 = vsel %vm718, %v1067, %v1164
  %v1212 = vsel %vm718, %v1068, %v1166
  %v1213 = vsel %vm718, %v1069, %v1168
  %v1214 = vsel %vm718, %v1070, %v1170
  %v1215 = vsel %vm718, %v1071, %v1172
  %v1216 = vsel %vm718, %v1072, %v1174
  %v1217 = vsel %vm718, %v1073, %v1176
  %v1218 = vsel %vm718, %v1074, %v1178
  %v1219 = vsel %vm718, %v1075, %v1180
  %v1220 = vsel %vm718, %v1076, %v1182
  %v1221 = vsel %vm718, %v1077, %v1184
  %v1222 = vsel %vm718, %v1078, %v1186
  %v1223 = vsel %vm718, %v1079, %v1188
  %v1224 = vsel %vm718, %v1080, %v1190
  %v1225 = vsel %vm718, %v1081, %v1192
  %v1226 = vsel %vm718, %v1082, %v1194
  %v1227 = vpack.c.bf16 %v1212, %v1211
  %v1228 = vpack.c.bf16 %v1132, %v1131
  %v1229 = vpack.c.bf16 %v1214, %v1213
  %v1230 = vpack.c.bf16 %v1134, %v1133
  %v1231 = vpack.c.bf16 %v1216, %v1215
  %v1232 = vpack.c.bf16 %v1136, %v1135
  %v1233 = vpack.c.bf16 %v1218, %v1217
  %v1234 = vpack.c.bf16 %v1138, %v1137
  %v1235 = vpack.c.bf16 %v1220, %v1219
  %v1236 = vpack.c.bf16 %v1140, %v1139
  %v1237 = vpack.c.bf16 %v1222, %v1221
  %v1238 = vpack.c.bf16 %v1142, %v1141
  %v1239 = vpack.c.bf16 %v1224, %v1223
  %v1240 = vpack.c.bf16 %v1144, %v1143
  %v1241 = vpack.c.bf16 %v1226, %v1225
  %v1242 = vpack.c.bf16 %v1146, %v1145
  %v1243 = vld [vmem:[%s3] sm:$0xf]
  %v1244 = vld [vmem:[%s3 + $0x4] sm:$0xf]
  %v1245 = vld [vmem:[%s3 + $0x8] sm:$0xf]
  %v1246 = vld [vmem:[%s3 + $0xc] sm:$0xf]
  %v1247 = vld [vmem:[%s3 + $0x10] sm:$0xf]
  %v1248 = vld [vmem:[%s3 + $0x14] sm:$0xf]
  %v1249 = vld [vmem:[%s3 + $0x18] sm:$0xf]
  %v1250 = vld [vmem:[%s3 + $0x1c] sm:$0xf]
  %v1251 = vld [vmem:[%s3 + $0x20] sm:$0xf]
  %v1252 = vld [vmem:[%s3 + $0x24] sm:$0xf]
  %v1253 = vld [vmem:[%s3 + $0x28] sm:$0xf]
  %v1254 = vld [vmem:[%s3 + $0x2c] sm:$0xf]
  %v1255 = vld [vmem:[%s3 + $0x30] sm:$0xf]
  %v1256 = vld [vmem:[%s3 + $0x34] sm:$0xf]
  %v1257 = vld [vmem:[%s3 + $0x38] sm:$0xf]
  %v1258 = vld [vmem:[%s3 + $0x3c] sm:$0xf]
  %v1259 = vld [vmem:[%s3 + $0x40] sm:$0xf]
  %v1260 = vld [vmem:[%s3 + $0x44] sm:$0xf]
  %v1261 = vld [vmem:[%s3 + $0x48] sm:$0xf]
  %v1262 = vld [vmem:[%s3 + $0x4c] sm:$0xf]
  %v1263 = vld [vmem:[%s3 + $0x50] sm:$0xf]
  %v1264 = vld [vmem:[%s3 + $0x54] sm:$0xf]
  %v1265 = vld [vmem:[%s3 + $0x58] sm:$0xf]
  %v1266 = vld [vmem:[%s3 + $0x5c] sm:$0xf]
  %v1291 = vunpack.c.l.b16 %v1243
  %v1292 = vunpack.c.l.b16 %v1244
  %v1293 = vunpack.c.l.b16 %v1245
  %v1294 = vunpack.c.l.b16 %v1246
  %v1295 = vunpack.c.l.b16 %v1247
  %v1296 = vunpack.c.l.b16 %v1248
  %v1297 = vunpack.c.l.b16 %v1249
  %v1298 = vunpack.c.l.b16 %v1250
  %v1299 = vunpack.c.l.b16 %v1251
  %v1300 = vunpack.c.l.b16 %v1252
  %v1301 = vunpack.c.l.b16 %v1253
  %v1302 = vunpack.c.l.b16 %v1254
  %v1303 = vunpack.c.l.b16 %v1255
  %v1304 = vunpack.c.l.b16 %v1256
  %v1305 = vunpack.c.l.b16 %v1257
  %v1306 = vunpack.c.l.b16 %v1258
  %v1307 = vunpack.c.l.b16 %v1259
  %v1308 = vunpack.c.l.b16 %v1260
  %v1309 = vunpack.c.l.b16 %v1261
  %v1310 = vunpack.c.l.b16 %v1262
  %v1311 = vunpack.c.l.b16 %v1263
  %v1312 = vunpack.c.l.b16 %v1264
  %v1313 = vunpack.c.l.b16 %v1265
  %v1314 = vunpack.c.l.b16 %v1266
  %v1315 = vpack.c.b16 %v1292, %v1291
  %v1316 = vpack.c.b16 %v1294, %v1293
  %v1317 = vpack.c.b16 %v1296, %v1295
  %v1318 = vpack.c.b16 %v1298, %v1297
  %v1319 = vpack.c.b16 %v1300, %v1299
  %v1320 = vpack.c.b16 %v1302, %v1301
  %v1321 = vpack.c.b16 %v1304, %v1303
  %v1322 = vpack.c.b16 %v1306, %v1305
  %v1323 = vpack.c.b16 %v1308, %v1307
  %v1324 = vpack.c.b16 %v1310, %v1309
  %v1325 = vpack.c.b16 %v1312, %v1311
  %v1326 = vpack.c.b16 %v1314, %v1313
  %v1340 = vsel %vm718, %v1228, 0
  %v1343 = vsel %vm718, %v1230, 0
  %v1346 = vsel %vm718, %v1232, 0
  %v1349 = vsel %vm718, %v1234, 0
  %v1352 = vsel %vm718, %v1236, 0
  %v1355 = vsel %vm718, %v1238, 0
  %v1358 = vsel %vm718, %v1240, 0
  %v1361 = vsel %vm718, %v1242, 0
  %1363 = vmatpush.bf16.msra.mxu0 %v1322
  %1364 = vmatpush.bf16.msra.mxu0 %v1321
  %1365 = vmatpush.bf16.msra.mxu0 %v1320
  %1366 = vmatpush.bf16.msra.mxu0 %v1319
  %1367 = vmatpush.bf16.msra.mxu0 %v1318
  %1368 = vmatpush.bf16.msra.mxu0 %v1317
  %1369 = vmatpush.bf16.msra.mxu0 %v1316
  %1370 = vmatpush.bf16.msra.mxu0 %v1315
  %1371 = vmatmul.bf16.gmra.mxu0 %v1227
  %v1372 = vpop.f32.mrf.mxu0
  %v1373 = vadd.f32 0.0, %v1372
  %v1374 = vpop.f32.mrf.mxu0
  %v1375 = vadd.f32 0.0, %v1374
  %1376 = vmatmul.bf16.gmra.mxu0 %v1229
  %v1377 = vpop.f32.mrf.mxu0
  %v1378 = vadd.f32 0.0, %v1377
  %v1379 = vpop.f32.mrf.mxu0
  %v1380 = vadd.f32 0.0, %v1379
  %1381 = vmatmul.bf16.gmra.mxu0 %v1231
  %v1382 = vpop.f32.mrf.mxu0
  %v1383 = vadd.f32 0.0, %v1382
  %v1384 = vpop.f32.mrf.mxu0
  %v1385 = vadd.f32 0.0, %v1384
  %1386 = vmatmul.bf16.gmra.mxu0 %v1233
  %v1387 = vpop.f32.mrf.mxu0
  %v1388 = vadd.f32 0.0, %v1387
  %v1389 = vpop.f32.mrf.mxu0
  %v1390 = vadd.f32 0.0, %v1389
  %1391 = vmatmul.bf16.gmra.mxu0 %v1235
  %v1392 = vpop.f32.mrf.mxu0
  %v1393 = vadd.f32 0.0, %v1392
  %v1394 = vpop.f32.mrf.mxu0
  %v1395 = vadd.f32 0.0, %v1394
  %1396 = vmatmul.bf16.gmra.mxu0 %v1237
  %v1397 = vpop.f32.mrf.mxu0
  %v1398 = vadd.f32 0.0, %v1397
  %v1399 = vpop.f32.mrf.mxu0
  %v1400 = vadd.f32 0.0, %v1399
  %1401 = vmatmul.bf16.gmra.mxu0 %v1239
  %v1402 = vpop.f32.mrf.mxu0
  %v1403 = vadd.f32 0.0, %v1402
  %v1404 = vpop.f32.mrf.mxu0
  %v1405 = vadd.f32 0.0, %v1404
  %1406 = vmatmul.bf16.gmra.mxu0 %v1241
  %v1407 = vpop.f32.mrf.mxu0
  %v1408 = vadd.f32 0.0, %v1407
  %v1409 = vpop.f32.mrf.mxu0
  %v1410 = vadd.f32 0.0, %v1409
  %1411 = vdwg.mxu0
  %1412 = vmatpush.bf16.msra.mxu0 0
  %1413 = vmatpush.bf16.msra.mxu0 0
  %1414 = vmatpush.bf16.msra.mxu0 0
  %1415 = vmatpush.bf16.msra.mxu0 0
  %1416 = vmatpush.bf16.msra.mxu0 %v1326
  %1417 = vmatpush.bf16.msra.mxu0 %v1325
  %1418 = vmatpush.bf16.msra.mxu0 %v1324
  %1419 = vmatpush.bf16.msra.mxu0 %v1323
  %1420 = vmatmul.bf16.gmra.mxu0 %v1340
  %v1421 = vpop.f32.mrf.mxu0
  %v1422 = vadd.f32 %v1373, %v1421
  %v1423 = vpop.f32.mrf.mxu0
  %v1424 = vadd.f32 %v1375, %v1423
  %1425 = vmatmul.bf16.gmra.mxu0 %v1343
  %v1426 = vpop.f32.mrf.mxu0
  %v1427 = vadd.f32 %v1378, %v1426
  %v1428 = vpop.f32.mrf.mxu0
  %v1429 = vadd.f32 %v1380, %v1428
  %1430 = vmatmul.bf16.gmra.mxu0 %v1346
  %v1431 = vpop.f32.mrf.mxu0
  %v1432 = vadd.f32 %v1383, %v1431
  %v1433 = vpop.f32.mrf.mxu0
  %v1434 = vadd.f32 %v1385, %v1433
  %1435 = vmatmul.bf16.gmra.mxu0 %v1349
  %v1436 = vpop.f32.mrf.mxu0
  %v1437 = vadd.f32 %v1388, %v1436
  %v1438 = vpop.f32.mrf.mxu0
  %v1439 = vadd.f32 %v1390, %v1438
  %1440 = vmatmul.bf16.gmra.mxu0 %v1352
  %v1441 = vpop.f32.mrf.mxu0
  %v1442 = vadd.f32 %v1393, %v1441
  %v1443 = vpop.f32.mrf.mxu0
  %v1444 = vadd.f32 %v1395, %v1443
  %1445 = vmatmul.bf16.gmra.mxu0 %v1355
  %v1446 = vpop.f32.mrf.mxu0
  %v1447 = vadd.f32 %v1398, %v1446
  %v1448 = vpop.f32.mrf.mxu0
  %v1449 = vadd.f32 %v1400, %v1448
  %1450 = vmatmul.bf16.gmra.mxu0 %v1358
  %v1451 = vpop.f32.mrf.mxu0
  %v1452 = vadd.f32 %v1403, %v1451
  %v1453 = vpop.f32.mrf.mxu0
  %v1454 = vadd.f32 %v1405, %v1453
  %1455 = vmatmul.bf16.gmra.mxu0 %v1361
  %v1456 = vpop.f32.mrf.mxu0
  %v1457 = vadd.f32 %v1408, %v1456
  %v1458 = vpop.f32.mrf.mxu0
  %v1459 = vadd.f32 %v1410, %v1458
  %1460 = vdwg.mxu0
  %v1461 = vperm.slane %v75, 2
  %v1462 = vmul.f32 %v1422, %v1461
  %v1463 = vmul.f32 %v1424, %v1461
  %v1464 = vmul.f32 %v1427, %v1461
  %v1465 = vmul.f32 %v1429, %v1461
  %v1466 = vmul.f32 %v1432, %v1461
  %v1467 = vmul.f32 %v1434, %v1461
  %v1468 = vmul.f32 %v1437, %v1461
  %v1469 = vmul.f32 %v1439, %v1461
  %v1470 = vmul.f32 %v1442, %v1461
  %v1471 = vmul.f32 %v1444, %v1461
  %v1472 = vmul.f32 %v1447, %v1461
  %v1473 = vmul.f32 %v1449, %v1461
  %v1474 = vmul.f32 %v1452, %v1461
  %v1475 = vmul.f32 %v1454, %v1461
  %v1476 = vmul.f32 %v1457, %v1461
  %v1477 = vmul.f32 %v1459, %v1461
  %v1478 = vperm.slane %v76, 2
  %v1479 = vadd.f32 %v1462, %v1478
  %v1480 = vadd.f32 %v1463, %v1478
  %v1481 = vadd.f32 %v1464, %v1478
  %v1482 = vadd.f32 %v1465, %v1478
  %v1483 = vadd.f32 %v1466, %v1478
  %v1484 = vadd.f32 %v1467, %v1478
  %v1485 = vadd.f32 %v1468, %v1478
  %v1486 = vadd.f32 %v1469, %v1478
  %v1487 = vadd.f32 %v1470, %v1478
  %v1488 = vadd.f32 %v1471, %v1478
  %v1489 = vadd.f32 %v1472, %v1478
  %v1490 = vadd.f32 %v1473, %v1478
  %v1491 = vadd.f32 %v1474, %v1478
  %v1492 = vadd.f32 %v1475, %v1478
  %v1493 = vadd.f32 %v1476, %v1478
  %v1494 = vadd.f32 %v1477, %v1478
  %v1495 = vmax.f32 %v1479, 0.0
  %v1496 = vmax.f32 %v1480, 0.0
  %v1497 = vmax.f32 %v1481, 0.0
  %v1498 = vmax.f32 %v1482, 0.0
  %v1499 = vmax.f32 %v1483, 0.0
  %v1500 = vmax.f32 %v1484, 0.0
  %v1501 = vmax.f32 %v1485, 0.0
  %v1502 = vmax.f32 %v1486, 0.0
  %v1503 = vmax.f32 %v1487, 0.0
  %v1504 = vmax.f32 %v1488, 0.0
  %v1505 = vmax.f32 %v1489, 0.0
  %v1506 = vmax.f32 %v1490, 0.0
  %v1507 = vmax.f32 %v1491, 0.0
  %v1508 = vmax.f32 %v1492, 0.0
  %v1509 = vmax.f32 %v1493, 0.0
  %v1510 = vmax.f32 %v1494, 0.0
  %v1511 = vpack.c.bf16 %v1496, %v1495
  %v1512 = vpack.c.bf16 %v1498, %v1497
  %v1513 = vpack.c.bf16 %v1500, %v1499
  %v1514 = vpack.c.bf16 %v1502, %v1501
  %v1515 = vpack.c.bf16 %v1504, %v1503
  %v1516 = vpack.c.bf16 %v1506, %v1505
  %v1517 = vpack.c.bf16 %v1508, %v1507
  %v1518 = vpack.c.bf16 %v1510, %v1509
  %v1519 = vld [vmem:[%s6] sm:$0xff]
  %v1520 = vld [vmem:[%s6 + $0x8] sm:$0xff]
  %v1521 = vld [vmem:[%s6 + $0x10] sm:$0xff]
  %v1522 = vld [vmem:[%s6 + $0x18] sm:$0xff]
  %v1523 = vld [vmem:[%s6 + $0x20] sm:$0xff]
  %v1524 = vld [vmem:[%s6 + $0x28] sm:$0xff]
  %v1525 = vld [vmem:[%s6 + $0x30] sm:$0xff]
  %v1526 = vld [vmem:[%s6 + $0x38] sm:$0xff]
  %v1527 = vld [vmem:[%s8] sm:$0x3]
  %v1529 = vperm.slane %v1527, 0
  %v1530 = vperm.slane %v1527, 1
  %v1541 = vunpack.c.l.b16 %v1519
  %v1542 = vunpack.c.h.b16 %v1519
  %v1543 = vunpack.c.l.b16 %v1520
  %v1544 = vunpack.c.h.b16 %v1520
  %v1545 = vunpack.c.l.b16 %v1521
  %v1546 = vunpack.c.h.b16 %v1521
  %v1547 = vunpack.c.l.b16 %v1522
  %v1548 = vunpack.c.h.b16 %v1522
  %v1549 = vunpack.c.l.b16 %v1523
  %v1550 = vunpack.c.h.b16 %v1523
  %v1551 = vunpack.c.l.b16 %v1524
  %v1552 = vunpack.c.h.b16 %v1524
  %v1553 = vunpack.c.l.b16 %v1525
  %v1554 = vunpack.c.h.b16 %v1525
  %v1555 = vunpack.c.l.b16 %v1526
  %v1556 = vunpack.c.h.b16 %v1526
  %v1557 = vpack.c.b16 %v1543, %v1541
  %v1558 = vpack.c.b16 %v1544, %v1542
  %v1559 = vpack.c.b16 %v1547, %v1545
  %v1560 = vpack.c.b16 %v1548, %v1546
  %v1561 = vpack.c.b16 %v1551, %v1549
  %v1562 = vpack.c.b16 %v1552, %v1550
  %v1563 = vpack.c.b16 %v1555, %v1553
  %v1564 = vpack.c.b16 %v1556, %v1554
  %v1574 = vsel %vm718, %v1511, 0
  %v1577 = vsel %vm718, %v1512, 0
  %v1580 = vsel %vm718, %v1513, 0
  %v1583 = vsel %vm718, %v1514, 0
  %v1586 = vsel %vm718, %v1515, 0
  %v1589 = vsel %vm718, %v1516, 0
  %v1592 = vsel %vm718, %v1517, 0
  %v1595 = vsel %vm718, %v1518, 0
  %1597 = vmatpush.bf16.msra.mxu0 0
  %1598 = vmatpush.bf16.msra.mxu0 0
  %1599 = vmatpush.bf16.msra.mxu0 0
  %1600 = vmatpush.bf16.msra.mxu0 0
  %1601 = vmatpush.bf16.msra.mxu0 %v1563
  %1602 = vmatpush.bf16.msra.mxu0 %v1561
  %1603 = vmatpush.bf16.msra.mxu0 %v1559
  %1604 = vmatpush.bf16.msra.mxu0 %v1557
  %1605 = vmatmul.bf16.gmra.mxu0 %v1574
  %v1606 = vpop.f32.mrf.mxu0
  %v1607 = vadd.f32 %v1529, %v1606
  %v1608 = vpop.f32.mrf.mxu0
  %v1609 = vadd.f32 %v1529, %v1608
  %1610 = vmatmul.bf16.gmra.mxu0 %v1577
  %v1611 = vpop.f32.mrf.mxu0
  %v1612 = vadd.f32 %v1529, %v1611
  %v1613 = vpop.f32.mrf.mxu0
  %v1614 = vadd.f32 %v1529, %v1613
  %1615 = vmatmul.bf16.gmra.mxu0 %v1580
  %v1616 = vpop.f32.mrf.mxu0
  %v1617 = vadd.f32 %v1529, %v1616
  %v1618 = vpop.f32.mrf.mxu0
  %v1619 = vadd.f32 %v1529, %v1618
  %1620 = vmatmul.bf16.gmra.mxu0 %v1583
  %v1621 = vpop.f32.mrf.mxu0
  %v1622 = vadd.f32 %v1529, %v1621
  %v1623 = vpop.f32.mrf.mxu0
  %v1624 = vadd.f32 %v1529, %v1623
  %1625 = vmatmul.bf16.gmra.mxu0 %v1586
  %v1626 = vpop.f32.mrf.mxu0
  %v1627 = vadd.f32 %v1529, %v1626
  %v1628 = vpop.f32.mrf.mxu0
  %v1629 = vadd.f32 %v1529, %v1628
  %1630 = vmatmul.bf16.gmra.mxu0 %v1589
  %v1631 = vpop.f32.mrf.mxu0
  %v1632 = vadd.f32 %v1529, %v1631
  %v1633 = vpop.f32.mrf.mxu0
  %v1634 = vadd.f32 %v1529, %v1633
  %1635 = vmatmul.bf16.gmra.mxu0 %v1592
  %v1636 = vpop.f32.mrf.mxu0
  %v1637 = vadd.f32 %v1529, %v1636
  %v1638 = vpop.f32.mrf.mxu0
  %v1639 = vadd.f32 %v1529, %v1638
  %1640 = vmatmul.bf16.gmra.mxu0 %v1595
  %v1641 = vpop.f32.mrf.mxu0
  %v1642 = vadd.f32 %v1529, %v1641
  %v1643 = vpop.f32.mrf.mxu0
  %v1644 = vadd.f32 %v1529, %v1643
  %1645 = vdwg.mxu0
  %1646 = vmatpush.bf16.msra.mxu0 0
  %1647 = vmatpush.bf16.msra.mxu0 0
  %1648 = vmatpush.bf16.msra.mxu0 0
  %1649 = vmatpush.bf16.msra.mxu0 0
  %1650 = vmatpush.bf16.msra.mxu0 %v1564
  %1651 = vmatpush.bf16.msra.mxu0 %v1562
  %1652 = vmatpush.bf16.msra.mxu0 %v1560
  %1653 = vmatpush.bf16.msra.mxu0 %v1558
  %1654 = vmatmul.bf16.gmra.mxu0 %v1574
  %v1655 = vpop.f32.mrf.mxu0
  %v1656 = vadd.f32 %v1530, %v1655
  %v1657 = vpop.f32.mrf.mxu0
  %v1658 = vadd.f32 %v1530, %v1657
  %1659 = vmatmul.bf16.gmra.mxu0 %v1577
  %v1660 = vpop.f32.mrf.mxu0
  %v1661 = vadd.f32 %v1530, %v1660
  %v1662 = vpop.f32.mrf.mxu0
  %v1663 = vadd.f32 %v1530, %v1662
  %1664 = vmatmul.bf16.gmra.mxu0 %v1580
  %v1665 = vpop.f32.mrf.mxu0
  %v1666 = vadd.f32 %v1530, %v1665
  %v1667 = vpop.f32.mrf.mxu0
  %v1668 = vadd.f32 %v1530, %v1667
  %1669 = vmatmul.bf16.gmra.mxu0 %v1583
  %v1670 = vpop.f32.mrf.mxu0
  %v1671 = vadd.f32 %v1530, %v1670
  %v1672 = vpop.f32.mrf.mxu0
  %v1673 = vadd.f32 %v1530, %v1672
  %1674 = vmatmul.bf16.gmra.mxu0 %v1586
  %v1675 = vpop.f32.mrf.mxu0
  %v1676 = vadd.f32 %v1530, %v1675
  %v1677 = vpop.f32.mrf.mxu0
  %v1678 = vadd.f32 %v1530, %v1677
  %1679 = vmatmul.bf16.gmra.mxu0 %v1589
  %v1680 = vpop.f32.mrf.mxu0
  %v1681 = vadd.f32 %v1530, %v1680
  %v1682 = vpop.f32.mrf.mxu0
  %v1683 = vadd.f32 %v1530, %v1682
  %1684 = vmatmul.bf16.gmra.mxu0 %v1592
  %v1685 = vpop.f32.mrf.mxu0
  %v1686 = vadd.f32 %v1530, %v1685
  %v1687 = vpop.f32.mrf.mxu0
  %v1688 = vadd.f32 %v1530, %v1687
  %1689 = vmatmul.bf16.gmra.mxu0 %v1595
  %v1690 = vpop.f32.mrf.mxu0
  %v1691 = vadd.f32 %v1530, %v1690
  %v1692 = vpop.f32.mrf.mxu0
  %v1693 = vadd.f32 %v1530, %v1692
  %1694 = vdwg.mxu0
  %1695 = vst [vmem:[#allocation2] sm:$0xff] %v1607
  %1696 = vst.msk [vmem:[#allocation2 + $0x8] sm:$0xff] %vm718, %v1656
  %1697 = vst [vmem:[#allocation2 + $0x10] sm:$0xff] %v1609
  %1698 = vst.msk [vmem:[#allocation2 + $0x18] sm:$0xff] %vm718, %v1658
  %1699 = vst [vmem:[#allocation2 + $0x20] sm:$0xff] %v1612
  %1700 = vst.msk [vmem:[#allocation2 + $0x28] sm:$0xff] %vm718, %v1661
  %1701 = vst [vmem:[#allocation2 + $0x30] sm:$0xff] %v1614
  %1702 = vst.msk [vmem:[#allocation2 + $0x38] sm:$0xff] %vm718, %v1663
  %1703 = vst [vmem:[#allocation2 + $0x40] sm:$0xff] %v1617
  %1704 = vst.msk [vmem:[#allocation2 + $0x48] sm:$0xff] %vm718, %v1666
  %1705 = vst [vmem:[#allocation2 + $0x50] sm:$0xff] %v1619
  %1706 = vst.msk [vmem:[#allocation2 + $0x58] sm:$0xff] %vm718, %v1668
  %1707 = vst [vmem:[#allocation2 + $0x60] sm:$0xff] %v1622
  %1708 = vst.msk [vmem:[#allocation2 + $0x68] sm:$0xff] %vm718, %v1671
  %1709 = vst [vmem:[#allocation2 + $0x70] sm:$0xff] %v1624
  %1710 = vst.msk [vmem:[#allocation2 + $0x78] sm:$0xff] %vm718, %v1673
  %1711 = vst [vmem:[#allocation2 + $0x80] sm:$0xff] %v1627
  %1712 = vst.msk [vmem:[#allocation2 + $0x88] sm:$0xff] %vm718, %v1676
  %1713 = vst [vmem:[#allocation2 + $0x90] sm:$0xff] %v1629
  %1714 = vst.msk [vmem:[#allocation2 + $0x98] sm:$0xff] %vm718, %v1678
  %1715 = vst [vmem:[#allocation2 + $0xa0] sm:$0xff] %v1632
  %1716 = vst.msk [vmem:[#allocation2 + $0xa8] sm:$0xff] %vm718, %v1681
  %1717 = vst [vmem:[#allocation2 + $0xb0] sm:$0xff] %v1634
  %1718 = vst.msk [vmem:[#allocation2 + $0xb8] sm:$0xff] %vm718, %v1683
  %1719 = vst [vmem:[#allocation2 + $0xc0] sm:$0xff] %v1637
  %1720 = vst.msk [vmem:[#allocation2 + $0xc8] sm:$0xff] %vm718, %v1686
  %1721 = vst [vmem:[#allocation2 + $0xd0] sm:$0xff] %v1639
  %1722 = vst.msk [vmem:[#allocation2 + $0xd8] sm:$0xff] %vm718, %v1688
  %1723 = vst [vmem:[#allocation2 + $0xe0] sm:$0xff] %v1642
  %1724 = vst.msk [vmem:[#allocation2 + $0xe8] sm:$0xff] %vm718, %v1691
  %1725 = vst [vmem:[#allocation2 + $0xf0] sm:$0xff] %v1644
  %1726 = vst.msk [vmem:[#allocation2 + $0xf8] sm:$0xff] %vm718, %v1693
  %v1727 = vld [vmem:[%s7] sm:$0xff]
  %v1728 = vld [vmem:[%s7 + $0x8] sm:$0xff]
  %v1729 = vld [vmem:[%s7 + $0x10] sm:$0xff]
  %v1730 = vld [vmem:[%s7 + $0x18] sm:$0xff]
  %v1731 = vld [vmem:[%s7 + $0x20] sm:$0xff]
  %v1732 = vld [vmem:[%s7 + $0x28] sm:$0xff]
  %v1733 = vld [vmem:[%s7 + $0x30] sm:$0xff]
  %v1734 = vld [vmem:[%s7 + $0x38] sm:$0xff]
  %v1735 = vld [vmem:[%s9] sm:$0x3]
  %v1736 = vld [vmem:[#allocation2] sm:$0xff]
  %v1737 = vld [vmem:[#allocation2 + $0x8] sm:$0xff]
  %v1739 = vperm.slane %v1735, 0
  %v1740 = vperm.slane %v1735, 1
  %v1751 = vunpack.c.l.b16 %v1727
  %v1752 = vunpack.c.h.b16 %v1727
  %v1753 = vunpack.c.l.b16 %v1728
  %v1754 = vunpack.c.h.b16 %v1728
  %v1755 = vunpack.c.l.b16 %v1729
  %v1756 = vunpack.c.h.b16 %v1729
  %v1757 = vunpack.c.l.b16 %v1730
  %v1758 = vunpack.c.h.b16 %v1730
  %v1759 = vunpack.c.l.b16 %v1731
  %v1760 = vunpack.c.h.b16 %v1731
  %v1761 = vunpack.c.l.b16 %v1732
  %v1762 = vunpack.c.h.b16 %v1732
  %v1763 = vunpack.c.l.b16 %v1733
  %v1764 = vunpack.c.h.b16 %v1733
  %v1765 = vunpack.c.l.b16 %v1734
  %v1766 = vunpack.c.h.b16 %v1734
  %v1767 = vpack.c.b16 %v1753, %v1751
  %v1768 = vpack.c.b16 %v1754, %v1752
  %v1769 = vpack.c.b16 %v1757, %v1755
  %v1770 = vpack.c.b16 %v1758, %v1756
  %v1771 = vpack.c.b16 %v1761, %v1759
  %v1772 = vpack.c.b16 %v1762, %v1760
  %v1773 = vpack.c.b16 %v1765, %v1763
  %v1774 = vpack.c.b16 %v1766, %v1764
  %v1784 = vsel %vm718, 0, 0
  %1786 = vmatpush.bf16.msra.mxu0 0
  %1787 = vmatpush.bf16.msra.mxu0 0
  %1788 = vmatpush.bf16.msra.mxu0 0
  %1789 = vmatpush.bf16.msra.mxu0 0
  %1790 = vmatpush.bf16.msra.mxu0 %v1773
  %1791 = vmatpush.bf16.msra.mxu0 %v1771
  %1792 = vmatpush.bf16.msra.mxu0 %v1769
  %1793 = vmatpush.bf16.msra.mxu0 %v1767
  %1794 = vmatmul.bf16.gmra.mxu0 %v1784
  %v1795 = vpop.f32.mrf.mxu0
  %v1796 = vadd.f32 %v1739, %v1795
  %v1797 = vpop.f32.mrf.mxu0
  %1798 = vdwg.mxu0
  %1799 = vmatpush.bf16.msra.mxu0 0
  %1800 = vmatpush.bf16.msra.mxu0 0
  %1801 = vmatpush.bf16.msra.mxu0 0
  %1802 = vmatpush.bf16.msra.mxu0 0
  %1803 = vmatpush.bf16.msra.mxu0 %v1774
  %1804 = vmatpush.bf16.msra.mxu0 %v1772
  %1805 = vmatpush.bf16.msra.mxu0 %v1770
  %1806 = vmatpush.bf16.msra.mxu0 %v1768
  %1807 = vmatmul.bf16.gmra.mxu0 %v1784
  %v1808 = vpop.f32.mrf.mxu0
  %v1809 = vadd.f32 %v1740, %v1808
  %v1810 = vpop.f32.mrf.mxu0
  %1811 = vdwg.mxu0
  %v1812 = vadd.f32 %v1736, %v1796
  %v1813 = vxor.u32 %v1812, 2147483648
  %v1814 = vmul.f32 %v1813, 1.442695
  %v1815 = vpow.pop %v1814
  %v1816 = vadd.f32 %v1815, 1.0
  %v1817 = vrcp.pop %v1816
  %v1818 = vmul.f32 %v1816, %v1817
  %v1819 = vsub.f32 1.0, %v1818
  %v1820 = vmul.f32 %v1817, %v1819
  %v1821 = vadd.f32 %v1817, %v1820
  %vm1822 = vweird.f32 %v1816
  %vm1823 = vweird.f32 %v1817
  %vm1824 = vmor %vm1822, %vm1823
  %v1825 = vsel %vm1824, %v1817, %v1821
  %v1826 = vand.u32 2147483647, %v1816
  %vm1827 = vcmp.eq.f32.partialorder %v1826, 8.507059e+37
  %v1828 = vand.u32 %v1816, 2147483648
  %v1829 = vor.u32 1.1754944e-38, %v1828
  %v1830 = vsel %vm1827, %v1829, %v1825
  %v1831 = vmul.f32 1.0, %v1830
  %v1832 = vmul.f32 %v1831, %v1809
  %v1833 = vadd.f32 %v1737, %v1832
  %v1834 = vtanh.pop %v1833
  %v1835 = vsub.f32 1.0, %v1831
  %1837 = vrot.lane.b32.xlu0 %v1834, 64
  %v1838 = vpop.permute.xlu0 %1837
  %v1840 = vmul.f32 %v1835, %v1838
  %v1841 = vmul.f32 %v1831, 0.0
  %v1842 = vadd.f32 %v1840, %v1841
  %s1843 = scalar_lea.vmem [#allocation2], 16
  %v1844 = vld [vmem:[%s1843] sm:$0xff]
  %v1845 = vld [vmem:[%s1843 + $0x8] sm:$0xff]
  %v1846 = vpack.c.bf16 %v1842, %v1842
  %1848 = vrot.lane.b32.xlu0 %v1846, 64
  %v1849 = vpop.permute.xlu0 %1848
  %v1851 = vsel %vm718, %v1849, 0
  %1853 = vmatpush.bf16.msra.mxu0 0
  %1854 = vmatpush.bf16.msra.mxu0 0
  %1855 = vmatpush.bf16.msra.mxu0 0
  %1856 = vmatpush.bf16.msra.mxu0 0
  %1857 = vmatpush.bf16.msra.mxu0 %v1773
  %1858 = vmatpush.bf16.msra.mxu0 %v1771
  %1859 = vmatpush.bf16.msra.mxu0 %v1769
  %1860 = vmatpush.bf16.msra.mxu0 %v1767
  %1861 = vmatmul.bf16.gmra.mxu0 %v1851
  %v1862 = vpop.f32.mrf.mxu0
  %v1863 = vadd.f32 %v1739, %v1862
  %v1864 = vpop.f32.mrf.mxu0
  %1865 = vdwg.mxu0
  %1866 = vmatpush.bf16.msra.mxu0 0
  %1867 = vmatpush.bf16.msra.mxu0 0
  %1868 = vmatpush.bf16.msra.mxu0 0
  %1869 = vmatpush.bf16.msra.mxu0 0
  %1870 = vmatpush.bf16.msra.mxu0 %v1774
  %1871 = vmatpush.bf16.msra.mxu0 %v1772
  %1872 = vmatpush.bf16.msra.mxu0 %v1770
  %1873 = vmatpush.bf16.msra.mxu0 %v1768
  %1874 = vmatmul.bf16.gmra.mxu0 %v1851
  %v1875 = vpop.f32.mrf.mxu0
  %v1876 = vadd.f32 %v1740, %v1875
  %v1877 = vpop.f32.mrf.mxu0
  %1878 = vdwg.mxu0
  %v1879 = vadd.f32 %v1844, %v1863
  %v1880 = vxor.u32 %v1879, 2147483648
  %v1881 = vmul.f32 %v1880, 1.442695
  %v1882 = vpow.pop %v1881
  %v1883 = vadd.f32 %v1882, 1.0
  %v1884 = vrcp.pop %v1883
  %v1885 = vmul.f32 %v1883, %v1884
  %v1886 = vsub.f32 1.0, %v1885
  %v1887 = vmul.f32 %v1884, %v1886
  %v1888 = vadd.f32 %v1884, %v1887
  %vm1889 = vweird.f32 %v1883
  %vm1890 = vweird.f32 %v1884
  %vm1891 = vmor %vm1889, %vm1890
  %v1892 = vsel %vm1891, %v1884, %v1888
  %v1893 = vand.u32 2147483647, %v1883
  %vm1894 = vcmp.eq.f32.partialorder %v1893, 8.507059e+37
  %v1895 = vand.u32 %v1883, 2147483648
  %v1896 = vor.u32 1.1754944e-38, %v1895
  %v1897 = vsel %vm1894, %v1896, %v1892
  %v1898 = vmul.f32 1.0, %v1897
  %v1899 = vmul.f32 %v1898, %v1876
  %v1900 = vadd.f32 %v1845, %v1899
  %v1901 = vtanh.pop %v1900
  %v1902 = vsub.f32 1.0, %v1898
  %1904 = vrot.lane.b32.xlu0 %v1901, 64
  %v1905 = vpop.permute.xlu0 %1904
  %v1907 = vmul.f32 %v1902, %v1905
  %v1908 = vmul.f32 %v1898, %v1842
  %v1909 = vadd.f32 %v1907, %v1908
  %s1910 = scalar_lea.vmem [#allocation2], 32
  %v1911 = vld [vmem:[%s1910] sm:$0xff]
  %v1912 = vld [vmem:[%s1910 + $0x8] sm:$0xff]
  %v1913 = vpack.c.bf16 %v1909, %v1909
  %1915 = vrot.lane.b32.xlu0 %v1913, 64
  %v1916 = vpop.permute.xlu0 %1915
  %v1918 = vsel %vm718, %v1916, 0
  %1920 = vmatpush.bf16.msra.mxu0 0
  %1921 = vmatpush.bf16.msra.mxu0 0
  %1922 = vmatpush.bf16.msra.mxu0 0
  %1923 = vmatpush.bf16.msra.mxu0 0
  %1924 = vmatpush.bf16.msra.mxu0 %v1773
  %1925 = vmatpush.bf16.msra.mxu0 %v1771
  %1926 = vmatpush.bf16.msra.mxu0 %v1769
  %1927 = vmatpush.bf16.msra.mxu0 %v1767
  %1928 = vmatmul.bf16.gmra.mxu0 %v1918
  %v1929 = vpop.f32.mrf.mxu0
  %v1930 = vadd.f32 %v1739, %v1929
  %v1931 = vpop.f32.mrf.mxu0
  %1932 = vdwg.mxu0
  %1933 = vmatpush.bf16.msra.mxu0 0
  %1934 = vmatpush.bf16.msra.mxu0 0
  %1935 = vmatpush.bf16.msra.mxu0 0
  %1936 = vmatpush.bf16.msra.mxu0 0
  %1937 = vmatpush.bf16.msra.mxu0 %v1774
  %1938 = vmatpush.bf16.msra.mxu0 %v1772
  %1939 = vmatpush.bf16.msra.mxu0 %v1770
  %1940 = vmatpush.bf16.msra.mxu0 %v1768
  %1941 = vmatmul.bf16.gmra.mxu0 %v1918
  %v1942 = vpop.f32.mrf.mxu0
  %v1943 = vadd.f32 %v1740, %v1942
  %v1944 = vpop.f32.mrf.mxu0
  %1945 = vdwg.mxu0
  %v1946 = vadd.f32 %v1911, %v1930
  %v1947 = vxor.u32 %v1946, 2147483648
  %v1948 = vmul.f32 %v1947, 1.442695
  %v1949 = vpow.pop %v1948
  %v1950 = vadd.f32 %v1949, 1.0
  %v1951 = vrcp.pop %v1950
  %v1952 = vmul.f32 %v1950, %v1951
  %v1953 = vsub.f32 1.0, %v1952
  %v1954 = vmul.f32 %v1951, %v1953
  %v1955 = vadd.f32 %v1951, %v1954
  %vm1956 = vweird.f32 %v1950
  %vm1957 = vweird.f32 %v1951
  %vm1958 = vmor %vm1956, %vm1957
  %v1959 = vsel %vm1958, %v1951, %v1955
  %v1960 = vand.u32 2147483647, %v1950
  %vm1961 = vcmp.eq.f32.partialorder %v1960, 8.507059e+37
  %v1962 = vand.u32 %v1950, 2147483648
  %v1963 = vor.u32 1.1754944e-38, %v1962
  %v1964 = vsel %vm1961, %v1963, %v1959
  %v1965 = vmul.f32 1.0, %v1964
  %v1966 = vmul.f32 %v1965, %v1943
  %v1967 = vadd.f32 %v1912, %v1966
  %v1968 = vtanh.pop %v1967
  %v1969 = vsub.f32 1.0, %v1965
  %1971 = vrot.lane.b32.xlu0 %v1968, 64
  %v1972 = vpop.permute.xlu0 %1971
  %v1974 = vmul.f32 %v1969, %v1972
  %v1975 = vmul.f32 %v1965, %v1909
  %v1976 = vadd.f32 %v1974, %v1975
  %s1977 = scalar_lea.vmem [#allocation2], 48
  %v1978 = vld [vmem:[%s1977] sm:$0xff]
  %v1979 = vld [vmem:[%s1977 + $0x8] sm:$0xff]
  %v1980 = vpack.c.bf16 %v1976, %v1976
  %1982 = vrot.lane.b32.xlu0 %v1980, 64
  %v1983 = vpop.permute.xlu0 %1982
  %v1985 = vsel %vm718, %v1983, 0
  %1987 = vmatpush.bf16.msra.mxu0 0
  %1988 = vmatpush.bf16.msra.mxu0 0
  %1989 = vmatpush.bf16.msra.mxu0 0
  %1990 = vmatpush.bf16.msra.mxu0 0
  %1991 = vmatpush.bf16.msra.mxu0 %v1773
  %1992 = vmatpush.bf16.msra.mxu0 %v1771
  %1993 = vmatpush.bf16.msra.mxu0 %v1769
  %1994 = vmatpush.bf16.msra.mxu0 %v1767
  %1995 = vmatmul.bf16.gmra.mxu0 %v1985
  %v1996 = vpop.f32.mrf.mxu0
  %v1997 = vadd.f32 %v1739, %v1996
  %v1998 = vpop.f32.mrf.mxu0
  %1999 = vdwg.mxu0
  %2000 = vmatpush.bf16.msra.mxu0 0
  %2001 = vmatpush.bf16.msra.mxu0 0
  %2002 = vmatpush.bf16.msra.mxu0 0
  %2003 = vmatpush.bf16.msra.mxu0 0
  %2004 = vmatpush.bf16.msra.mxu0 %v1774
  %2005 = vmatpush.bf16.msra.mxu0 %v1772
  %2006 = vmatpush.bf16.msra.mxu0 %v1770
  %2007 = vmatpush.bf16.msra.mxu0 %v1768
  %2008 = vmatmul.bf16.gmra.mxu0 %v1985
  %v2009 = vpop.f32.mrf.mxu0
  %v2010 = vadd.f32 %v1740, %v2009
  %v2011 = vpop.f32.mrf.mxu0
  %2012 = vdwg.mxu0
  %v2013 = vadd.f32 %v1978, %v1997
  %v2014 = vxor.u32 %v2013, 2147483648
  %v2015 = vmul.f32 %v2014, 1.442695
  %v2016 = vpow.pop %v2015
  %v2017 = vadd.f32 %v2016, 1.0
  %v2018 = vrcp.pop %v2017
  %v2019 = vmul.f32 %v2017, %v2018
  %v2020 = vsub.f32 1.0, %v2019
  %v2021 = vmul.f32 %v2018, %v2020
  %v2022 = vadd.f32 %v2018, %v2021
  %vm2023 = vweird.f32 %v2017
  %vm2024 = vweird.f32 %v2018
  %vm2025 = vmor %vm2023, %vm2024
  %v2026 = vsel %vm2025, %v2018, %v2022
  %v2027 = vand.u32 2147483647, %v2017
  %vm2028 = vcmp.eq.f32.partialorder %v2027, 8.507059e+37
  %v2029 = vand.u32 %v2017, 2147483648
  %v2030 = vor.u32 1.1754944e-38, %v2029
  %v2031 = vsel %vm2028, %v2030, %v2026
  %v2032 = vmul.f32 1.0, %v2031
  %v2033 = vmul.f32 %v2032, %v2010
  %v2034 = vadd.f32 %v1979, %v2033
  %v2035 = vtanh.pop %v2034
  %v2036 = vsub.f32 1.0, %v2032
  %2038 = vrot.lane.b32.xlu0 %v2035, 64
  %v2039 = vpop.permute.xlu0 %2038
  %v2041 = vmul.f32 %v2036, %v2039
  %v2042 = vmul.f32 %v2032, %v1976
  %v2043 = vadd.f32 %v2041, %v2042
  %s2044 = scalar_lea.vmem [#allocation2], 64
  %v2045 = vld [vmem:[%s2044] sm:$0xff]
  %v2046 = vld [vmem:[%s2044 + $0x8] sm:$0xff]
  %v2047 = vpack.c.bf16 %v2043, %v2043
  %2049 = vrot.lane.b32.xlu0 %v2047, 64
  %v2050 = vpop.permute.xlu0 %2049
  %v2052 = vsel %vm718, %v2050, 0
  %2054 = vmatpush.bf16.msra.mxu0 0
  %2055 = vmatpush.bf16.msra.mxu0 0
  %2056 = vmatpush.bf16.msra.mxu0 0
  %2057 = vmatpush.bf16.msra.mxu0 0
  %2058 = vmatpush.bf16.msra.mxu0 %v1773
  %2059 = vmatpush.bf16.msra.mxu0 %v1771
  %2060 = vmatpush.bf16.msra.mxu0 %v1769
  %2061 = vmatpush.bf16.msra.mxu0 %v1767
  %2062 = vmatmul.bf16.gmra.mxu0 %v2052
  %v2063 = vpop.f32.mrf.mxu0
  %v2064 = vadd.f32 %v1739, %v2063
  %v2065 = vpop.f32.mrf.mxu0
  %2066 = vdwg.mxu0
  %2067 = vmatpush.bf16.msra.mxu0 0
  %2068 = vmatpush.bf16.msra.mxu0 0
  %2069 = vmatpush.bf16.msra.mxu0 0
  %2070 = vmatpush.bf16.msra.mxu0 0
  %2071 = vmatpush.bf16.msra.mxu0 %v1774
  %2072 = vmatpush.bf16.msra.mxu0 %v1772
  %2073 = vmatpush.bf16.msra.mxu0 %v1770
  %2074 = vmatpush.bf16.msra.mxu0 %v1768
  %2075 = vmatmul.bf16.gmra.mxu0 %v2052
  %v2076 = vpop.f32.mrf.mxu0
  %v2077 = vadd.f32 %v1740, %v2076
  %v2078 = vpop.f32.mrf.mxu0
  %2079 = vdwg.mxu0
  %v2080 = vadd.f32 %v2045, %v2064
  %v2081 = vxor.u32 %v2080, 2147483648
  %v2082 = vmul.f32 %v2081, 1.442695
  %v2083 = vpow.pop %v2082
  %v2084 = vadd.f32 %v2083, 1.0
  %v2085 = vrcp.pop %v2084
  %v2086 = vmul.f32 %v2084, %v2085
  %v2087 = vsub.f32 1.0, %v2086
  %v2088 = vmul.f32 %v2085, %v2087
  %v2089 = vadd.f32 %v2085, %v2088
  %vm2090 = vweird.f32 %v2084
  %vm2091 = vweird.f32 %v2085
  %vm2092 = vmor %vm2090, %vm2091
  %v2093 = vsel %vm2092, %v2085, %v2089
  %v2094 = vand.u32 2147483647, %v2084
  %vm2095 = vcmp.eq.f32.partialorder %v2094, 8.507059e+37
  %v2096 = vand.u32 %v2084, 2147483648
  %v2097 = vor.u32 1.1754944e-38, %v2096
  %v2098 = vsel %vm2095, %v2097, %v2093
  %v2099 = vmul.f32 1.0, %v2098
  %v2100 = vmul.f32 %v2099, %v2077
  %v2101 = vadd.f32 %v2046, %v2100
  %v2102 = vtanh.pop %v2101
  %v2103 = vsub.f32 1.0, %v2099
  %2105 = vrot.lane.b32.xlu0 %v2102, 64
  %v2106 = vpop.permute.xlu0 %2105
  %v2108 = vmul.f32 %v2103, %v2106
  %v2109 = vmul.f32 %v2099, %v2043
  %v2110 = vadd.f32 %v2108, %v2109
  %s2111 = scalar_lea.vmem [#allocation2], 80
  %v2112 = vld [vmem:[%s2111] sm:$0xff]
  %v2113 = vld [vmem:[%s2111 + $0x8] sm:$0xff]
  %v2114 = vpack.c.bf16 %v2110, %v2110
  %2116 = vrot.lane.b32.xlu0 %v2114, 64
  %v2117 = vpop.permute.xlu0 %2116
  %v2119 = vsel %vm718, %v2117, 0
  %2121 = vmatpush.bf16.msra.mxu0 0
  %2122 = vmatpush.bf16.msra.mxu0 0
  %2123 = vmatpush.bf16.msra.mxu0 0
  %2124 = vmatpush.bf16.msra.mxu0 0
  %2125 = vmatpush.bf16.msra.mxu0 %v1773
  %2126 = vmatpush.bf16.msra.mxu0 %v1771
  %2127 = vmatpush.bf16.msra.mxu0 %v1769
  %2128 = vmatpush.bf16.msra.mxu0 %v1767
  %2129 = vmatmul.bf16.gmra.mxu0 %v2119
  %v2130 = vpop.f32.mrf.mxu0
  %v2131 = vadd.f32 %v1739, %v2130
  %v2132 = vpop.f32.mrf.mxu0
  %2133 = vdwg.mxu0
  %2134 = vmatpush.bf16.msra.mxu0 0
  %2135 = vmatpush.bf16.msra.mxu0 0
  %2136 = vmatpush.bf16.msra.mxu0 0
  %2137 = vmatpush.bf16.msra.mxu0 0
  %2138 = vmatpush.bf16.msra.mxu0 %v1774
  %2139 = vmatpush.bf16.msra.mxu0 %v1772
  %2140 = vmatpush.bf16.msra.mxu0 %v1770
  %2141 = vmatpush.bf16.msra.mxu0 %v1768
  %2142 = vmatmul.bf16.gmra.mxu0 %v2119
  %v2143 = vpop.f32.mrf.mxu0
  %v2144 = vadd.f32 %v1740, %v2143
  %v2145 = vpop.f32.mrf.mxu0
  %2146 = vdwg.mxu0
  %v2147 = vadd.f32 %v2112, %v2131
  %v2148 = vxor.u32 %v2147, 2147483648
  %v2149 = vmul.f32 %v2148, 1.442695
  %v2150 = vpow.pop %v2149
  %v2151 = vadd.f32 %v2150, 1.0
  %v2152 = vrcp.pop %v2151
  %v2153 = vmul.f32 %v2151, %v2152
  %v2154 = vsub.f32 1.0, %v2153
  %v2155 = vmul.f32 %v2152, %v2154
  %v2156 = vadd.f32 %v2152, %v2155
  %vm2157 = vweird.f32 %v2151
  %vm2158 = vweird.f32 %v2152
  %vm2159 = vmor %vm2157, %vm2158
  %v2160 = vsel %vm2159, %v2152, %v2156
  %v2161 = vand.u32 2147483647, %v2151
  %vm2162 = vcmp.eq.f32.partialorder %v2161, 8.507059e+37
  %v2163 = vand.u32 %v2151, 2147483648
  %v2164 = vor.u32 1.1754944e-38, %v2163
  %v2165 = vsel %vm2162, %v2164, %v2160
  %v2166 = vmul.f32 1.0, %v2165
  %v2167 = vmul.f32 %v2166, %v2144
  %v2168 = vadd.f32 %v2113, %v2167
  %v2169 = vtanh.pop %v2168
  %v2170 = vsub.f32 1.0, %v2166
  %2172 = vrot.lane.b32.xlu0 %v2169, 64
  %v2173 = vpop.permute.xlu0 %2172
  %v2175 = vmul.f32 %v2170, %v2173
  %v2176 = vmul.f32 %v2166, %v2110
  %v2177 = vadd.f32 %v2175, %v2176
  %s2178 = scalar_lea.vmem [#allocation2], 96
  %v2179 = vld [vmem:[%s2178] sm:$0xff]
  %v2180 = vld [vmem:[%s2178 + $0x8] sm:$0xff]
  %v2181 = vpack.c.bf16 %v2177, %v2177
  %2183 = vrot.lane.b32.xlu0 %v2181, 64
  %v2184 = vpop.permute.xlu0 %2183
  %v2186 = vsel %vm718, %v2184, 0
  %2188 = vmatpush.bf16.msra.mxu0 0
  %2189 = vmatpush.bf16.msra.mxu0 0
  %2190 = vmatpush.bf16.msra.mxu0 0
  %2191 = vmatpush.bf16.msra.mxu0 0
  %2192 = vmatpush.bf16.msra.mxu0 %v1773
  %2193 = vmatpush.bf16.msra.mxu0 %v1771
  %2194 = vmatpush.bf16.msra.mxu0 %v1769
  %2195 = vmatpush.bf16.msra.mxu0 %v1767
  %2196 = vmatmul.bf16.gmra.mxu0 %v2186
  %v2197 = vpop.f32.mrf.mxu0
  %v2198 = vadd.f32 %v1739, %v2197
  %v2199 = vpop.f32.mrf.mxu0
  %2200 = vdwg.mxu0
  %2201 = vmatpush.bf16.msra.mxu0 0
  %2202 = vmatpush.bf16.msra.mxu0 0
  %2203 = vmatpush.bf16.msra.mxu0 0
  %2204 = vmatpush.bf16.msra.mxu0 0
  %2205 = vmatpush.bf16.msra.mxu0 %v1774
  %2206 = vmatpush.bf16.msra.mxu0 %v1772
  %2207 = vmatpush.bf16.msra.mxu0 %v1770
  %2208 = vmatpush.bf16.msra.mxu0 %v1768
  %2209 = vmatmul.bf16.gmra.mxu0 %v2186
  %v2210 = vpop.f32.mrf.mxu0
  %v2211 = vadd.f32 %v1740, %v2210
  %v2212 = vpop.f32.mrf.mxu0
  %2213 = vdwg.mxu0
  %v2214 = vadd.f32 %v2179, %v2198
  %v2215 = vxor.u32 %v2214, 2147483648
  %v2216 = vmul.f32 %v2215, 1.442695
  %v2217 = vpow.pop %v2216
  %v2218 = vadd.f32 %v2217, 1.0
  %v2219 = vrcp.pop %v2218
  %v2220 = vmul.f32 %v2218, %v2219
  %v2221 = vsub.f32 1.0, %v2220
  %v2222 = vmul.f32 %v2219, %v2221
  %v2223 = vadd.f32 %v2219, %v2222
  %vm2224 = vweird.f32 %v2218
  %vm2225 = vweird.f32 %v2219
  %vm2226 = vmor %vm2224, %vm2225
  %v2227 = vsel %vm2226, %v2219, %v2223
  %v2228 = vand.u32 2147483647, %v2218
  %vm2229 = vcmp.eq.f32.partialorder %v2228, 8.507059e+37
  %v2230 = vand.u32 %v2218, 2147483648
  %v2231 = vor.u32 1.1754944e-38, %v2230
  %v2232 = vsel %vm2229, %v2231, %v2227
  %v2233 = vmul.f32 1.0, %v2232
  %v2234 = vmul.f32 %v2233, %v2211
  %v2235 = vadd.f32 %v2180, %v2234
  %v2236 = vtanh.pop %v2235
  %v2237 = vsub.f32 1.0, %v2233
  %2239 = vrot.lane.b32.xlu0 %v2236, 64
  %v2240 = vpop.permute.xlu0 %2239
  %v2242 = vmul.f32 %v2237, %v2240
  %v2243 = vmul.f32 %v2233, %v2177
  %v2244 = vadd.f32 %v2242, %v2243
  %s2245 = scalar_lea.vmem [#allocation2], 112
  %v2246 = vld [vmem:[%s2245] sm:$0xff]
  %v2247 = vld [vmem:[%s2245 + $0x8] sm:$0xff]
  %v2248 = vpack.c.bf16 %v2244, %v2244
  %2250 = vrot.lane.b32.xlu0 %v2248, 64
  %v2251 = vpop.permute.xlu0 %2250
  %v2253 = vsel %vm718, %v2251, 0
  %2255 = vmatpush.bf16.msra.mxu0 0
  %2256 = vmatpush.bf16.msra.mxu0 0
  %2257 = vmatpush.bf16.msra.mxu0 0
  %2258 = vmatpush.bf16.msra.mxu0 0
  %2259 = vmatpush.bf16.msra.mxu0 %v1773
  %2260 = vmatpush.bf16.msra.mxu0 %v1771
  %2261 = vmatpush.bf16.msra.mxu0 %v1769
  %2262 = vmatpush.bf16.msra.mxu0 %v1767
  %2263 = vmatmul.bf16.gmra.mxu0 %v2253
  %v2264 = vpop.f32.mrf.mxu0
  %v2265 = vadd.f32 %v1739, %v2264
  %v2266 = vpop.f32.mrf.mxu0
  %2267 = vdwg.mxu0
  %2268 = vmatpush.bf16.msra.mxu0 0
  %2269 = vmatpush.bf16.msra.mxu0 0
  %2270 = vmatpush.bf16.msra.mxu0 0
  %2271 = vmatpush.bf16.msra.mxu0 0
  %2272 = vmatpush.bf16.msra.mxu0 %v1774
  %2273 = vmatpush.bf16.msra.mxu0 %v1772
  %2274 = vmatpush.bf16.msra.mxu0 %v1770
  %2275 = vmatpush.bf16.msra.mxu0 %v1768
  %2276 = vmatmul.bf16.gmra.mxu0 %v2253
  %v2277 = vpop.f32.mrf.mxu0
  %v2278 = vadd.f32 %v1740, %v2277
  %v2279 = vpop.f32.mrf.mxu0
  %2280 = vdwg.mxu0
  %v2281 = vadd.f32 %v2246, %v2265
  %v2282 = vxor.u32 %v2281, 2147483648
  %v2283 = vmul.f32 %v2282, 1.442695
  %v2284 = vpow.pop %v2283
  %v2285 = vadd.f32 %v2284, 1.0
  %v2286 = vrcp.pop %v2285
  %v2287 = vmul.f32 %v2285, %v2286
  %v2288 = vsub.f32 1.0, %v2287
  %v2289 = vmul.f32 %v2286, %v2288
  %v2290 = vadd.f32 %v2286, %v2289
  %vm2291 = vweird.f32 %v2285
  %vm2292 = vweird.f32 %v2286
  %vm2293 = vmor %vm2291, %vm2292
  %v2294 = vsel %vm2293, %v2286, %v2290
  %v2295 = vand.u32 2147483647, %v2285
  %vm2296 = vcmp.eq.f32.partialorder %v2295, 8.507059e+37
  %v2297 = vand.u32 %v2285, 2147483648
  %v2298 = vor.u32 1.1754944e-38, %v2297
  %v2299 = vsel %vm2296, %v2298, %v2294
  %v2300 = vmul.f32 1.0, %v2299
  %v2301 = vmul.f32 %v2300, %v2278
  %v2302 = vadd.f32 %v2247, %v2301
  %v2303 = vtanh.pop %v2302
  %v2304 = vsub.f32 1.0, %v2300
  %2306 = vrot.lane.b32.xlu0 %v2303, 64
  %v2307 = vpop.permute.xlu0 %2306
  %v2309 = vmul.f32 %v2304, %v2307
  %v2310 = vmul.f32 %v2300, %v2244
  %v2311 = vadd.f32 %v2309, %v2310
  %s2312 = scalar_lea.vmem [#allocation2], 128
  %v2313 = vld [vmem:[%s2312] sm:$0xff]
  %v2314 = vld [vmem:[%s2312 + $0x8] sm:$0xff]
  %v2315 = vpack.c.bf16 %v2311, %v2311
  %2317 = vrot.lane.b32.xlu0 %v2315, 64
  %v2318 = vpop.permute.xlu0 %2317
  %v2320 = vsel %vm718, %v2318, 0
  %2322 = vmatpush.bf16.msra.mxu0 0
  %2323 = vmatpush.bf16.msra.mxu0 0
  %2324 = vmatpush.bf16.msra.mxu0 0
  %2325 = vmatpush.bf16.msra.mxu0 0
  %2326 = vmatpush.bf16.msra.mxu0 %v1773
  %2327 = vmatpush.bf16.msra.mxu0 %v1771
  %2328 = vmatpush.bf16.msra.mxu0 %v1769
  %2329 = vmatpush.bf16.msra.mxu0 %v1767
  %2330 = vmatmul.bf16.gmra.mxu0 %v2320
  %v2331 = vpop.f32.mrf.mxu0
  %v2332 = vadd.f32 %v1739, %v2331
  %v2333 = vpop.f32.mrf.mxu0
  %2334 = vdwg.mxu0
  %2335 = vmatpush.bf16.msra.mxu0 0
  %2336 = vmatpush.bf16.msra.mxu0 0
  %2337 = vmatpush.bf16.msra.mxu0 0
  %2338 = vmatpush.bf16.msra.mxu0 0
  %2339 = vmatpush.bf16.msra.mxu0 %v1774
  %2340 = vmatpush.bf16.msra.mxu0 %v1772
  %2341 = vmatpush.bf16.msra.mxu0 %v1770
  %2342 = vmatpush.bf16.msra.mxu0 %v1768
  %2343 = vmatmul.bf16.gmra.mxu0 %v2320
  %v2344 = vpop.f32.mrf.mxu0
  %v2345 = vadd.f32 %v1740, %v2344
  %v2346 = vpop.f32.mrf.mxu0
  %2347 = vdwg.mxu0
  %v2348 = vadd.f32 %v2313, %v2332
  %v2349 = vxor.u32 %v2348, 2147483648
  %v2350 = vmul.f32 %v2349, 1.442695
  %v2351 = vpow.pop %v2350
  %v2352 = vadd.f32 %v2351, 1.0
  %v2353 = vrcp.pop %v2352
  %v2354 = vmul.f32 %v2352, %v2353
  %v2355 = vsub.f32 1.0, %v2354
  %v2356 = vmul.f32 %v2353, %v2355
  %v2357 = vadd.f32 %v2353, %v2356
  %vm2358 = vweird.f32 %v2352
  %vm2359 = vweird.f32 %v2353
  %vm2360 = vmor %vm2358, %vm2359
  %v2361 = vsel %vm2360, %v2353, %v2357
  %v2362 = vand.u32 2147483647, %v2352
  %vm2363 = vcmp.eq.f32.partialorder %v2362, 8.507059e+37
  %v2364 = vand.u32 %v2352, 2147483648
  %v2365 = vor.u32 1.1754944e-38, %v2364
  %v2366 = vsel %vm2363, %v2365, %v2361
  %v2367 = vmul.f32 1.0, %v2366
  %v2368 = vmul.f32 %v2367, %v2345
  %v2369 = vadd.f32 %v2314, %v2368
  %v2370 = vtanh.pop %v2369
  %v2371 = vsub.f32 1.0, %v2367
  %2373 = vrot.lane.b32.xlu0 %v2370, 64
  %v2374 = vpop.permute.xlu0 %2373
  %v2376 = vmul.f32 %v2371, %v2374
  %v2377 = vmul.f32 %v2367, %v2311
  %v2378 = vadd.f32 %v2376, %v2377
  %s2379 = scalar_lea.vmem [#allocation2], 144
  %v2380 = vld [vmem:[%s2379] sm:$0xff]
  %v2381 = vld [vmem:[%s2379 + $0x8] sm:$0xff]
  %v2382 = vpack.c.bf16 %v2378, %v2378
  %2384 = vrot.lane.b32.xlu0 %v2382, 64
  %v2385 = vpop.permute.xlu0 %2384
  %v2387 = vsel %vm718, %v2385, 0
  %2389 = vmatpush.bf16.msra.mxu0 0
  %2390 = vmatpush.bf16.msra.mxu0 0
  %2391 = vmatpush.bf16.msra.mxu0 0
  %2392 = vmatpush.bf16.msra.mxu0 0
  %2393 = vmatpush.bf16.msra.mxu0 %v1773
  %2394 = vmatpush.bf16.msra.mxu0 %v1771
  %2395 = vmatpush.bf16.msra.mxu0 %v1769
  %2396 = vmatpush.bf16.msra.mxu0 %v1767
  %2397 = vmatmul.bf16.gmra.mxu0 %v2387
  %v2398 = vpop.f32.mrf.mxu0
  %v2399 = vadd.f32 %v1739, %v2398
  %v2400 = vpop.f32.mrf.mxu0
  %2401 = vdwg.mxu0
  %2402 = vmatpush.bf16.msra.mxu0 0
  %2403 = vmatpush.bf16.msra.mxu0 0
  %2404 = vmatpush.bf16.msra.mxu0 0
  %2405 = vmatpush.bf16.msra.mxu0 0
  %2406 = vmatpush.bf16.msra.mxu0 %v1774
  %2407 = vmatpush.bf16.msra.mxu0 %v1772
  %2408 = vmatpush.bf16.msra.mxu0 %v1770
  %2409 = vmatpush.bf16.msra.mxu0 %v1768
  %2410 = vmatmul.bf16.gmra.mxu0 %v2387
  %v2411 = vpop.f32.mrf.mxu0
  %v2412 = vadd.f32 %v1740, %v2411
  %v2413 = vpop.f32.mrf.mxu0
  %2414 = vdwg.mxu0
  %v2415 = vadd.f32 %v2380, %v2399
  %v2416 = vxor.u32 %v2415, 2147483648
  %v2417 = vmul.f32 %v2416, 1.442695
  %v2418 = vpow.pop %v2417
  %v2419 = vadd.f32 %v2418, 1.0
  %v2420 = vrcp.pop %v2419
  %v2421 = vmul.f32 %v2419, %v2420
  %v2422 = vsub.f32 1.0, %v2421
  %v2423 = vmul.f32 %v2420, %v2422
  %v2424 = vadd.f32 %v2420, %v2423
  %vm2425 = vweird.f32 %v2419
  %vm2426 = vweird.f32 %v2420
  %vm2427 = vmor %vm2425, %vm2426
  %v2428 = vsel %vm2427, %v2420, %v2424
  %v2429 = vand.u32 2147483647, %v2419
  %vm2430 = vcmp.eq.f32.partialorder %v2429, 8.507059e+37
  %v2431 = vand.u32 %v2419, 2147483648
  %v2432 = vor.u32 1.1754944e-38, %v2431
  %v2433 = vsel %vm2430, %v2432, %v2428
  %v2434 = vmul.f32 1.0, %v2433
  %v2435 = vmul.f32 %v2434, %v2412
  %v2436 = vadd.f32 %v2381, %v2435
  %v2437 = vtanh.pop %v2436
  %v2438 = vsub.f32 1.0, %v2434
  %2440 = vrot.lane.b32.xlu0 %v2437, 64
  %v2441 = vpop.permute.xlu0 %2440
  %v2443 = vmul.f32 %v2438, %v2441
  %v2444 = vmul.f32 %v2434, %v2378
  %v2445 = vadd.f32 %v2443, %v2444
  %s2446 = scalar_lea.vmem [#allocation2], 160
  %v2447 = vld [vmem:[%s2446] sm:$0xff]
  %v2448 = vld [vmem:[%s2446 + $0x8] sm:$0xff]
  %v2449 = vpack.c.bf16 %v2445, %v2445
  %2451 = vrot.lane.b32.xlu0 %v2449, 64
  %v2452 = vpop.permute.xlu0 %2451
  %v2454 = vsel %vm718, %v2452, 0
  %2456 = vmatpush.bf16.msra.mxu0 0
  %2457 = vmatpush.bf16.msra.mxu0 0
  %2458 = vmatpush.bf16.msra.mxu0 0
  %2459 = vmatpush.bf16.msra.mxu0 0
  %2460 = vmatpush.bf16.msra.mxu0 %v1773
  %2461 = vmatpush.bf16.msra.mxu0 %v1771
  %2462 = vmatpush.bf16.msra.mxu0 %v1769
  %2463 = vmatpush.bf16.msra.mxu0 %v1767
  %2464 = vmatmul.bf16.gmra.mxu0 %v2454
  %v2465 = vpop.f32.mrf.mxu0
  %v2466 = vadd.f32 %v1739, %v2465
  %v2467 = vpop.f32.mrf.mxu0
  %2468 = vdwg.mxu0
  %2469 = vmatpush.bf16.msra.mxu0 0
  %2470 = vmatpush.bf16.msra.mxu0 0
  %2471 = vmatpush.bf16.msra.mxu0 0
  %2472 = vmatpush.bf16.msra.mxu0 0
  %2473 = vmatpush.bf16.msra.mxu0 %v1774
  %2474 = vmatpush.bf16.msra.mxu0 %v1772
  %2475 = vmatpush.bf16.msra.mxu0 %v1770
  %2476 = vmatpush.bf16.msra.mxu0 %v1768
  %2477 = vmatmul.bf16.gmra.mxu0 %v2454
  %v2478 = vpop.f32.mrf.mxu0
  %v2479 = vadd.f32 %v1740, %v2478
  %v2480 = vpop.f32.mrf.mxu0
  %2481 = vdwg.mxu0
  %v2482 = vadd.f32 %v2447, %v2466
  %v2483 = vxor.u32 %v2482, 2147483648
  %v2484 = vmul.f32 %v2483, 1.442695
  %v2485 = vpow.pop %v2484
  %v2486 = vadd.f32 %v2485, 1.0
  %v2487 = vrcp.pop %v2486
  %v2488 = vmul.f32 %v2486, %v2487
  %v2489 = vsub.f32 1.0, %v2488
  %v2490 = vmul.f32 %v2487, %v2489
  %v2491 = vadd.f32 %v2487, %v2490
  %vm2492 = vweird.f32 %v2486
  %vm2493 = vweird.f32 %v2487
  %vm2494 = vmor %vm2492, %vm2493
  %v2495 = vsel %vm2494, %v2487, %v2491
  %v2496 = vand.u32 2147483647, %v2486
  %vm2497 = vcmp.eq.f32.partialorder %v2496, 8.507059e+37
  %v2498 = vand.u32 %v2486, 2147483648
  %v2499 = vor.u32 1.1754944e-38, %v2498
  %v2500 = vsel %vm2497, %v2499, %v2495
  %v2501 = vmul.f32 1.0, %v2500
  %v2502 = vmul.f32 %v2501, %v2479
  %v2503 = vadd.f32 %v2448, %v2502
  %v2504 = vtanh.pop %v2503
  %v2505 = vsub.f32 1.0, %v2501
  %2507 = vrot.lane.b32.xlu0 %v2504, 64
  %v2508 = vpop.permute.xlu0 %2507
  %v2510 = vmul.f32 %v2505, %v2508
  %v2511 = vmul.f32 %v2501, %v2445
  %v2512 = vadd.f32 %v2510, %v2511
  %s2513 = scalar_lea.vmem [#allocation2], 176
  %v2514 = vld [vmem:[%s2513] sm:$0xff]
  %v2515 = vld [vmem:[%s2513 + $0x8] sm:$0xff]
  %v2516 = vpack.c.bf16 %v2512, %v2512
  %2518 = vrot.lane.b32.xlu0 %v2516, 64
  %v2519 = vpop.permute.xlu0 %2518
  %v2521 = vsel %vm718, %v2519, 0
  %2523 = vmatpush.bf16.msra.mxu0 0
  %2524 = vmatpush.bf16.msra.mxu0 0
  %2525 = vmatpush.bf16.msra.mxu0 0
  %2526 = vmatpush.bf16.msra.mxu0 0
  %2527 = vmatpush.bf16.msra.mxu0 %v1773
  %2528 = vmatpush.bf16.msra.mxu0 %v1771
  %2529 = vmatpush.bf16.msra.mxu0 %v1769
  %2530 = vmatpush.bf16.msra.mxu0 %v1767
  %2531 = vmatmul.bf16.gmra.mxu0 %v2521
  %v2532 = vpop.f32.mrf.mxu0
  %v2533 = vadd.f32 %v1739, %v2532
  %v2534 = vpop.f32.mrf.mxu0
  %2535 = vdwg.mxu0
  %2536 = vmatpush.bf16.msra.mxu0 0
  %2537 = vmatpush.bf16.msra.mxu0 0
  %2538 = vmatpush.bf16.msra.mxu0 0
  %2539 = vmatpush.bf16.msra.mxu0 0
  %2540 = vmatpush.bf16.msra.mxu0 %v1774
  %2541 = vmatpush.bf16.msra.mxu0 %v1772
  %2542 = vmatpush.bf16.msra.mxu0 %v1770
  %2543 = vmatpush.bf16.msra.mxu0 %v1768
  %2544 = vmatmul.bf16.gmra.mxu0 %v2521
  %v2545 = vpop.f32.mrf.mxu0
  %v2546 = vadd.f32 %v1740, %v2545
  %v2547 = vpop.f32.mrf.mxu0
  %2548 = vdwg.mxu0
  %v2549 = vadd.f32 %v2514, %v2533
  %v2550 = vxor.u32 %v2549, 2147483648
  %v2551 = vmul.f32 %v2550, 1.442695
  %v2552 = vpow.pop %v2551
  %v2553 = vadd.f32 %v2552, 1.0
  %v2554 = vrcp.pop %v2553
  %v2555 = vmul.f32 %v2553, %v2554
  %v2556 = vsub.f32 1.0, %v2555
  %v2557 = vmul.f32 %v2554, %v2556
  %v2558 = vadd.f32 %v2554, %v2557
  %vm2559 = vweird.f32 %v2553
  %vm2560 = vweird.f32 %v2554
  %vm2561 = vmor %vm2559, %vm2560
  %v2562 = vsel %vm2561, %v2554, %v2558
  %v2563 = vand.u32 2147483647, %v2553
  %vm2564 = vcmp.eq.f32.partialorder %v2563, 8.507059e+37
  %v2565 = vand.u32 %v2553, 2147483648
  %v2566 = vor.u32 1.1754944e-38, %v2565
  %v2567 = vsel %vm2564, %v2566, %v2562
  %v2568 = vmul.f32 1.0, %v2567
  %v2569 = vmul.f32 %v2568, %v2546
  %v2570 = vadd.f32 %v2515, %v2569
  %v2571 = vtanh.pop %v2570
  %v2572 = vsub.f32 1.0, %v2568
  %2574 = vrot.lane.b32.xlu0 %v2571, 64
  %v2575 = vpop.permute.xlu0 %2574
  %v2577 = vmul.f32 %v2572, %v2575
  %v2578 = vmul.f32 %v2568, %v2512
  %v2579 = vadd.f32 %v2577, %v2578
  %s2580 = scalar_lea.vmem [#allocation2], 192
  %v2581 = vld [vmem:[%s2580] sm:$0xff]
  %v2582 = vld [vmem:[%s2580 + $0x8] sm:$0xff]
  %v2583 = vpack.c.bf16 %v2579, %v2579
  %2585 = vrot.lane.b32.xlu0 %v2583, 64
  %v2586 = vpop.permute.xlu0 %2585
  %v2588 = vsel %vm718, %v2586, 0
  %2590 = vmatpush.bf16.msra.mxu0 0
  %2591 = vmatpush.bf16.msra.mxu0 0
  %2592 = vmatpush.bf16.msra.mxu0 0
  %2593 = vmatpush.bf16.msra.mxu0 0
  %2594 = vmatpush.bf16.msra.mxu0 %v1773
  %2595 = vmatpush.bf16.msra.mxu0 %v1771
  %2596 = vmatpush.bf16.msra.mxu0 %v1769
  %2597 = vmatpush.bf16.msra.mxu0 %v1767
  %2598 = vmatmul.bf16.gmra.mxu0 %v2588
  %v2599 = vpop.f32.mrf.mxu0
  %v2600 = vadd.f32 %v1739, %v2599
  %v2601 = vpop.f32.mrf.mxu0
  %2602 = vdwg.mxu0
  %2603 = vmatpush.bf16.msra.mxu0 0
  %2604 = vmatpush.bf16.msra.mxu0 0
  %2605 = vmatpush.bf16.msra.mxu0 0
  %2606 = vmatpush.bf16.msra.mxu0 0
  %2607 = vmatpush.bf16.msra.mxu0 %v1774
  %2608 = vmatpush.bf16.msra.mxu0 %v1772
  %2609 = vmatpush.bf16.msra.mxu0 %v1770
  %2610 = vmatpush.bf16.msra.mxu0 %v1768
  %2611 = vmatmul.bf16.gmra.mxu0 %v2588
  %v2612 = vpop.f32.mrf.mxu0
  %v2613 = vadd.f32 %v1740, %v2612
  %v2614 = vpop.f32.mrf.mxu0
  %2615 = vdwg.mxu0
  %v2616 = vadd.f32 %v2581, %v2600
  %v2617 = vxor.u32 %v2616, 2147483648
  %v2618 = vmul.f32 %v2617, 1.442695
  %v2619 = vpow.pop %v2618
  %v2620 = vadd.f32 %v2619, 1.0
  %v2621 = vrcp.pop %v2620
  %v2622 = vmul.f32 %v2620, %v2621
  %v2623 = vsub.f32 1.0, %v2622
  %v2624 = vmul.f32 %v2621, %v2623
  %v2625 = vadd.f32 %v2621, %v2624
  %vm2626 = vweird.f32 %v2620
  %vm2627 = vweird.f32 %v2621
  %vm2628 = vmor %vm2626, %vm2627
  %v2629 = vsel %vm2628, %v2621, %v2625
  %v2630 = vand.u32 2147483647, %v2620
  %vm2631 = vcmp.eq.f32.partialorder %v2630, 8.507059e+37
  %v2632 = vand.u32 %v2620, 2147483648
  %v2633 = vor.u32 1.1754944e-38, %v2632
  %v2634 = vsel %vm2631, %v2633, %v2629
  %v2635 = vmul.f32 1.0, %v2634
  %v2636 = vmul.f32 %v2635, %v2613
  %v2637 = vadd.f32 %v2582, %v2636
  %v2638 = vtanh.pop %v2637
  %v2639 = vsub.f32 1.0, %v2635
  %2641 = vrot.lane.b32.xlu0 %v2638, 64
  %v2642 = vpop.permute.xlu0 %2641
  %v2644 = vmul.f32 %v2639, %v2642
  %v2645 = vmul.f32 %v2635, %v2579
  %v2646 = vadd.f32 %v2644, %v2645
  %s2647 = scalar_lea.vmem [#allocation2], 208
  %v2648 = vld [vmem:[%s2647] sm:$0xff]
  %v2649 = vld [vmem:[%s2647 + $0x8] sm:$0xff]
  %v2650 = vpack.c.bf16 %v2646, %v2646
  %2652 = vrot.lane.b32.xlu0 %v2650, 64
  %v2653 = vpop.permute.xlu0 %2652
  %v2655 = vsel %vm718, %v2653, 0
  %2657 = vmatpush.bf16.msra.mxu0 0
  %2658 = vmatpush.bf16.msra.mxu0 0
  %2659 = vmatpush.bf16.msra.mxu0 0
  %2660 = vmatpush.bf16.msra.mxu0 0
  %2661 = vmatpush.bf16.msra.mxu0 %v1773
  %2662 = vmatpush.bf16.msra.mxu0 %v1771
  %2663 = vmatpush.bf16.msra.mxu0 %v1769
  %2664 = vmatpush.bf16.msra.mxu0 %v1767
  %2665 = vmatmul.bf16.gmra.mxu0 %v2655
  %v2666 = vpop.f32.mrf.mxu0
  %v2667 = vadd.f32 %v1739, %v2666
  %v2668 = vpop.f32.mrf.mxu0
  %2669 = vdwg.mxu0
  %2670 = vmatpush.bf16.msra.mxu0 0
  %2671 = vmatpush.bf16.msra.mxu0 0
  %2672 = vmatpush.bf16.msra.mxu0 0
  %2673 = vmatpush.bf16.msra.mxu0 0
  %2674 = vmatpush.bf16.msra.mxu0 %v1774
  %2675 = vmatpush.bf16.msra.mxu0 %v1772
  %2676 = vmatpush.bf16.msra.mxu0 %v1770
  %2677 = vmatpush.bf16.msra.mxu0 %v1768
  %2678 = vmatmul.bf16.gmra.mxu0 %v2655
  %v2679 = vpop.f32.mrf.mxu0
  %v2680 = vadd.f32 %v1740, %v2679
  %v2681 = vpop.f32.mrf.mxu0
  %2682 = vdwg.mxu0
  %v2683 = vadd.f32 %v2648, %v2667
  %v2684 = vxor.u32 %v2683, 2147483648
  %v2685 = vmul.f32 %v2684, 1.442695
  %v2686 = vpow.pop %v2685
  %v2687 = vadd.f32 %v2686, 1.0
  %v2688 = vrcp.pop %v2687
  %v2689 = vmul.f32 %v2687, %v2688
  %v2690 = vsub.f32 1.0, %v2689
  %v2691 = vmul.f32 %v2688, %v2690
  %v2692 = vadd.f32 %v2688, %v2691
  %vm2693 = vweird.f32 %v2687
  %vm2694 = vweird.f32 %v2688
  %vm2695 = vmor %vm2693, %vm2694
  %v2696 = vsel %vm2695, %v2688, %v2692
  %v2697 = vand.u32 2147483647, %v2687
  %vm2698 = vcmp.eq.f32.partialorder %v2697, 8.507059e+37
  %v2699 = vand.u32 %v2687, 2147483648
  %v2700 = vor.u32 1.1754944e-38, %v2699
  %v2701 = vsel %vm2698, %v2700, %v2696
  %v2702 = vmul.f32 1.0, %v2701
  %v2703 = vmul.f32 %v2702, %v2680
  %v2704 = vadd.f32 %v2649, %v2703
  %v2705 = vtanh.pop %v2704
  %v2706 = vsub.f32 1.0, %v2702
  %2708 = vrot.lane.b32.xlu0 %v2705, 64
  %v2709 = vpop.permute.xlu0 %2708
  %v2711 = vmul.f32 %v2706, %v2709
  %v2712 = vmul.f32 %v2702, %v2646
  %v2713 = vadd.f32 %v2711, %v2712
  %s2714 = scalar_lea.vmem [#allocation2], 224
  %v2715 = vld [vmem:[%s2714] sm:$0xff]
  %v2716 = vld [vmem:[%s2714 + $0x8] sm:$0xff]
  %v2717 = vpack.c.bf16 %v2713, %v2713
  %2719 = vrot.lane.b32.xlu0 %v2717, 64
  %v2720 = vpop.permute.xlu0 %2719
  %v2722 = vsel %vm718, %v2720, 0
  %2724 = vmatpush.bf16.msra.mxu0 0
  %2725 = vmatpush.bf16.msra.mxu0 0
  %2726 = vmatpush.bf16.msra.mxu0 0
  %2727 = vmatpush.bf16.msra.mxu0 0
  %2728 = vmatpush.bf16.msra.mxu0 %v1773
  %2729 = vmatpush.bf16.msra.mxu0 %v1771
  %2730 = vmatpush.bf16.msra.mxu0 %v1769
  %2731 = vmatpush.bf16.msra.mxu0 %v1767
  %2732 = vmatmul.bf16.gmra.mxu0 %v2722
  %v2733 = vpop.f32.mrf.mxu0
  %v2734 = vadd.f32 %v1739, %v2733
  %v2735 = vpop.f32.mrf.mxu0
  %2736 = vdwg.mxu0
  %2737 = vmatpush.bf16.msra.mxu0 0
  %2738 = vmatpush.bf16.msra.mxu0 0
  %2739 = vmatpush.bf16.msra.mxu0 0
  %2740 = vmatpush.bf16.msra.mxu0 0
  %2741 = vmatpush.bf16.msra.mxu0 %v1774
  %2742 = vmatpush.bf16.msra.mxu0 %v1772
  %2743 = vmatpush.bf16.msra.mxu0 %v1770
  %2744 = vmatpush.bf16.msra.mxu0 %v1768
  %2745 = vmatmul.bf16.gmra.mxu0 %v2722
  %v2746 = vpop.f32.mrf.mxu0
  %v2747 = vadd.f32 %v1740, %v2746
  %v2748 = vpop.f32.mrf.mxu0
  %2749 = vdwg.mxu0
  %v2750 = vadd.f32 %v2715, %v2734
  %v2751 = vxor.u32 %v2750, 2147483648
  %v2752 = vmul.f32 %v2751, 1.442695
  %v2753 = vpow.pop %v2752
  %v2754 = vadd.f32 %v2753, 1.0
  %v2755 = vrcp.pop %v2754
  %v2756 = vmul.f32 %v2754, %v2755
  %v2757 = vsub.f32 1.0, %v2756
  %v2758 = vmul.f32 %v2755, %v2757
  %v2759 = vadd.f32 %v2755, %v2758
  %vm2760 = vweird.f32 %v2754
  %vm2761 = vweird.f32 %v2755
  %vm2762 = vmor %vm2760, %vm2761
  %v2763 = vsel %vm2762, %v2755, %v2759
  %v2764 = vand.u32 2147483647, %v2754
  %vm2765 = vcmp.eq.f32.partialorder %v2764, 8.507059e+37
  %v2766 = vand.u32 %v2754, 2147483648
  %v2767 = vor.u32 1.1754944e-38, %v2766
  %v2768 = vsel %vm2765, %v2767, %v2763
  %v2769 = vmul.f32 1.0, %v2768
  %v2770 = vmul.f32 %v2769, %v2747
  %v2771 = vadd.f32 %v2716, %v2770
  %v2772 = vtanh.pop %v2771
  %v2773 = vsub.f32 1.0, %v2769
  %2775 = vrot.lane.b32.xlu0 %v2772, 64
  %v2776 = vpop.permute.xlu0 %2775
  %v2778 = vmul.f32 %v2773, %v2776
  %v2779 = vmul.f32 %v2769, %v2713
  %v2780 = vadd.f32 %v2778, %v2779
  %s2781 = scalar_lea.vmem [#allocation2], 240
  %v2782 = vld [vmem:[%s2781] sm:$0xff]
  %v2783 = vld [vmem:[%s2781 + $0x8] sm:$0xff]
  %v2784 = vpack.c.bf16 %v2780, %v2780
  %2786 = vrot.lane.b32.xlu0 %v2784, 64
  %v2787 = vpop.permute.xlu0 %2786
  %v2789 = vsel %vm718, %v2787, 0
  %2791 = vmatpush.bf16.msra.mxu0 0
  %2792 = vmatpush.bf16.msra.mxu0 0
  %2793 = vmatpush.bf16.msra.mxu0 0
  %2794 = vmatpush.bf16.msra.mxu0 0
  %2795 = vmatpush.bf16.msra.mxu0 %v1773
  %2796 = vmatpush.bf16.msra.mxu0 %v1771
  %2797 = vmatpush.bf16.msra.mxu0 %v1769
  %2798 = vmatpush.bf16.msra.mxu0 %v1767
  %2799 = vmatmul.bf16.gmra.mxu0 %v2789
  %v2800 = vpop.f32.mrf.mxu0
  %v2801 = vadd.f32 %v1739, %v2800
  %v2802 = vpop.f32.mrf.mxu0
  %2803 = vdwg.mxu0
  %2804 = vmatpush.bf16.msra.mxu0 0
  %2805 = vmatpush.bf16.msra.mxu0 0
  %2806 = vmatpush.bf16.msra.mxu0 0
  %2807 = vmatpush.bf16.msra.mxu0 0
  %2808 = vmatpush.bf16.msra.mxu0 %v1774
  %2809 = vmatpush.bf16.msra.mxu0 %v1772
  %2810 = vmatpush.bf16.msra.mxu0 %v1770
  %2811 = vmatpush.bf16.msra.mxu0 %v1768
  %2812 = vmatmul.bf16.gmra.mxu0 %v2789
  %v2813 = vpop.f32.mrf.mxu0
  %v2814 = vadd.f32 %v1740, %v2813
  %v2815 = vpop.f32.mrf.mxu0
  %2816 = vdwg.mxu0
  %v2817 = vadd.f32 %v2782, %v2801
  %v2818 = vxor.u32 %v2817, 2147483648
  %v2819 = vmul.f32 %v2818, 1.442695
  %v2820 = vpow.pop %v2819
  %v2821 = vadd.f32 %v2820, 1.0
  %v2822 = vrcp.pop %v2821
  %v2823 = vmul.f32 %v2821, %v2822
  %v2824 = vsub.f32 1.0, %v2823
  %v2825 = vmul.f32 %v2822, %v2824
  %v2826 = vadd.f32 %v2822, %v2825
  %vm2827 = vweird.f32 %v2821
  %vm2828 = vweird.f32 %v2822
  %vm2829 = vmor %vm2827, %vm2828
  %v2830 = vsel %vm2829, %v2822, %v2826
  %v2831 = vand.u32 2147483647, %v2821
  %vm2832 = vcmp.eq.f32.partialorder %v2831, 8.507059e+37
  %v2833 = vand.u32 %v2821, 2147483648
  %v2834 = vor.u32 1.1754944e-38, %v2833
  %v2835 = vsel %vm2832, %v2834, %v2830
  %v2836 = vmul.f32 1.0, %v2835
  %v2837 = vmul.f32 %v2836, %v2814
  %v2838 = vadd.f32 %v2783, %v2837
  %v2839 = vtanh.pop %v2838
  %v2840 = vsub.f32 1.0, %v2836
  %2842 = vrot.lane.b32.xlu0 %v2839, 64
  %v2843 = vpop.permute.xlu0 %2842
  %v2845 = vmul.f32 %v2840, %v2843
  %v2846 = vmul.f32 %v2836, %v2780
  %v2847 = vadd.f32 %v2845, %v2846
  %v2848 = vpack.c.bf16 %v2847, %v2847
  %v2849 = vld [vmem:[%s10] sm:$0xf]
  %v2850 = vld [vmem:[%s10 + $0x4] sm:$0xf]
  %v2851 = vld [vmem:[%s10 + $0x8] sm:$0xf]
  %v2852 = vld [vmem:[%s10 + $0xc] sm:$0xf]
  %v2853 = vld [vmem:[%s10 + $0x10] sm:$0xf]
  %v2854 = vld [vmem:[%s10 + $0x14] sm:$0xf]
  %v2855 = vld [vmem:[%s10 + $0x18] sm:$0xf]
  %v2856 = vld [vmem:[%s10 + $0x1c] sm:$0xf]
  %v2857 = vld [vmem:[%s11] sm:$0x1]
  %v2859 = vperm.slane %v2857, 0
  %2862 = vrot.lane.b32.xlu0 %v2848, 64
  %v2863 = vpop.permute.xlu0 %2862
  %v2872 = vunpack.c.l.b16 %v2849
  %v2873 = vunpack.c.l.b16 %v2850
  %v2874 = vunpack.c.l.b16 %v2851
  %v2875 = vunpack.c.l.b16 %v2852
  %v2876 = vunpack.c.l.b16 %v2853
  %v2877 = vunpack.c.l.b16 %v2854
  %v2878 = vunpack.c.l.b16 %v2855
  %v2879 = vunpack.c.l.b16 %v2856
  %v2880 = vpack.c.b16 %v2873, %v2872
  %v2881 = vpack.c.b16 %v2875, %v2874
  %v2882 = vpack.c.b16 %v2877, %v2876
  %v2883 = vpack.c.b16 %v2879, %v2878
  %v2889 = vsel %vm718, %v2863, 0
  %2891 = vmatpush.bf16.msra.mxu0 0
  %2892 = vmatpush.bf16.msra.mxu0 0
  %2893 = vmatpush.bf16.msra.mxu0 0
  %2894 = vmatpush.bf16.msra.mxu0 0
  %2895 = vmatpush.bf16.msra.mxu0 %v2883
  %2896 = vmatpush.bf16.msra.mxu0 %v2882
  %2897 = vmatpush.bf16.msra.mxu0 %v2881
  %2898 = vmatpush.bf16.msra.mxu0 %v2880
  %2899 = vmatmul.bf16.gmra.mxu0 %v2889
  %v2900 = vpop.f32.mrf.mxu0
  %v2901 = vadd.f32 %v2859, %v2900
  %v2902 = vpop.f32.mrf.mxu0
  %2903 = vdwg.mxu0
  %vm2904 = vcmask 23552
  %2905 = vst.msk [vmem:[%s12] sm:$0xff] %vm2904, %v2901
  // Predicated region
  $region50: #{hybrid_tcn_gru_forward.1} parent=0 // pred_check
    _
  $region51: #{hybrid_tcn_gru_forward.1} parent=0 // pred_check_branch
    %2907 = sbr.rel (0) target = $region53
  $region52: #{hybrid_tcn_gru_forward.1} parent=0 // pred_region
    _
  $region53: #{hybrid_tcn_gru_forward.1} parent=0 // pred_fallthru
    _
  // Predicated region
  $region54: #{hybrid_tcn_gru_forward.1} parent=0 // pred_check
    _
  $region55: #{hybrid_tcn_gru_forward.1} parent=0 // pred_check_branch
    %2909 = sbr.rel (0) target = $region57
  $region56: #{hybrid_tcn_gru_forward.1} parent=0 // pred_region
    _
  $region57: #{hybrid_tcn_gru_forward.1} parent=0 // pred_fallthru
    _

</llo_original>
